<compile_context>
chip_gen: v7x
topology: tpu7x:2x2x1
jax: 0.10.0
libtpu: 0.0.40
codegen_flags: <defaults>
</compile_context>

<pallas_src>
import functools

import jax
import jax.numpy as jnp
from jax import lax
from jax.experimental import pallas as pl
from jax.experimental.pallas import tpu as pltpu


def _transformer_layer_kernel(
    x_ref,
    ln1w_ref, ln1b_ref,
    wq_ref, wkv_ref, wproj_ref, bproj_ref,
    ln2w_ref, ln2b_ref,
    w1_ref, b1_ref, w2_ref, b2_ref,
    out_ref,
    *, num_heads: int, eps: float = 1e-5):
  """One transformer layer per grid step; activation carried in out_ref."""
  layer = pl.program_id(0)

  @pl.when(layer == 0)
  def _():
    out_ref[...] = x_ref[...]

  B, N, C = out_ref.shape
  D = C // num_heads
  scale = float(D) ** -0.5

  x3 = out_ref[...].astype(jnp.float32)        # (B, N, C)
  x2 = x3.reshape(B * N, C)                    # rows for the linear projections

  def layer_norm(v, w_ref, b_ref):
    w = w_ref[0]                               # (1, C)
    b = b_ref[0]                               # (1, C)
    mu = jnp.mean(v, axis=-1, keepdims=True)
    var = jnp.mean(jnp.square(v - mu), axis=-1, keepdims=True)
    return (v - mu) * lax.rsqrt(var + eps) * w + b

  # ---------------- attention block ----------------
  xn = layer_norm(x2, ln1w_ref, ln1b_ref)                               # (BN, C)
  q2 = jnp.dot(xn, wq_ref[0], preferred_element_type=jnp.float32)       # (BN, C)
  kv2 = jnp.dot(xn, wkv_ref[0], preferred_element_type=jnp.float32)     # (BN, 2C)

  q3 = q2.reshape(B, N, C)
  k3 = kv2[:, :C].reshape(B, N, C)
  v3 = kv2[:, C:].reshape(B, N, C)

  head_outs = []
  for h in range(num_heads):
    s = h * D
    qh = q3[:, :, s:s + D]                                              # (B, N, D)
    kh = k3[:, :, s:s + D]
    vh = v3[:, :, s:s + D]
    att = jnp.einsum('bnd,bmd->bnm', qh, kh,
                     preferred_element_type=jnp.float32) * scale        # (B, N, N)
    att = att - jnp.max(att, axis=-1, keepdims=True)
    att = jnp.exp(att)
    att = att / jnp.sum(att, axis=-1, keepdims=True)
    head_outs.append(jnp.einsum('bnm,bmd->bnd', att, vh,
                                preferred_element_type=jnp.float32))    # (B, N, D)

  attn3 = jnp.concatenate(head_outs, axis=-1)                           # (B, N, C)
  attn2 = attn3.reshape(B * N, C)
  attn2 = jnp.dot(attn2, wproj_ref[0],
                  preferred_element_type=jnp.float32) + bproj_ref[0]
  x2 = x2 + attn2

  # ---------------- MLP block ----------------
  xn2 = layer_norm(x2, ln2w_ref, ln2b_ref)
  hmid = jnp.dot(xn2, w1_ref[0], preferred_element_type=jnp.float32) + b1_ref[0]
  hmid = jnp.maximum(hmid, 0.0)                                         # ReLU
  mlp2 = jnp.dot(hmid, w2_ref[0], preferred_element_type=jnp.float32) + b2_ref[0]
  x2 = x2 + mlp2

  out_ref[...] = x2.reshape(B, N, C).astype(out_ref.dtype)


def transformer_forward(x, params, num_heads):
  """Full Transformer forward in a single pallas_call (grid over layers)."""
  B, N, C = x.shape
  L = params['wq'].shape[0]

  def stacked_spec(arr):
    # Per-layer slice of a (L, ...) stacked parameter; last two dims are full.
    return pl.BlockSpec((1,) + arr.shape[1:], lambda l: (l, 0, 0))

  order = ['ln1_w', 'ln1_b', 'wq', 'wkv', 'wproj', 'bproj',
           'ln2_w', 'ln2_b', 'w1', 'b1', 'w2', 'b2']

  in_specs = [pl.BlockSpec((B, N, C), lambda l: (0, 0, 0))]
  in_specs += [stacked_spec(params[k]) for k in order]
  args = [x] + [params[k] for k in order]

  kernel = functools.partial(_transformer_layer_kernel, num_heads=num_heads)

  return pl.pallas_call(
      kernel,
      out_shape=jax.ShapeDtypeStruct((B, N, C), x.dtype),
      grid_spec=pltpu.PrefetchScalarGridSpec(
          num_scalar_prefetch=0,
          grid=(L,),
          in_specs=in_specs,
          out_specs=pl.BlockSpec((B, N, C), lambda l: (0, 0, 0)),
      ),
      compiler_params=pltpu.CompilerParams(
          # Layer axis is a sequential carry over the resident output block.
          dimension_semantics=("arbitrary",)),
  )(*args)


def init_transformer_params(key, num_layers, dim_self, num_heads,
                            mlp_ratio=2.0, dtype=jnp.float32):
  """Deterministic params. Weights are (in, out); biases stored as (L, 1, dim)."""
  C = dim_self
  Hm = int(C * mlp_ratio)
  L = num_layers

  def uniform(k, shape, fan_in):
    bound = fan_in ** -0.5
    return jax.random.uniform(k, shape, minval=-bound, maxval=bound, dtype=dtype)

  keys = jax.random.split(key, 12)
  return {
      'ln1_w': jnp.ones((L, 1, C), dtype)
               + 0.1 * jax.random.normal(keys[0], (L, 1, C), dtype),
      'ln1_b': 0.1 * jax.random.normal(keys[1], (L, 1, C), dtype),
      'ln2_w': jnp.ones((L, 1, C), dtype)
               + 0.1 * jax.random.normal(keys[2], (L, 1, C), dtype),
      'ln2_b': 0.1 * jax.random.normal(keys[3], (L, 1, C), dtype),
      # Attention: bias=False on q/kv projections, bias on output projection.
      'wq': uniform(keys[4], (L, C, C), C),
      'wkv': uniform(keys[5], (L, C, 2 * C), C),
      'wproj': uniform(keys[6], (L, C, C), C),
      'bproj': uniform(keys[7], (L, 1, C), C),
      # MLP (fc1 -> ReLU -> fc2), mlp_ratio = 2.0.
      'w1': uniform(keys[8], (L, C, Hm), C),
      'b1': uniform(keys[9], (L, 1, Hm), C),
      'w2': uniform(keys[10], (L, Hm, C), Hm),
      'b2': uniform(keys[11], (L, 1, C), Hm),
  }


def transformer_reference(x, params, num_heads, eps=1e-5):
  """Pure-JAX reference mirroring the PyTorch module (reshape-based heads)."""
  B, N, C = x.shape
  L = params['wq'].shape[0]
  D = C // num_heads
  scale = D ** -0.5

  def layer_norm(v, w, b):
    mu = jnp.mean(v, axis=-1, keepdims=True)
    var = jnp.mean((v - mu) ** 2, axis=-1, keepdims=True)
    return (v - mu) / jnp.sqrt(var + eps) * w + b

  h = x
  for l in range(L):
    xn = layer_norm(h, params['ln1_w'][l, 0], params['ln1_b'][l, 0])
    q = xn @ params['wq'][l]
    kv = xn @ params['wkv'][l]
    k, v = kv[..., :C], kv[..., C:]
    q4 = q.reshape(B, N, num_heads, D)
    k4 = k.reshape(B, N, num_heads, D)
    v4 = v.reshape(B, N, num_heads, D)
    att = jnp.einsum('bnhd,bmhd->bnmh', q4, k4) * scale
    att = jax.nn.softmax(att, axis=2)
    o = jnp.einsum('bnmh,bmhd->bnhd', att, v4).reshape(B, N, C)
    o = o @ params['wproj'][l] + params['bproj'][l, 0]
    h = h + o
    xn2 = layer_norm(h, params['ln2_w'][l, 0], params['ln2_b'][l, 0])
    m = jnp.maximum(xn2 @ params['w1'][l] + params['b1'][l, 0], 0.0)
    m = m @ params['w2'][l] + params['b2'][l, 0]
    h = h + m
  return h


if __name__ == "__main__":
  key = jax.random.PRNGKey(0)

  dim_self, num_heads, num_layers = 128, 4, 2   # lane-dense C; head_dim = 32
  mlp_ratio = 2.0
  B, N = 2, 8

  key, kx, kp = jax.random.split(key, 3)
  x = jax.random.normal(kx, (B, N, dim_self), dtype=jnp.float32)
  params = init_transformer_params(kp, num_layers, dim_self, num_heads, mlp_ratio)

  out = transformer_forward(x, params, num_heads)
  out = jax.block_until_ready(out)

  ref = transformer_reference(x, params, num_heads)
  assert out.shape == (B, N, dim_self)
  err = float(jnp.max(jnp.abs(out - ref)))
  assert jnp.allclose(out, ref, atol=1e-4, rtol=1e-4), f"max abs err {err}"

  print("KERNEL_OK")
</pallas_src>

<mosaic_0001>
module attributes {stable_mosaic.version = 11 : i64} {
  func.func @_transformer_layer_kernel(%arg0: i32, %arg1: memref<2x8x128xf32, #tpu.memory_space<vmem>>, %arg2: memref<1x1x128xf32, #tpu.memory_space<vmem>>, %arg3: memref<1x1x128xf32, #tpu.memory_space<vmem>>, %arg4: memref<1x128x128xf32, #tpu.memory_space<vmem>>, %arg5: memref<1x128x256xf32, #tpu.memory_space<vmem>>, %arg6: memref<1x128x128xf32, #tpu.memory_space<vmem>>, %arg7: memref<1x1x128xf32, #tpu.memory_space<vmem>>, %arg8: memref<1x1x128xf32, #tpu.memory_space<vmem>>, %arg9: memref<1x1x128xf32, #tpu.memory_space<vmem>>, %arg10: memref<1x128x256xf32, #tpu.memory_space<vmem>>, %arg11: memref<1x1x256xf32, #tpu.memory_space<vmem>>, %arg12: memref<1x256x128xf32, #tpu.memory_space<vmem>>, %arg13: memref<1x1x128xf32, #tpu.memory_space<vmem>>, %arg14: memref<2x8x128xf32, #tpu.memory_space<vmem>>) attributes {dimension_semantics = [#tpu.dimension_semantics<arbitrary>], iteration_bounds = array<i64: 2>, scalar_prefetch = 0 : i64, scratch_operands = 0 : i64, tpu.core_type = #tpu.core_type<tc>, window_params = [{pipeline_mode = #tpu.pipeline_mode<synchronous>, transform_indices = @transform_0, window_bounds = array<i64: 2, 8, 128>}, {transform_indices = @transform_1, window_bounds = array<i64: 1, 1, 128>}, {transform_indices = @transform_2, window_bounds = array<i64: 1, 1, 128>}, {transform_indices = @transform_3, window_bounds = array<i64: 1, 128, 128>}, {transform_indices = @transform_4, window_bounds = array<i64: 1, 128, 256>}, {transform_indices = @transform_5, window_bounds = array<i64: 1, 128, 128>}, {transform_indices = @transform_6, window_bounds = array<i64: 1, 1, 128>}, {transform_indices = @transform_7, window_bounds = array<i64: 1, 1, 128>}, {transform_indices = @transform_8, window_bounds = array<i64: 1, 1, 128>}, {transform_indices = @transform_9, window_bounds = array<i64: 1, 128, 256>}, {transform_indices = @transform_10, window_bounds = array<i64: 1, 1, 256>}, {transform_indices = @transform_11, window_bounds = array<i64: 1, 256, 128>}, {transform_indices = @transform_12, window_bounds = array<i64: 1, 1, 128>}, {pipeline_mode = #tpu.pipeline_mode<synchronous>, transform_indices = @transform_13, window_bounds = array<i64: 2, 8, 128>}]} {
    %c0_i32 = arith.constant 0 : i32
    %0 = arith.cmpi eq, %arg0, %c0_i32 : i32
    %1 = arith.extui %0 : i1 to i32
    %c0_i32_0 = arith.constant 0 : i32
    %2 = arith.cmpi ne, %1, %c0_i32_0 : i32
    scf.if %2 {
      %c0_77 = arith.constant 0 : index
      %c0_78 = arith.constant 0 : index
      %c0_79 = arith.constant 0 : index
      %161 = vector.load %arg1[%c0_77, %c0_78, %c0_79] : memref<2x8x128xf32, #tpu.memory_space<vmem>>, vector<2x8x128xf32>
      %c0_80 = arith.constant 0 : index
      %c0_81 = arith.constant 0 : index
      %c0_82 = arith.constant 0 : index
      %162 = vector.load %arg14[%c0_80, %c0_81, %c0_82] : memref<2x8x128xf32, #tpu.memory_space<vmem>>, vector<2x8x128xf32>
      tpu.vector_store %arg14[%c0_80, %c0_81, %c0_82], %161 {strides = array<i32>} : memref<2x8x128xf32, #tpu.memory_space<vmem>>, vector<2x8x128xf32>,
    } else {
    }
    %c0 = arith.constant 0 : index
    %c0_1 = arith.constant 0 : index
    %c0_2 = arith.constant 0 : index
    %3 = vector.load %arg14[%c0, %c0_1, %c0_2] : memref<2x8x128xf32, #tpu.memory_space<vmem>>, vector<2x8x128xf32>
    %4 = vector.shape_cast %3 : vector<2x8x128xf32> to vector<16x128xf32>
    %c0_3 = arith.constant 0 : index
    %c0_4 = arith.constant 0 : index
    %c0_5 = arith.constant 0 : index
    %5 = vector.load %arg2[%c0_3, %c0_4, %c0_5] : memref<1x1x128xf32, #tpu.memory_space<vmem>>, vector<1x1x128xf32>
    %6 = vector.shape_cast %5 : vector<1x1x128xf32> to vector<1x128xf32>
    %c0_6 = arith.constant 0 : index
    %c0_7 = arith.constant 0 : index
    %c0_8 = arith.constant 0 : index
    %7 = vector.load %arg3[%c0_6, %c0_7, %c0_8] : memref<1x1x128xf32, #tpu.memory_space<vmem>>, vector<1x1x128xf32>
    %8 = vector.shape_cast %7 : vector<1x1x128xf32> to vector<1x128xf32>
    %cst = arith.constant dense<0.000000e+00> : vector<16xf32>
    %9 = vector.multi_reduction <add>, %4, %cst [1] : vector<16x128xf32> to vector<16xf32>
    %10 = vector.shape_cast %9 : vector<16xf32> to vector<16x1xf32>
    %cst_9 = arith.constant 1.280000e+02 : f32
    %11 = vector.broadcast %cst_9 : f32 to vector<16x1xf32>
    %12 = arith.divf %10, %11 : vector<16x1xf32>
    %13 = vector.broadcast %12 : vector<16x1xf32> to vector<16x128xf32>
    %14 = arith.subf %4, %13 : vector<16x128xf32>
    %15 = arith.mulf %14, %14 : vector<16x128xf32>
    %cst_10 = arith.constant dense<0.000000e+00> : vector<16xf32>
    %16 = vector.multi_reduction <add>, %15, %cst_10 [1] : vector<16x128xf32> to vector<16xf32>
    %17 = vector.shape_cast %16 : vector<16xf32> to vector<16x1xf32>
    %cst_11 = arith.constant 1.280000e+02 : f32
    %18 = vector.broadcast %cst_11 : f32 to vector<16x1xf32>
    %19 = arith.divf %17, %18 : vector<16x1xf32>
    %20 = vector.broadcast %12 : vector<16x1xf32> to vector<16x128xf32>
    %21 = arith.subf %4, %20 : vector<16x128xf32>
    %cst_12 = arith.constant 9.99999974E-6 : f32
    %22 = vector.broadcast %cst_12 : f32 to vector<16x1xf32>
    %23 = arith.addf %19, %22 : vector<16x1xf32>
    %24 = math.rsqrt %23 : vector<16x1xf32>
    %25 = vector.broadcast %24 : vector<16x1xf32> to vector<16x128xf32>
    %26 = arith.mulf %21, %25 : vector<16x128xf32>
    %27 = vector.broadcast %6 : vector<1x128xf32> to vector<16x128xf32>
    %28 = arith.mulf %26, %27 : vector<16x128xf32>
    %29 = vector.broadcast %8 : vector<1x128xf32> to vector<16x128xf32>
    %30 = arith.addf %28, %29 : vector<16x128xf32>
    %c0_13 = arith.constant 0 : index
    %c0_14 = arith.constant 0 : index
    %c0_15 = arith.constant 0 : index
    %31 = vector.load %arg4[%c0_13, %c0_14, %c0_15] : memref<1x128x128xf32, #tpu.memory_space<vmem>>, vector<1x128x128xf32>
    %32 = vector.shape_cast %31 : vector<1x128x128xf32> to vector<128x128xf32>
    %cst_16 = arith.constant dense<0.000000e+00> : vector<16x128xf32>
    %33 = tpu.matmul %30, %32, %cst_16 {dimension_numbers = #tpu.dot_dimension_numbers<[1], [0], [0], [1], [0, 0, 1, 1], [], []>} : vector<16x128xf32>, vector<128x128xf32>, vector<16x128xf32> -> vector<16x128xf32>
    %c0_17 = arith.constant 0 : index
    %c0_18 = arith.constant 0 : index
    %c0_19 = arith.constant 0 : index
    %34 = vector.load %arg5[%c0_17, %c0_18, %c0_19] : memref<1x128x256xf32, #tpu.memory_space<vmem>>, vector<1x128x256xf32>
    %35 = vector.shape_cast %34 : vector<1x128x256xf32> to vector<128x256xf32>
    %cst_20 = arith.constant dense<0.000000e+00> : vector<16x256xf32>
    %36 = tpu.matmul %30, %35, %cst_20 {dimension_numbers = #tpu.dot_dimension_numbers<[1], [0], [0], [1], [0, 0, 1, 1], [], []>} : vector<16x128xf32>, vector<128x256xf32>, vector<16x256xf32> -> vector<16x256xf32>
    %37 = vector.shape_cast %33 : vector<16x128xf32> to vector<2x8x128xf32>
    %38 = vector.extract_strided_slice %36 {offsets = [0, 0], sizes = [16, 128], strides = [1, 1]} : vector<16x256xf32> to vector<16x128xf32>
    %39 = vector.shape_cast %38 : vector<16x128xf32> to vector<2x8x128xf32>
    %40 = vector.extract_strided_slice %36 {offsets = [0, 128], sizes = [16, 128], strides = [1, 1]} : vector<16x256xf32> to vector<16x128xf32>
    %41 = vector.shape_cast %40 : vector<16x128xf32> to vector<2x8x128xf32>
    %42 = vector.extract_strided_slice %37 {offsets = [0, 0, 0], sizes = [2, 8, 32], strides = [1, 1, 1]} : vector<2x8x128xf32> to vector<2x8x32xf32>
    %43 = vector.extract_strided_slice %39 {offsets = [0, 0, 0], sizes = [2, 8, 32], strides = [1, 1, 1]} : vector<2x8x128xf32> to vector<2x8x32xf32>
    %44 = vector.extract_strided_slice %41 {offsets = [0, 0, 0], sizes = [2, 8, 32], strides = [1, 1, 1]} : vector<2x8x128xf32> to vector<2x8x32xf32>
    "tpu.trace_start"() <{level = 10 : i32, message = "bnd,bmd->bnm"}> : () -> ()
    %cst_21 = arith.constant dense<0.000000e+00> : vector<2x8x8xf32>
    %45 = tpu.matmul %42, %43, %cst_21 {dimension_numbers = #tpu.dot_dimension_numbers<[2], [2], [1], [1], [0, 0, 0, 1, 1, 1], [0], [0]>} : vector<2x8x32xf32>, vector<2x8x32xf32>, vector<2x8x8xf32> -> vector<2x8x8xf32>
    "tpu.trace_stop"() : () -> ()
    %cst_22 = arith.constant 0.176776692 : f32
    %46 = vector.broadcast %cst_22 : f32 to vector<2x8x8xf32>
    %47 = arith.mulf %45, %46 : vector<2x8x8xf32>
    %cst_23 = arith.constant dense<0xFF800000> : vector<2x8xf32>
    %48 = vector.multi_reduction <maximumf>, %47, %cst_23 [2] : vector<2x8x8xf32> to vector<2x8xf32>
    %49 = vector.shape_cast %48 : vector<2x8xf32> to vector<2x8x1xf32>
    %50 = vector.broadcast %49 : vector<2x8x1xf32> to vector<2x8x8xf32>
    %51 = arith.subf %47, %50 : vector<2x8x8xf32>
    %52 = math.exp %51 : vector<2x8x8xf32>
    %cst_24 = arith.constant dense<0.000000e+00> : vector<2x8xf32>
    %53 = vector.multi_reduction <add>, %52, %cst_24 [2] : vector<2x8x8xf32> to vector<2x8xf32>
    %54 = vector.shape_cast %53 : vector<2x8xf32> to vector<2x8x1xf32>
    %55 = vector.broadcast %54 : vector<2x8x1xf32> to vector<2x8x8xf32>
    %56 = arith.divf %52, %55 : vector<2x8x8xf32>
    "tpu.trace_start"() <{level = 10 : i32, message = "bnm,bmd->bnd"}> : () -> ()
    %cst_25 = arith.constant dense<0.000000e+00> : vector<2x8x32xf32>
    %57 = tpu.matmul %56, %44, %cst_25 {dimension_numbers = #tpu.dot_dimension_numbers<[2], [1], [1], [2], [0, 0, 0, 1, 1, 2], [0], [0]>} : vector<2x8x8xf32>, vector<2x8x32xf32>, vector<2x8x32xf32> -> vector<2x8x32xf32>
    "tpu.trace_stop"() : () -> ()
    %58 = vector.extract_strided_slice %37 {offsets = [0, 0, 32], sizes = [2, 8, 32], strides = [1, 1, 1]} : vector<2x8x128xf32> to vector<2x8x32xf32>
    %59 = vector.extract_strided_slice %39 {offsets = [0, 0, 32], sizes = [2, 8, 32], strides = [1, 1, 1]} : vector<2x8x128xf32> to vector<2x8x32xf32>
    %60 = vector.extract_strided_slice %41 {offsets = [0, 0, 32], sizes = [2, 8, 32], strides = [1, 1, 1]} : vector<2x8x128xf32> to vector<2x8x32xf32>
    "tpu.trace_start"() <{level = 10 : i32, message = "bnd,bmd->bnm"}> : () -> ()
    %cst_26 = arith.constant dense<0.000000e+00> : vector<2x8x8xf32>
    %61 = tpu.matmul %58, %59, %cst_26 {dimension_numbers = #tpu.dot_dimension_numbers<[2], [2], [1], [1], [0, 0, 0, 1, 1, 1], [0], [0]>} : vector<2x8x32xf32>, vector<2x8x32xf32>, vector<2x8x8xf32> -> vector<2x8x8xf32>
    "tpu.trace_stop"() : () -> ()
    %cst_27 = arith.constant 0.176776692 : f32
    %62 = vector.broadcast %cst_27 : f32 to vector<2x8x8xf32>
    %63 = arith.mulf %61, %62 : vector<2x8x8xf32>
    %cst_28 = arith.constant dense<0xFF800000> : vector<2x8xf32>
    %64 = vector.multi_reduction <maximumf>, %63, %cst_28 [2] : vector<2x8x8xf32> to vector<2x8xf32>
    %65 = vector.shape_cast %64 : vector<2x8xf32> to vector<2x8x1xf32>
    %66 = vector.broadcast %65 : vector<2x8x1xf32> to vector<2x8x8xf32>
    %67 = arith.subf %63, %66 : vector<2x8x8xf32>
    %68 = math.exp %67 : vector<2x8x8xf32>
    %cst_29 = arith.constant dense<0.000000e+00> : vector<2x8xf32>
    %69 = vector.multi_reduction <add>, %68, %cst_29 [2] : vector<2x8x8xf32> to vector<2x8xf32>
    %70 = vector.shape_cast %69 : vector<2x8xf32> to vector<2x8x1xf32>
    %71 = vector.broadcast %70 : vector<2x8x1xf32> to vector<2x8x8xf32>
    %72 = arith.divf %68, %71 : vector<2x8x8xf32>
    "tpu.trace_start"() <{level = 10 : i32, message = "bnm,bmd->bnd"}> : () -> ()
    %cst_30 = arith.constant dense<0.000000e+00> : vector<2x8x32xf32>
    %73 = tpu.matmul %72, %60, %cst_30 {dimension_numbers = #tpu.dot_dimension_numbers<[2], [1], [1], [2], [0, 0, 0, 1, 1, 2], [0], [0]>} : vector<2x8x8xf32>, vector<2x8x32xf32>, vector<2x8x32xf32> -> vector<2x8x32xf32>
    "tpu.trace_stop"() : () -> ()
    %74 = vector.extract_strided_slice %37 {offsets = [0, 0, 64], sizes = [2, 8, 32], strides = [1, 1, 1]} : vector<2x8x128xf32> to vector<2x8x32xf32>
    %75 = vector.extract_strided_slice %39 {offsets = [0, 0, 64], sizes = [2, 8, 32], strides = [1, 1, 1]} : vector<2x8x128xf32> to vector<2x8x32xf32>
    %76 = vector.extract_strided_slice %41 {offsets = [0, 0, 64], sizes = [2, 8, 32], strides = [1, 1, 1]} : vector<2x8x128xf32> to vector<2x8x32xf32>
    "tpu.trace_start"() <{level = 10 : i32, message = "bnd,bmd->bnm"}> : () -> ()
    %cst_31 = arith.constant dense<0.000000e+00> : vector<2x8x8xf32>
    %77 = tpu.matmul %74, %75, %cst_31 {dimension_numbers = #tpu.dot_dimension_numbers<[2], [2], [1], [1], [0, 0, 0, 1, 1, 1], [0], [0]>} : vector<2x8x32xf32>, vector<2x8x32xf32>, vector<2x8x8xf32> -> vector<2x8x8xf32>
    "tpu.trace_stop"() : () -> ()
    %cst_32 = arith.constant 0.176776692 : f32
    %78 = vector.broadcast %cst_32 : f32 to vector<2x8x8xf32>
    %79 = arith.mulf %77, %78 : vector<2x8x8xf32>
    %cst_33 = arith.constant dense<0xFF800000> : vector<2x8xf32>
    %80 = vector.multi_reduction <maximumf>, %79, %cst_33 [2] : vector<2x8x8xf32> to vector<2x8xf32>
    %81 = vector.shape_cast %80 : vector<2x8xf32> to vector<2x8x1xf32>
    %82 = vector.broadcast %81 : vector<2x8x1xf32> to vector<2x8x8xf32>
    %83 = arith.subf %79, %82 : vector<2x8x8xf32>
    %84 = math.exp %83 : vector<2x8x8xf32>
    %cst_34 = arith.constant dense<0.000000e+00> : vector<2x8xf32>
    %85 = vector.multi_reduction <add>, %84, %cst_34 [2] : vector<2x8x8xf32> to vector<2x8xf32>
    %86 = vector.shape_cast %85 : vector<2x8xf32> to vector<2x8x1xf32>
    %87 = vector.broadcast %86 : vector<2x8x1xf32> to vector<2x8x8xf32>
    %88 = arith.divf %84, %87 : vector<2x8x8xf32>
    "tpu.trace_start"() <{level = 10 : i32, message = "bnm,bmd->bnd"}> : () -> ()
    %cst_35 = arith.constant dense<0.000000e+00> : vector<2x8x32xf32>
    %89 = tpu.matmul %88, %76, %cst_35 {dimension_numbers = #tpu.dot_dimension_numbers<[2], [1], [1], [2], [0, 0, 0, 1, 1, 2], [0], [0]>} : vector<2x8x8xf32>, vector<2x8x32xf32>, vector<2x8x32xf32> -> vector<2x8x32xf32>
    "tpu.trace_stop"() : () -> ()
    %90 = vector.extract_strided_slice %37 {offsets = [0, 0, 96], sizes = [2, 8, 32], strides = [1, 1, 1]} : vector<2x8x128xf32> to vector<2x8x32xf32>
    %91 = vector.extract_strided_slice %39 {offsets = [0, 0, 96], sizes = [2, 8, 32], strides = [1, 1, 1]} : vector<2x8x128xf32> to vector<2x8x32xf32>
    %92 = vector.extract_strided_slice %41 {offsets = [0, 0, 96], sizes = [2, 8, 32], strides = [1, 1, 1]} : vector<2x8x128xf32> to vector<2x8x32xf32>
    "tpu.trace_start"() <{level = 10 : i32, message = "bnd,bmd->bnm"}> : () -> ()
    %cst_36 = arith.constant dense<0.000000e+00> : vector<2x8x8xf32>
    %93 = tpu.matmul %90, %91, %cst_36 {dimension_numbers = #tpu.dot_dimension_numbers<[2], [2], [1], [1], [0, 0, 0, 1, 1, 1], [0], [0]>} : vector<2x8x32xf32>, vector<2x8x32xf32>, vector<2x8x8xf32> -> vector<2x8x8xf32>
    "tpu.trace_stop"() : () -> ()
    %cst_37 = arith.constant 0.176776692 : f32
    %94 = vector.broadcast %cst_37 : f32 to vector<2x8x8xf32>
    %95 = arith.mulf %93, %94 : vector<2x8x8xf32>
    %cst_38 = arith.constant dense<0xFF800000> : vector<2x8xf32>
    %96 = vector.multi_reduction <maximumf>, %95, %cst_38 [2] : vector<2x8x8xf32> to vector<2x8xf32>
    %97 = vector.shape_cast %96 : vector<2x8xf32> to vector<2x8x1xf32>
    %98 = vector.broadcast %97 : vector<2x8x1xf32> to vector<2x8x8xf32>
    %99 = arith.subf %95, %98 : vector<2x8x8xf32>
    %100 = math.exp %99 : vector<2x8x8xf32>
    %cst_39 = arith.constant dense<0.000000e+00> : vector<2x8xf32>
    %101 = vector.multi_reduction <add>, %100, %cst_39 [2] : vector<2x8x8xf32> to vector<2x8xf32>
    %102 = vector.shape_cast %101 : vector<2x8xf32> to vector<2x8x1xf32>
    %103 = vector.broadcast %102 : vector<2x8x1xf32> to vector<2x8x8xf32>
    %104 = arith.divf %100, %103 : vector<2x8x8xf32>
    "tpu.trace_start"() <{level = 10 : i32, message = "bnm,bmd->bnd"}> : () -> ()
    %cst_40 = arith.constant dense<0.000000e+00> : vector<2x8x32xf32>
    %105 = tpu.matmul %104, %92, %cst_40 {dimension_numbers = #tpu.dot_dimension_numbers<[2], [1], [1], [2], [0, 0, 0, 1, 1, 2], [0], [0]>} : vector<2x8x8xf32>, vector<2x8x32xf32>, vector<2x8x32xf32> -> vector<2x8x32xf32>
    "tpu.trace_stop"() : () -> ()
    %106 = tpu.concatenate %57, %73, %89, %105 in 2 : vector<2x8x32xf32>, vector<2x8x32xf32>, vector<2x8x32xf32>, vector<2x8x32xf32> -> vector<2x8x128xf32>
    %107 = vector.shape_cast %106 : vector<2x8x128xf32> to vector<16x128xf32>
    %c0_41 = arith.constant 0 : index
    %c0_42 = arith.constant 0 : index
    %c0_43 = arith.constant 0 : index
    %108 = vector.load %arg6[%c0_41, %c0_42, %c0_43] : memref<1x128x128xf32, #tpu.memory_space<vmem>>, vector<1x128x128xf32>
    %109 = vector.shape_cast %108 : vector<1x128x128xf32> to vector<128x128xf32>
    %cst_44 = arith.constant dense<0.000000e+00> : vector<16x128xf32>
    %110 = tpu.matmul %107, %109, %cst_44 {dimension_numbers = #tpu.dot_dimension_numbers<[1], [0], [0], [1], [0, 0, 1, 1], [], []>} : vector<16x128xf32>, vector<128x128xf32>, vector<16x128xf32> -> vector<16x128xf32>
    %c0_45 = arith.constant 0 : index
    %c0_46 = arith.constant 0 : index
    %c0_47 = arith.constant 0 : index
    %111 = vector.load %arg7[%c0_45, %c0_46, %c0_47] : memref<1x1x128xf32, #tpu.memory_space<vmem>>, vector<1x1x128xf32>
    %112 = vector.shape_cast %111 : vector<1x1x128xf32> to vector<1x128xf32>
    %113 = vector.broadcast %112 : vector<1x128xf32> to vector<16x128xf32>
    %114 = arith.addf %110, %113 : vector<16x128xf32>
    %115 = arith.addf %4, %114 : vector<16x128xf32>
    %c0_48 = arith.constant 0 : index
    %c0_49 = arith.constant 0 : index
    %c0_50 = arith.constant 0 : index
    %116 = vector.load %arg8[%c0_48, %c0_49, %c0_50] : memref<1x1x128xf32, #tpu.memory_space<vmem>>, vector<1x1x128xf32>
    %117 = vector.shape_cast %116 : vector<1x1x128xf32> to vector<1x128xf32>
    %c0_51 = arith.constant 0 : index
    %c0_52 = arith.constant 0 : index
    %c0_53 = arith.constant 0 : index
    %118 = vector.load %arg9[%c0_51, %c0_52, %c0_53] : memref<1x1x128xf32, #tpu.memory_space<vmem>>, vector<1x1x128xf32>
    %119 = vector.shape_cast %118 : vector<1x1x128xf32> to vector<1x128xf32>
    %cst_54 = arith.constant dense<0.000000e+00> : vector<16xf32>
    %120 = vector.multi_reduction <add>, %115, %cst_54 [1] : vector<16x128xf32> to vector<16xf32>
    %121 = vector.shape_cast %120 : vector<16xf32> to vector<16x1xf32>
    %cst_55 = arith.constant 1.280000e+02 : f32
    %122 = vector.broadcast %cst_55 : f32 to vector<16x1xf32>
    %123 = arith.divf %121, %122 : vector<16x1xf32>
    %124 = vector.broadcast %123 : vector<16x1xf32> to vector<16x128xf32>
    %125 = arith.subf %115, %124 : vector<16x128xf32>
    %126 = arith.mulf %125, %125 : vector<16x128xf32>
    %cst_56 = arith.constant dense<0.000000e+00> : vector<16xf32>
    %127 = vector.multi_reduction <add>, %126, %cst_56 [1] : vector<16x128xf32> to vector<16xf32>
    %128 = vector.shape_cast %127 : vector<16xf32> to vector<16x1xf32>
    %cst_57 = arith.constant 1.280000e+02 : f32
    %129 = vector.broadcast %cst_57 : f32 to vector<16x1xf32>
    %130 = arith.divf %128, %129 : vector<16x1xf32>
    %131 = vector.broadcast %123 : vector<16x1xf32> to vector<16x128xf32>
    %132 = arith.subf %115, %131 : vector<16x128xf32>
    %cst_58 = arith.constant 9.99999974E-6 : f32
    %133 = vector.broadcast %cst_58 : f32 to vector<16x1xf32>
    %134 = arith.addf %130, %133 : vector<16x1xf32>
    %135 = math.rsqrt %134 : vector<16x1xf32>
    %136 = vector.broadcast %135 : vector<16x1xf32> to vector<16x128xf32>
    %137 = arith.mulf %132, %136 : vector<16x128xf32>
    %138 = vector.broadcast %117 : vector<1x128xf32> to vector<16x128xf32>
    %139 = arith.mulf %137, %138 : vector<16x128xf32>
    %140 = vector.broadcast %119 : vector<1x128xf32> to vector<16x128xf32>
    %141 = arith.addf %139, %140 : vector<16x128xf32>
    %c0_59 = arith.constant 0 : index
    %c0_60 = arith.constant 0 : index
    %c0_61 = arith.constant 0 : index
    %142 = vector.load %arg10[%c0_59, %c0_60, %c0_61] : memref<1x128x256xf32, #tpu.memory_space<vmem>>, vector<1x128x256xf32>
    %143 = vector.shape_cast %142 : vector<1x128x256xf32> to vector<128x256xf32>
    %cst_62 = arith.constant dense<0.000000e+00> : vector<16x256xf32>
    %144 = tpu.matmul %141, %143, %cst_62 {dimension_numbers = #tpu.dot_dimension_numbers<[1], [0], [0], [1], [0, 0, 1, 1], [], []>} : vector<16x128xf32>, vector<128x256xf32>, vector<16x256xf32> -> vector<16x256xf32>
    %c0_63 = arith.constant 0 : index
    %c0_64 = arith.constant 0 : index
    %c0_65 = arith.constant 0 : index
    %145 = vector.load %arg11[%c0_63, %c0_64, %c0_65] : memref<1x1x256xf32, #tpu.memory_space<vmem>>, vector<1x1x256xf32>
    %146 = vector.shape_cast %145 : vector<1x1x256xf32> to vector<1x256xf32>
    %147 = vector.broadcast %146 : vector<1x256xf32> to vector<16x256xf32>
    %148 = arith.addf %144, %147 : vector<16x256xf32>
    %cst_66 = arith.constant 0.000000e+00 : f32
    %149 = vector.broadcast %cst_66 : f32 to vector<16x256xf32>
    %150 = arith.maximumf %148, %149 : vector<16x256xf32>
    %c0_67 = arith.constant 0 : index
    %c0_68 = arith.constant 0 : index
    %c0_69 = arith.constant 0 : index
    %151 = vector.load %arg12[%c0_67, %c0_68, %c0_69] : memref<1x256x128xf32, #tpu.memory_space<vmem>>, vector<1x256x128xf32>
    %152 = vector.shape_cast %151 : vector<1x256x128xf32> to vector<256x128xf32>
    %cst_70 = arith.constant dense<0.000000e+00> : vector<16x128xf32>
    %153 = tpu.matmul %150, %152, %cst_70 {dimension_numbers = #tpu.dot_dimension_numbers<[1], [0], [0], [1], [0, 0, 1, 1], [], []>} : vector<16x256xf32>, vector<256x128xf32>, vector<16x128xf32> -> vector<16x128xf32>
    %c0_71 = arith.constant 0 : index
    %c0_72 = arith.constant 0 : index
    %c0_73 = arith.constant 0 : index
    %154 = vector.load %arg13[%c0_71, %c0_72, %c0_73] : memref<1x1x128xf32, #tpu.memory_space<vmem>>, vector<1x1x128xf32>
    %155 = vector.shape_cast %154 : vector<1x1x128xf32> to vector<1x128xf32>
    %156 = vector.broadcast %155 : vector<1x128xf32> to vector<16x128xf32>
    %157 = arith.addf %153, %156 : vector<16x128xf32>
    %158 = arith.addf %115, %157 : vector<16x128xf32>
    %159 = vector.shape_cast %158 : vector<16x128xf32> to vector<2x8x128xf32>
    %c0_74 = arith.constant 0 : index
    %c0_75 = arith.constant 0 : index
    %c0_76 = arith.constant 0 : index
    %160 = vector.load %arg14[%c0_74, %c0_75, %c0_76] : memref<2x8x128xf32, #tpu.memory_space<vmem>>, vector<2x8x128xf32>
    tpu.vector_store %arg14[%c0_74, %c0_75, %c0_76], %159 {strides = array<i32>} : memref<2x8x128xf32, #tpu.memory_space<vmem>>, vector<2x8x128xf32>,
    return
  }
  func.func @transform_0(%arg0: i32) -> (i32, i32, i32) {
    %c0_i32 = arith.constant 0 : i32
    %c0_i32_0 = arith.constant 0 : i32
    %c0_i32_1 = arith.constant 0 : i32
    %c0_i32_2 = arith.constant 0 : i32
    return %c0_i32, %c0_i32_0, %c0_i32_1 : i32, i32, i32
  }
  func.func @transform_1(%arg0: i32) -> (i32, i32, i32) {
    %c0_i32 = arith.constant 0 : i32
    %c0_i32_0 = arith.constant 0 : i32
    %c0_i32_1 = arith.constant 0 : i32
    return %arg0, %c0_i32, %c0_i32_0 : i32, i32, i32
  }
  func.func @transform_2(%arg0: i32) -> (i32, i32, i32) {
    %c0_i32 = arith.constant 0 : i32
    %c0_i32_0 = arith.constant 0 : i32
    %c0_i32_1 = arith.constant 0 : i32
    return %arg0, %c0_i32, %c0_i32_0 : i32, i32, i32
  }
  func.func @transform_3(%arg0: i32) -> (i32, i32, i32) {
    %c0_i32 = arith.constant 0 : i32
    %c0_i32_0 = arith.constant 0 : i32
    %c0_i32_1 = arith.constant 0 : i32
    return %arg0, %c0_i32, %c0_i32_0 : i32, i32, i32
  }
  func.func @transform_4(%arg0: i32) -> (i32, i32, i32) {
    %c0_i32 = arith.constant 0 : i32
    %c0_i32_0 = arith.constant 0 : i32
    %c0_i32_1 = arith.constant 0 : i32
    return %arg0, %c0_i32, %c0_i32_0 : i32, i32, i32
  }
  func.func @transform_5(%arg0: i32) -> (i32, i32, i32) {
    %c0_i32 = arith.constant 0 : i32
    %c0_i32_0 = arith.constant 0 : i32
    %c0_i32_1 = arith.constant 0 : i32
    return %arg0, %c0_i32, %c0_i32_0 : i32, i32, i32
  }
  func.func @transform_6(%arg0: i32) -> (i32, i32, i32) {
    %c0_i32 = arith.constant 0 : i32
    %c0_i32_0 = arith.constant 0 : i32
    %c0_i32_1 = arith.constant 0 : i32
    return %arg0, %c0_i32, %c0_i32_0 : i32, i32, i32
  }
  func.func @transform_7(%arg0: i32) -> (i32, i32, i32) {
    %c0_i32 = arith.constant 0 : i32
    %c0_i32_0 = arith.constant 0 : i32
    %c0_i32_1 = arith.constant 0 : i32
    return %arg0, %c0_i32, %c0_i32_0 : i32, i32, i32
  }
  func.func @transform_8(%arg0: i32) -> (i32, i32, i32) {
    %c0_i32 = arith.constant 0 : i32
    %c0_i32_0 = arith.constant 0 : i32
    %c0_i32_1 = arith.constant 0 : i32
    return %arg0, %c0_i32, %c0_i32_0 : i32, i32, i32
  }
  func.func @transform_9(%arg0: i32) -> (i32, i32, i32) {
    %c0_i32 = arith.constant 0 : i32
    %c0_i32_0 = arith.constant 0 : i32
    %c0_i32_1 = arith.constant 0 : i32
    return %arg0, %c0_i32, %c0_i32_0 : i32, i32, i32
  }
  func.func @transform_10(%arg0: i32) -> (i32, i32, i32) {
    %c0_i32 = arith.constant 0 : i32
    %c0_i32_0 = arith.constant 0 : i32
    %c0_i32_1 = arith.constant 0 : i32
    return %arg0, %c0_i32, %c0_i32_0 : i32, i32, i32
  }
  func.func @transform_11(%arg0: i32) -> (i32, i32, i32) {
    %c0_i32 = arith.constant 0 : i32
    %c0_i32_0 = arith.constant 0 : i32
    %c0_i32_1 = arith.constant 0 : i32
    return %arg0, %c0_i32, %c0_i32_0 : i32, i32, i32
  }
  func.func @transform_12(%arg0: i32) -> (i32, i32, i32) {
    %c0_i32 = arith.constant 0 : i32
    %c0_i32_0 = arith.constant 0 : i32
    %c0_i32_1 = arith.constant 0 : i32
    return %arg0, %c0_i32, %c0_i32_0 : i32, i32, i32
  }
  func.func @transform_13(%arg0: i32) -> (i32, i32, i32) {
    %c0_i32 = arith.constant 0 : i32
    %c0_i32_0 = arith.constant 0 : i32
    %c0_i32_1 = arith.constant 0 : i32
    %c0_i32_2 = arith.constant 0 : i32
    return %c0_i32, %c0_i32_0, %c0_i32_1 : i32, i32, i32
  }
}

</mosaic_0001>

<llo_original>
// kernel: tpu_custom_call.1
$region0: #{tpu_custom_call.1}
  #allocation0 [shape = 'u32[]', space=smem, size = 0x4, offset = 0x4, fixed_abs, tag = 'smem constant byte address 0x4 - core index']
  #allocation1 [shape = 'u32[144,128]{1,0:T(1,128)}', space=vmem, size = 0x12000, scoped, tag = 'internal scratch']
  %s0 = inlined_call_operand.hbm [shape: f32[2,8,128], index: 0, kind: input, shape index: {}]
  %s1 = inlined_call_operand.vmem [shape: f32[2,1,128], index: 1, kind: input, shape index: {}]
  %s2 = inlined_call_operand.hbm [shape: f32[2,1,128], index: 2, kind: input, shape index: {}]
  %s3 = inlined_call_operand.hbm [shape: f32[2,128,128], index: 3, kind: input, shape index: {}]
  %s4 = inlined_call_operand.hbm [shape: f32[2,128,256], index: 4, kind: input, shape index: {}]
  %s5 = inlined_call_operand.hbm [shape: f32[2,128,128], index: 5, kind: input, shape index: {}]
  %s6 = inlined_call_operand.vmem [shape: f32[2,1,128], index: 6, kind: input, shape index: {}]
  %s7 = inlined_call_operand.vmem [shape: f32[2,1,128], index: 7, kind: input, shape index: {}]
  %s8 = inlined_call_operand.vmem [shape: f32[2,1,128], index: 8, kind: input, shape index: {}]
  %s9 = inlined_call_operand.hbm [shape: f32[2,128,256], index: 9, kind: input, shape index: {}]
  %s10 = inlined_call_operand.vmem [shape: f32[2,1,256], index: 10, kind: input, shape index: {}]
  %s11 = inlined_call_operand.hbm [shape: f32[2,256,128], index: 11, kind: input, shape index: {}]
  %s12 = inlined_call_operand.vmem [shape: f32[2,1,128], index: 12, kind: input, shape index: {}]
  %s13 = inlined_call_operand.hbm [shape: f32[2,8,128], index: 13, kind: output, shape index: {}]
  %s14 = sld [smem:[#allocation0]]
  $region117: #{tpu_custom_call.1} parent=0
    _
  %s16 = ssub.s32 1, %s14
  %s17 = scalar_select 0, %s16, %s14
  $region1: #{tpu_custom_call.1} parent=0
    #allocation2 [shape = 'u8[8192]{0}', space=vmem, size = 0x2000, scoped, tag = 'input window, operand 0, single buffered']
    #allocation3 [shape = 's32[2]{0}', space=sflag, size = 0x8, scoped, tag = 'scoped memory for tpu_custom_call.1']
    #allocation4 [shape = 's32[2]{0}', space=sflag, size = 0x8, scoped, tag = 'scoped memory for tpu_custom_call.1']
    #allocation5 [shape = 'u8[1024]{0}', space=vmem, size = 0x400, scoped, tag = 'input window, operand 2']
    #allocation6 [shape = 's32[2]{0}', space=sflag, size = 0x8, scoped, tag = 'scoped memory for tpu_custom_call.1']
    #allocation7 [shape = 'u8[131072]{0}', space=vmem, size = 0x20000, scoped, tag = 'input window, operand 3']
    #allocation8 [shape = 'u8[262144]{0}', space=vmem, size = 0x40000, scoped, tag = 'input window, operand 4']
    #allocation9 [shape = 's32[2]{0}', space=sflag, size = 0x8, scoped, tag = 'scoped memory for tpu_custom_call.1']
    #allocation10 [shape = 'u8[131072]{0}', space=vmem, size = 0x20000, scoped, tag = 'input window, operand 5']
    #allocation11 [shape = 'u8[262144]{0}', space=vmem, size = 0x40000, scoped, tag = 'input window, operand 9']
    #allocation12 [shape = 's32[2]{0}', space=sflag, size = 0x8, scoped, tag = 'scoped memory for tpu_custom_call.1']
    #allocation13 [shape = 'u8[262144]{0}', space=vmem, size = 0x40000, scoped, tag = 'input window, operand 11']
    #allocation14 [shape = 'u8[8192]{0}', space=vmem, size = 0x2000, scoped, tag = 'output window, operand 0, single buffered']
    %18 = vsyncpa [#allocation3], 0
    %19 = vsyncpa [#allocation6], 0
    %s20 = scalar_lea.sflag [#allocation6], 1
    %21 = vsyncpa %s20, 0
    %22 = vsyncpa [#allocation9], 0
    %s23 = scalar_lea.sflag [#allocation9], 1
    %24 = vsyncpa %s23, 0
    %25 = vsyncpa [#allocation12], 0
    %s26 = scalar_lea.sflag [#allocation12], 1
    %27 = vsyncpa %s26, 0
    %28 = vsyncpa [#allocation4], 0
    loop: start=0, step=1, limit=4
    $region2: #{tpu_custom_call.1} parent=1 // loop_pre_header
      _
    $region3: #{tpu_custom_call.1} parent=1 // loop_header
      %s30 = sphi 0, %s34
      %p31 = scmp.ge.s32.totalorder %s30, 4
      %s38 = sphi 0, %s38
      %s40 = sphi 0, %s38
      %s41 = sphi 0, %s40
      %s55 = sphi 0, %s41
      %s61 = sphi 0, %s63
      %s64 = sphi 0, %s61
      %s65 = sphi 0, %s64
      %s81 = sphi 0, %s65
      %s87 = sphi 0, %s89
      %s90 = sphi 0, %s87
      %s91 = sphi 0, %s90
      %s107 = sphi 0, %s91
      %s113 = sphi 0, %s115
      %s116 = sphi 0, %s113
      %s117 = sphi 0, %s116
      %s133 = sphi 0, %s117
      %s139 = sphi 0, %s141
      %s142 = sphi 0, %s139
      %s143 = sphi 0, %s142
      %s159 = sphi 0, %s143
      %s165 = sphi 0, %s167
      %s168 = sphi 0, %s165
      %s169 = sphi 0, %s168
      %s185 = sphi 0, %s169
      %s191 = sphi 0, %s193
      %s194 = sphi 0, %s191
      %s195 = sphi 0, %s194
      %s211 = sphi 0, %s195
      %s217 = sphi 0, %s219
      %s220 = sphi 0, %s217
      %s221 = sphi 0, %s220
      %s237 = sphi 0, %s221
      %s243 = sphi 0, %s245
      %s246 = sphi 0, %s243
      %s247 = sphi 0, %s246
      %s263 = sphi 0, %s247
      %s269 = sphi 0, %s271
      %s272 = sphi 0, %s269
      %s273 = sphi 0, %s272
      %s289 = sphi 0, %s273
      %s295 = sphi 0, %s297
      %s298 = sphi 0, %s295
      %s299 = sphi 0, %s298
      %s315 = sphi 0, %s299
      %s321 = sphi 0, %s323
      %s324 = sphi 0, %s321
      %s325 = sphi 0, %s324
      %s341 = sphi 0, %s325
      %s347 = sphi 0, %s349
      %s350 = sphi 0, %s347
      %s351 = sphi 0, %s350
      %s367 = sphi 0, %s351
      %s371 = sphi 0, %s371
      %s373 = sphi 0, %s371
      %s374 = sphi 0, %s373
      %s388 = sphi 0, %s374
    $region4: #{tpu_custom_call.1} parent=1 // loop_header_branch
      %33 = sbr.rel (%p31) target = $region8
    $region5: #{tpu_custom_call.1} parent=1 // loop_body
      %s35 = ssub.s32 %s30, 1
      %s36 = ssub.s32 %s30, 2
      %s37 = sadd.s32 %s30, 1
      %s39 = sadd.s32 %s38, 1
      %p42 = scmp.eq.s32.totalorder %s30, 1
      %p43 = scmp.ne.s32.totalorder %s38, %s40
      %p44 = scmp.eq.s32.totalorder %s30, 0
      %p45 = por %p43, %p44
      %p46 = scmp.ne.s32.totalorder %s38, %s40
      %p47 = scmp.eq.s32.totalorder %s35, 1
      %p48 = por %p46, %p47
      %p49 = scmp.ne.s32.totalorder %s40, %s41
      %p50 = scmp.eq.s32.totalorder %s35, 0
      %p51 = por %p49, %p50
      %p52 = scmp.ne.s32.totalorder %s40, %s41
      %p53 = scmp.eq.s32.totalorder %s36, 1
      %p54 = por %p52, %p53
      %p56 = scmp.ne.s32.totalorder %s41, %s55
      %p57 = scmp.eq.s32.totalorder %s36, 0
      %p58 = por %p56, %p57
      %s59 = ssub.s32 %s30, %s37
      %p60 = scmp.eq.s32.totalorder %s59, 0
      %s62 = sadd.s32 %s61, 1
      %s63 = scalar_select %p60, %s61, %s62
      %p66 = pneg %p60
      %p67 = scmp.eq.s32.totalorder %s30, 1
      %p68 = por %p66, %p67
      %p69 = scmp.ne.s32.totalorder %s61, %s64
      %p70 = scmp.eq.s32.totalorder %s30, 0
      %p71 = por %p69, %p70
      %p72 = scmp.ne.s32.totalorder %s61, %s64
      %p73 = scmp.eq.s32.totalorder %s35, 1
      %p74 = por %p72, %p73
      %p75 = scmp.ne.s32.totalorder %s64, %s65
      %p76 = scmp.eq.s32.totalorder %s35, 0
      %p77 = por %p75, %p76
      %p78 = scmp.ne.s32.totalorder %s64, %s65
      %p79 = scmp.eq.s32.totalorder %s36, 1
      %p80 = por %p78, %p79
      %p82 = scmp.ne.s32.totalorder %s65, %s81
      %p83 = scmp.eq.s32.totalorder %s36, 0
      %p84 = por %p82, %p83
      %s85 = ssub.s32 %s30, %s37
      %p86 = scmp.eq.s32.totalorder %s85, 0
      %s88 = sadd.s32 %s87, 1
      %s89 = scalar_select %p86, %s87, %s88
      %p92 = pneg %p86
      %p93 = scmp.eq.s32.totalorder %s30, 1
      %p94 = por %p92, %p93
      %p95 = scmp.ne.s32.totalorder %s87, %s90
      %p96 = scmp.eq.s32.totalorder %s30, 0
      %p97 = por %p95, %p96
      %p98 = scmp.ne.s32.totalorder %s87, %s90
      %p99 = scmp.eq.s32.totalorder %s35, 1
      %p100 = por %p98, %p99
      %p101 = scmp.ne.s32.totalorder %s90, %s91
      %p102 = scmp.eq.s32.totalorder %s35, 0
      %p103 = por %p101, %p102
      %p104 = scmp.ne.s32.totalorder %s90, %s91
      %p105 = scmp.eq.s32.totalorder %s36, 1
      %p106 = por %p104, %p105
      %p108 = scmp.ne.s32.totalorder %s91, %s107
      %p109 = scmp.eq.s32.totalorder %s36, 0
      %p110 = por %p108, %p109
      %s111 = ssub.s32 %s30, %s37
      %p112 = scmp.eq.s32.totalorder %s111, 0
      %s114 = sadd.s32 %s113, 1
      %s115 = scalar_select %p112, %s113, %s114
      %p118 = pneg %p112
      %p119 = scmp.eq.s32.totalorder %s30, 1
      %p120 = por %p118, %p119
      %p121 = scmp.ne.s32.totalorder %s113, %s116
      %p122 = scmp.eq.s32.totalorder %s30, 0
      %p123 = por %p121, %p122
      %p124 = scmp.ne.s32.totalorder %s113, %s116
      %p125 = scmp.eq.s32.totalorder %s35, 1
      %p126 = por %p124, %p125
      %p127 = scmp.ne.s32.totalorder %s116, %s117
      %p128 = scmp.eq.s32.totalorder %s35, 0
      %p129 = por %p127, %p128
      %p130 = scmp.ne.s32.totalorder %s116, %s117
      %p131 = scmp.eq.s32.totalorder %s36, 1
      %p132 = por %p130, %p131
      %p134 = scmp.ne.s32.totalorder %s117, %s133
      %p135 = scmp.eq.s32.totalorder %s36, 0
      %p136 = por %p134, %p135
      %s137 = ssub.s32 %s30, %s37
      %p138 = scmp.eq.s32.totalorder %s137, 0
      %s140 = sadd.s32 %s139, 1
      %s141 = scalar_select %p138, %s139, %s140
      %p144 = pneg %p138
      %p145 = scmp.eq.s32.totalorder %s30, 1
      %p146 = por %p144, %p145
      %p147 = scmp.ne.s32.totalorder %s139, %s142
      %p148 = scmp.eq.s32.totalorder %s30, 0
      %p149 = por %p147, %p148
      %p150 = scmp.ne.s32.totalorder %s139, %s142
      %p151 = scmp.eq.s32.totalorder %s35, 1
      %p152 = por %p150, %p151
      %p153 = scmp.ne.s32.totalorder %s142, %s143
      %p154 = scmp.eq.s32.totalorder %s35, 0
      %p155 = por %p153, %p154
      %p156 = scmp.ne.s32.totalorder %s142, %s143
      %p157 = scmp.eq.s32.totalorder %s36, 1
      %p158 = por %p156, %p157
      %p160 = scmp.ne.s32.totalorder %s143, %s159
      %p161 = scmp.eq.s32.totalorder %s36, 0
      %p162 = por %p160, %p161
      %s163 = ssub.s32 %s30, %s37
      %p164 = scmp.eq.s32.totalorder %s163, 0
      %s166 = sadd.s32 %s165, 1
      %s167 = scalar_select %p164, %s165, %s166
      %p170 = pneg %p164
      %p171 = scmp.eq.s32.totalorder %s30, 1
      %p172 = por %p170, %p171
      %p173 = scmp.ne.s32.totalorder %s165, %s168
      %p174 = scmp.eq.s32.totalorder %s30, 0
      %p175 = por %p173, %p174
      %p176 = scmp.ne.s32.totalorder %s165, %s168
      %p177 = scmp.eq.s32.totalorder %s35, 1
      %p178 = por %p176, %p177
      %p179 = scmp.ne.s32.totalorder %s168, %s169
      %p180 = scmp.eq.s32.totalorder %s35, 0
      %p181 = por %p179, %p180
      %p182 = scmp.ne.s32.totalorder %s168, %s169
      %p183 = scmp.eq.s32.totalorder %s36, 1
      %p184 = por %p182, %p183
      %p186 = scmp.ne.s32.totalorder %s169, %s185
      %p187 = scmp.eq.s32.totalorder %s36, 0
      %p188 = por %p186, %p187
      %s189 = ssub.s32 %s30, %s37
      %p190 = scmp.eq.s32.totalorder %s189, 0
      %s192 = sadd.s32 %s191, 1
      %s193 = scalar_select %p190, %s191, %s192
      %p196 = pneg %p190
      %p197 = scmp.eq.s32.totalorder %s30, 1
      %p198 = por %p196, %p197
      %p199 = scmp.ne.s32.totalorder %s191, %s194
      %p200 = scmp.eq.s32.totalorder %s30, 0
      %p201 = por %p199, %p200
      %p202 = scmp.ne.s32.totalorder %s191, %s194
      %p203 = scmp.eq.s32.totalorder %s35, 1
      %p204 = por %p202, %p203
      %p205 = scmp.ne.s32.totalorder %s194, %s195
      %p206 = scmp.eq.s32.totalorder %s35, 0
      %p207 = por %p205, %p206
      %p208 = scmp.ne.s32.totalorder %s194, %s195
      %p209 = scmp.eq.s32.totalorder %s36, 1
      %p210 = por %p208, %p209
      %p212 = scmp.ne.s32.totalorder %s195, %s211
      %p213 = scmp.eq.s32.totalorder %s36, 0
      %p214 = por %p212, %p213
      %s215 = ssub.s32 %s30, %s37
      %p216 = scmp.eq.s32.totalorder %s215, 0
      %s218 = sadd.s32 %s217, 1
      %s219 = scalar_select %p216, %s217, %s218
      %p222 = pneg %p216
      %p223 = scmp.eq.s32.totalorder %s30, 1
      %p224 = por %p222, %p223
      %p225 = scmp.ne.s32.totalorder %s217, %s220
      %p226 = scmp.eq.s32.totalorder %s30, 0
      %p227 = por %p225, %p226
      %p228 = scmp.ne.s32.totalorder %s217, %s220
      %p229 = scmp.eq.s32.totalorder %s35, 1
      %p230 = por %p228, %p229
      %p231 = scmp.ne.s32.totalorder %s220, %s221
      %p232 = scmp.eq.s32.totalorder %s35, 0
      %p233 = por %p231, %p232
      %p234 = scmp.ne.s32.totalorder %s220, %s221
      %p235 = scmp.eq.s32.totalorder %s36, 1
      %p236 = por %p234, %p235
      %p238 = scmp.ne.s32.totalorder %s221, %s237
      %p239 = scmp.eq.s32.totalorder %s36, 0
      %p240 = por %p238, %p239
      %s241 = ssub.s32 %s30, %s37
      %p242 = scmp.eq.s32.totalorder %s241, 0
      %s244 = sadd.s32 %s243, 1
      %s245 = scalar_select %p242, %s243, %s244
      %p248 = pneg %p242
      %p249 = scmp.eq.s32.totalorder %s30, 1
      %p250 = por %p248, %p249
      %p251 = scmp.ne.s32.totalorder %s243, %s246
      %p252 = scmp.eq.s32.totalorder %s30, 0
      %p253 = por %p251, %p252
      %p254 = scmp.ne.s32.totalorder %s243, %s246
      %p255 = scmp.eq.s32.totalorder %s35, 1
      %p256 = por %p254, %p255
      %p257 = scmp.ne.s32.totalorder %s246, %s247
      %p258 = scmp.eq.s32.totalorder %s35, 0
      %p259 = por %p257, %p258
      %p260 = scmp.ne.s32.totalorder %s246, %s247
      %p261 = scmp.eq.s32.totalorder %s36, 1
      %p262 = por %p260, %p261
      %p264 = scmp.ne.s32.totalorder %s247, %s263
      %p265 = scmp.eq.s32.totalorder %s36, 0
      %p266 = por %p264, %p265
      %s267 = ssub.s32 %s30, %s37
      %p268 = scmp.eq.s32.totalorder %s267, 0
      %s270 = sadd.s32 %s269, 1
      %s271 = scalar_select %p268, %s269, %s270
      %p274 = pneg %p268
      %p275 = scmp.eq.s32.totalorder %s30, 1
      %p276 = por %p274, %p275
      %p277 = scmp.ne.s32.totalorder %s269, %s272
      %p278 = scmp.eq.s32.totalorder %s30, 0
      %p279 = por %p277, %p278
      %p280 = scmp.ne.s32.totalorder %s269, %s272
      %p281 = scmp.eq.s32.totalorder %s35, 1
      %p282 = por %p280, %p281
      %p283 = scmp.ne.s32.totalorder %s272, %s273
      %p284 = scmp.eq.s32.totalorder %s35, 0
      %p285 = por %p283, %p284
      %p286 = scmp.ne.s32.totalorder %s272, %s273
      %p287 = scmp.eq.s32.totalorder %s36, 1
      %p288 = por %p286, %p287
      %p290 = scmp.ne.s32.totalorder %s273, %s289
      %p291 = scmp.eq.s32.totalorder %s36, 0
      %p292 = por %p290, %p291
      %s293 = ssub.s32 %s30, %s37
      %p294 = scmp.eq.s32.totalorder %s293, 0
      %s296 = sadd.s32 %s295, 1
      %s297 = scalar_select %p294, %s295, %s296
      %p300 = pneg %p294
      %p301 = scmp.eq.s32.totalorder %s30, 1
      %p302 = por %p300, %p301
      %p303 = scmp.ne.s32.totalorder %s295, %s298
      %p304 = scmp.eq.s32.totalorder %s30, 0
      %p305 = por %p303, %p304
      %p306 = scmp.ne.s32.totalorder %s295, %s298
      %p307 = scmp.eq.s32.totalorder %s35, 1
      %p308 = por %p306, %p307
      %p309 = scmp.ne.s32.totalorder %s298, %s299
      %p310 = scmp.eq.s32.totalorder %s35, 0
      %p311 = por %p309, %p310
      %p312 = scmp.ne.s32.totalorder %s298, %s299
      %p313 = scmp.eq.s32.totalorder %s36, 1
      %p314 = por %p312, %p313
      %p316 = scmp.ne.s32.totalorder %s299, %s315
      %p317 = scmp.eq.s32.totalorder %s36, 0
      %p318 = por %p316, %p317
      %s319 = ssub.s32 %s30, %s37
      %p320 = scmp.eq.s32.totalorder %s319, 0
      %s322 = sadd.s32 %s321, 1
      %s323 = scalar_select %p320, %s321, %s322
      %p326 = pneg %p320
      %p327 = scmp.eq.s32.totalorder %s30, 1
      %p328 = por %p326, %p327
      %p329 = scmp.ne.s32.totalorder %s321, %s324
      %p330 = scmp.eq.s32.totalorder %s30, 0
      %p331 = por %p329, %p330
      %p332 = scmp.ne.s32.totalorder %s321, %s324
      %p333 = scmp.eq.s32.totalorder %s35, 1
      %p334 = por %p332, %p333
      %p335 = scmp.ne.s32.totalorder %s324, %s325
      %p336 = scmp.eq.s32.totalorder %s35, 0
      %p337 = por %p335, %p336
      %p338 = scmp.ne.s32.totalorder %s324, %s325
      %p339 = scmp.eq.s32.totalorder %s36, 1
      %p340 = por %p338, %p339
      %p342 = scmp.ne.s32.totalorder %s325, %s341
      %p343 = scmp.eq.s32.totalorder %s36, 0
      %p344 = por %p342, %p343
      %s345 = ssub.s32 %s30, %s37
      %p346 = scmp.eq.s32.totalorder %s345, 0
      %s348 = sadd.s32 %s347, 1
      %s349 = scalar_select %p346, %s347, %s348
      %p352 = pneg %p346
      %p353 = scmp.eq.s32.totalorder %s30, 1
      %p354 = por %p352, %p353
      %p355 = scmp.ne.s32.totalorder %s347, %s350
      %p356 = scmp.eq.s32.totalorder %s30, 0
      %p357 = por %p355, %p356
      %p358 = scmp.ne.s32.totalorder %s347, %s350
      %p359 = scmp.eq.s32.totalorder %s35, 1
      %p360 = por %p358, %p359
      %p361 = scmp.ne.s32.totalorder %s350, %s351
      %p362 = scmp.eq.s32.totalorder %s35, 0
      %p363 = por %p361, %p362
      %p364 = scmp.ne.s32.totalorder %s350, %s351
      %p365 = scmp.eq.s32.totalorder %s36, 1
      %p366 = por %p364, %p365
      %p368 = scmp.ne.s32.totalorder %s351, %s367
      %p369 = scmp.eq.s32.totalorder %s36, 0
      %p370 = por %p368, %p369
      %s372 = sadd.s32 %s371, 1
      %p375 = scmp.eq.s32.totalorder %s30, 1
      %p376 = scmp.ne.s32.totalorder %s371, %s373
      %p377 = scmp.eq.s32.totalorder %s30, 0
      %p378 = por %p376, %p377
      %p379 = scmp.ne.s32.totalorder %s371, %s373
      %p380 = scmp.eq.s32.totalorder %s35, 1
      %p381 = por %p379, %p380
      %p382 = scmp.ne.s32.totalorder %s373, %s374
      %p383 = scmp.eq.s32.totalorder %s35, 0
      %p384 = por %p382, %p383
      %p385 = scmp.ne.s32.totalorder %s373, %s374
      %p386 = scmp.eq.s32.totalorder %s36, 1
      %p387 = por %p385, %p386
      %p389 = scmp.ne.s32.totalorder %s374, %s388
      %p390 = scmp.eq.s32.totalorder %s36, 0
      %p391 = por %p389, %p390
      %p392 = scmp.le.s32.totalorder 1, %s30
      %p393 = scmp.lt.s32.totalorder %s30, 3
      %p394 = pnand %p392, %p393
      %p395 = pneg %p394
      // Predicated region
      $region9: #{tpu_custom_call.1} parent=5 // pred_check
        _
      $region10: #{tpu_custom_call.1} parent=5 // pred_check_branch
        %397 = sbr.rel (%p394) target = $region12
      $region11: #{tpu_custom_call.1} parent=5 // pred_region
        %s398 = ssub.s32 %s30, 1
        // Predicated region
        $region13: #{tpu_custom_call.1} parent=11 // pred_check
          %p399 = pneg %p51
        $region14: #{tpu_custom_call.1} parent=11 // pred_check_branch
          %401 = sbr.rel (%p399) target = $region16
        $region15: #{tpu_custom_call.1} parent=11 // pred_region
          %s403 = ssub.s32 256, 256
          %404 = vsyncadd [#allocation3], %s403
          %s405 = sshll.u32 [#allocation2], 4
          %s406 = int_to_ptr.vmem [resolvable:$true] %s405
          %411 = dma.hbm_to_vmem [thread:$0]  %s0, 256, %s406, [#allocation3], 128, 128, 8
        $region16: #{tpu_custom_call.1} parent=11 // pred_fallthru
          _
      $region12: #{tpu_custom_call.1} parent=5 // pred_fallthru
        _
      %p412 = scmp.lt.s32.totalorder %s30, 2
      // Predicated region
      $region17: #{tpu_custom_call.1} parent=5 // pred_check
        %p413 = pneg %p412
      $region18: #{tpu_custom_call.1} parent=5 // pred_check_branch
        %415 = sbr.rel (%p413) target = $region20
      $region19: #{tpu_custom_call.1} parent=5 // pred_region
        // Predicated region
        $region21: #{tpu_custom_call.1} parent=19 // pred_check
          %p416 = pneg %p71
        $region22: #{tpu_custom_call.1} parent=19 // pred_check_branch
          %418 = sbr.rel (%p416) target = $region24
        $region23: #{tpu_custom_call.1} parent=19 // pred_region
          %p419 = scmp.lt.s32.totalorder %s30, 1
          %s420 = scalar_select %p419, %s30, 1
          %s421 = scalar_lea.vmem %s1, %s420
        $region24: #{tpu_custom_call.1} parent=19 // pred_fallthru
          _
        // Predicated region
        $region25: #{tpu_custom_call.1} parent=19 // pred_check
          %p422 = pneg %p97
        $region26: #{tpu_custom_call.1} parent=19 // pred_check_branch
          %424 = sbr.rel (%p422) target = $region28
        $region27: #{tpu_custom_call.1} parent=19 // pred_region
          %s425 = sand.u32 %s30, 1
          %s426 = scalar_lea.sflag [#allocation6], %s425
          %s427 = sand.u32 %s87, 1
          %s428 = scalar_lea.vmem [#allocation5], %s427
          %s430 = ssub.s32 16, 16
          %431 = vsyncadd %s426, %s430
          %s432 = smul.addr %s30, 16
          %s433 = scalar_lea.hbm %s2, %s432
          %s435 = sshll.u32 %s428, 4
          %s436 = int_to_ptr.vmem [resolvable:$true] %s435
          %438 = dma.hbm_to_vmem [thread:$0]  %s433, 16, %s436, %s426
        $region28: #{tpu_custom_call.1} parent=19 // pred_fallthru
          _
        // Predicated region
        $region29: #{tpu_custom_call.1} parent=19 // pred_check
          %p439 = pneg %p123
        $region30: #{tpu_custom_call.1} parent=19 // pred_check_branch
          %441 = sbr.rel (%p439) target = $region32
        $region31: #{tpu_custom_call.1} parent=19 // pred_region
          %s442 = sand.u32 %s30, 1
          %s443 = scalar_lea.sflag [#allocation6], %s442
          %s444 = sand.u32 %s113, 1
          %s445 = smul.addr %s444, 128
          %s446 = scalar_lea.vmem [#allocation7], %s445
          %s448 = ssub.s32 2048, 2048
          %449 = vsyncadd %s443, %s448
          %s450 = smul.addr %s30, 16
          %s451 = smul.addr %s450, 128
          %s452 = scalar_lea.hbm %s3, %s451
          %s453 = sshll.u32 %s446, 4
          %s454 = int_to_ptr.vmem [resolvable:$true] %s453
          %459 = dma.hbm_to_vmem [thread:$0]  %s452, 2048, %s454, %s443, 128, 128, 8
        $region32: #{tpu_custom_call.1} parent=19 // pred_fallthru
          _
        // Predicated region
        $region33: #{tpu_custom_call.1} parent=19 // pred_check
          %p460 = pneg %p149
        $region34: #{tpu_custom_call.1} parent=19 // pred_check_branch
          %462 = sbr.rel (%p460) target = $region36
        $region35: #{tpu_custom_call.1} parent=19 // pred_region
          %s463 = sand.u32 %s30, 1
          %s464 = scalar_lea.sflag [#allocation9], %s463
          %s465 = sand.u32 %s139, 1
          %s466 = smul.addr %s465, 256
          %s467 = scalar_lea.vmem [#allocation8], %s466
          %s469 = ssub.s32 4096, 4096
          %470 = vsyncadd %s464, %s469
          %s471 = smul.addr %s30, 32
          %s472 = smul.addr %s471, 128
          %s473 = scalar_lea.hbm %s4, %s472
          %s474 = sshll.u32 %s467, 4
          %s475 = int_to_ptr.vmem [resolvable:$true] %s474
          %480 = dma.hbm_to_vmem [thread:$0]  %s473, 4096, %s475, %s464, 256, 256, 16
        $region36: #{tpu_custom_call.1} parent=19 // pred_fallthru
          _
        // Predicated region
        $region37: #{tpu_custom_call.1} parent=19 // pred_check
          %p481 = pneg %p175
        $region38: #{tpu_custom_call.1} parent=19 // pred_check_branch
          %483 = sbr.rel (%p481) target = $region40
        $region39: #{tpu_custom_call.1} parent=19 // pred_region
          %s484 = sand.u32 %s30, 1
          %s485 = scalar_lea.sflag [#allocation9], %s484
          %s486 = sand.u32 %s165, 1
          %s487 = smul.addr %s486, 128
          %s488 = scalar_lea.vmem [#allocation10], %s487
          %s490 = ssub.s32 2048, 2048
          %491 = vsyncadd %s485, %s490
          %s492 = smul.addr %s30, 16
          %s493 = smul.addr %s492, 128
          %s494 = scalar_lea.hbm %s5, %s493
          %s495 = sshll.u32 %s488, 4
          %s496 = int_to_ptr.vmem [resolvable:$true] %s495
          %501 = dma.hbm_to_vmem [thread:$0]  %s494, 2048, %s496, %s485, 128, 128, 8
        $region40: #{tpu_custom_call.1} parent=19 // pred_fallthru
          _
        // Predicated region
        $region41: #{tpu_custom_call.1} parent=19 // pred_check
          %p502 = pneg %p201
        $region42: #{tpu_custom_call.1} parent=19 // pred_check_branch
          %504 = sbr.rel (%p502) target = $region44
        $region43: #{tpu_custom_call.1} parent=19 // pred_region
          %p505 = scmp.lt.s32.totalorder %s30, 1
          %s506 = scalar_select %p505, %s30, 1
          %s507 = scalar_lea.vmem %s6, %s506
        $region44: #{tpu_custom_call.1} parent=19 // pred_fallthru
          _
        // Predicated region
        $region45: #{tpu_custom_call.1} parent=19 // pred_check
          %p508 = pneg %p227
        $region46: #{tpu_custom_call.1} parent=19 // pred_check_branch
          %510 = sbr.rel (%p508) target = $region48
        $region47: #{tpu_custom_call.1} parent=19 // pred_region
          %p511 = scmp.lt.s32.totalorder %s30, 1
          %s512 = scalar_select %p511, %s30, 1
          %s513 = scalar_lea.vmem %s7, %s512
        $region48: #{tpu_custom_call.1} parent=19 // pred_fallthru
          _
        // Predicated region
        $region49: #{tpu_custom_call.1} parent=19 // pred_check
          %p514 = pneg %p253
        $region50: #{tpu_custom_call.1} parent=19 // pred_check_branch
          %516 = sbr.rel (%p514) target = $region52
        $region51: #{tpu_custom_call.1} parent=19 // pred_region
          %p517 = scmp.lt.s32.totalorder %s30, 1
          %s518 = scalar_select %p517, %s30, 1
          %s519 = scalar_lea.vmem %s8, %s518
        $region52: #{tpu_custom_call.1} parent=19 // pred_fallthru
          _
        // Predicated region
        $region53: #{tpu_custom_call.1} parent=19 // pred_check
          %p520 = pneg %p279
        $region54: #{tpu_custom_call.1} parent=19 // pred_check_branch
          %522 = sbr.rel (%p520) target = $region56
        $region55: #{tpu_custom_call.1} parent=19 // pred_region
          %s523 = sand.u32 %s30, 1
          %s524 = scalar_lea.sflag [#allocation12], %s523
          %s525 = sand.u32 %s269, 1
          %s526 = smul.addr %s525, 256
          %s527 = scalar_lea.vmem [#allocation11], %s526
          %s529 = ssub.s32 4096, 4096
          %530 = vsyncadd %s524, %s529
          %s531 = smul.addr %s30, 32
          %s532 = smul.addr %s531, 128
          %s533 = scalar_lea.hbm %s9, %s532
          %s534 = sshll.u32 %s527, 4
          %s535 = int_to_ptr.vmem [resolvable:$true] %s534
          %540 = dma.hbm_to_vmem [thread:$0]  %s533, 4096, %s535, %s524, 256, 256, 16
        $region56: #{tpu_custom_call.1} parent=19 // pred_fallthru
          _
        // Predicated region
        $region57: #{tpu_custom_call.1} parent=19 // pred_check
          %p541 = pneg %p305
        $region58: #{tpu_custom_call.1} parent=19 // pred_check_branch
          %543 = sbr.rel (%p541) target = $region60
        $region59: #{tpu_custom_call.1} parent=19 // pred_region
          %p544 = scmp.lt.s32.totalorder %s30, 1
          %s545 = scalar_select %p544, %s30, 1
          %s546 = smul.addr %s545, 2
          %s547 = scalar_lea.vmem %s10, %s546
        $region60: #{tpu_custom_call.1} parent=19 // pred_fallthru
          _
        // Predicated region
        $region61: #{tpu_custom_call.1} parent=19 // pred_check
          %p548 = pneg %p331
        $region62: #{tpu_custom_call.1} parent=19 // pred_check_branch
          %550 = sbr.rel (%p548) target = $region64
        $region63: #{tpu_custom_call.1} parent=19 // pred_region
          %s551 = sand.u32 %s30, 1
          %s552 = scalar_lea.sflag [#allocation12], %s551
          %s553 = sand.u32 %s321, 1
          %s554 = smul.addr %s553, 256
          %s555 = scalar_lea.vmem [#allocation13], %s554
          %s557 = ssub.s32 4096, 4096
          %558 = vsyncadd %s552, %s557
          %s559 = smul.addr %s30, 32
          %s560 = smul.addr %s559, 128
          %s561 = scalar_lea.hbm %s11, %s560
          %s562 = sshll.u32 %s555, 4
          %s563 = int_to_ptr.vmem [resolvable:$true] %s562
          %568 = dma.hbm_to_vmem [thread:$0]  %s561, 4096, %s563, %s552, 128, 128, 8
        $region64: #{tpu_custom_call.1} parent=19 // pred_fallthru
          _
        // Predicated region
        $region65: #{tpu_custom_call.1} parent=19 // pred_check
          %p569 = pneg %p357
        $region66: #{tpu_custom_call.1} parent=19 // pred_check_branch
          %571 = sbr.rel (%p569) target = $region68
        $region67: #{tpu_custom_call.1} parent=19 // pred_region
          %p572 = scmp.lt.s32.totalorder %s30, 1
          %s573 = scalar_select %p572, %s30, 1
          %s574 = scalar_lea.vmem %s12, %s573
        $region68: #{tpu_custom_call.1} parent=19 // pred_fallthru
          _
      $region20: #{tpu_custom_call.1} parent=5 // pred_fallthru
        _
      %p575 = scmp.le.s32.totalorder 1, %s30
      %p576 = scmp.lt.s32.totalorder %s30, 3
      %p577 = pnand %p575, %p576
      %p578 = pneg %p577
      // Predicated region
      $region69: #{tpu_custom_call.1} parent=5 // pred_check
        _
      $region70: #{tpu_custom_call.1} parent=5 // pred_check_branch
        %580 = sbr.rel (%p577) target = $region72
      $region71: #{tpu_custom_call.1} parent=5 // pred_region
        %s581 = ssub.s32 %s30, 1
        // Predicated region
        $region73: #{tpu_custom_call.1} parent=71 // pred_check
          %p582 = pneg %p51
        $region74: #{tpu_custom_call.1} parent=71 // pred_check_branch
          %584 = sbr.rel (%p582) target = $region76
        $region75: #{tpu_custom_call.1} parent=71 // pred_region
          %585 = dma.done [#allocation3], 256
        $region76: #{tpu_custom_call.1} parent=71 // pred_fallthru
          _
        %s586 = sand.u32 %s35, 1
        %s587 = scalar_lea.sflag [#allocation6], %s586
        %s588 = sand.u32 %s90, 1
        %s589 = scalar_lea.vmem [#allocation5], %s588
        // Predicated region
        $region77: #{tpu_custom_call.1} parent=71 // pred_check
          %p590 = pneg %p103
        $region78: #{tpu_custom_call.1} parent=71 // pred_check_branch
          %592 = sbr.rel (%p590) target = $region80
        $region79: #{tpu_custom_call.1} parent=71 // pred_region
          %593 = dma.done %s587, 16
        $region80: #{tpu_custom_call.1} parent=71 // pred_fallthru
          _
        %s594 = sand.u32 %s35, 1
        %s595 = scalar_lea.sflag [#allocation6], %s594
        %s596 = sand.u32 %s116, 1
        %s597 = smul.addr %s596, 128
        %s598 = scalar_lea.vmem [#allocation7], %s597
        // Predicated region
        $region81: #{tpu_custom_call.1} parent=71 // pred_check
          %p599 = pneg %p129
        $region82: #{tpu_custom_call.1} parent=71 // pred_check_branch
          %601 = sbr.rel (%p599) target = $region84
        $region83: #{tpu_custom_call.1} parent=71 // pred_region
          %602 = dma.done %s595, 2048
        $region84: #{tpu_custom_call.1} parent=71 // pred_fallthru
          _
        %s603 = sand.u32 %s35, 1
        %s604 = scalar_lea.sflag [#allocation9], %s603
        %s605 = sand.u32 %s142, 1
        %s606 = smul.addr %s605, 256
        %s607 = scalar_lea.vmem [#allocation8], %s606
        // Predicated region
        $region85: #{tpu_custom_call.1} parent=71 // pred_check
          %p608 = pneg %p155
        $region86: #{tpu_custom_call.1} parent=71 // pred_check_branch
          %610 = sbr.rel (%p608) target = $region88
        $region87: #{tpu_custom_call.1} parent=71 // pred_region
          %611 = dma.done %s604, 4096
        $region88: #{tpu_custom_call.1} parent=71 // pred_fallthru
          _
        %s612 = sand.u32 %s35, 1
        %s613 = scalar_lea.sflag [#allocation9], %s612
        %s614 = sand.u32 %s168, 1
        %s615 = smul.addr %s614, 128
        %s616 = scalar_lea.vmem [#allocation10], %s615
        // Predicated region
        $region89: #{tpu_custom_call.1} parent=71 // pred_check
          %p617 = pneg %p181
        $region90: #{tpu_custom_call.1} parent=71 // pred_check_branch
          %619 = sbr.rel (%p617) target = $region92
        $region91: #{tpu_custom_call.1} parent=71 // pred_region
          %620 = dma.done %s613, 2048
        $region92: #{tpu_custom_call.1} parent=71 // pred_fallthru
          _
        %s621 = sand.u32 %s35, 1
        %s622 = scalar_lea.sflag [#allocation12], %s621
        %s623 = sand.u32 %s272, 1
        %s624 = smul.addr %s623, 256
        %s625 = scalar_lea.vmem [#allocation11], %s624
        // Predicated region
        $region93: #{tpu_custom_call.1} parent=71 // pred_check
          %p626 = pneg %p285
        $region94: #{tpu_custom_call.1} parent=71 // pred_check_branch
          %628 = sbr.rel (%p626) target = $region96
        $region95: #{tpu_custom_call.1} parent=71 // pred_region
          %629 = dma.done %s622, 4096
        $region96: #{tpu_custom_call.1} parent=71 // pred_fallthru
          _
        %s630 = sand.u32 %s35, 1
        %s631 = scalar_lea.sflag [#allocation12], %s630
        %s632 = sand.u32 %s324, 1
        %s633 = smul.addr %s632, 256
        %s634 = scalar_lea.vmem [#allocation13], %s633
        // Predicated region
        $region97: #{tpu_custom_call.1} parent=71 // pred_check
          %p635 = pneg %p337
        $region98: #{tpu_custom_call.1} parent=71 // pred_check_branch
          %637 = sbr.rel (%p635) target = $region100
        $region99: #{tpu_custom_call.1} parent=71 // pred_region
          %638 = dma.done %s631, 4096
        $region100: #{tpu_custom_call.1} parent=71 // pred_fallthru
          _
        %p639 = pneg %p51
        %p640 = pneg %p48
        %p641 = scmp.lt.s32.totalorder %s35, 1
        %s642 = scalar_select %p641, %s35, 1
        %s643 = scalar_lea.vmem %s1, %s642
        %p644 = pneg %p77
        %p645 = pneg %p74
        %s646 = sand.u32 %s35, 1
        %s647 = scalar_lea.sflag [#allocation6], %s646
        %s648 = sand.u32 %s90, 1
        %s649 = scalar_lea.vmem [#allocation5], %s648
        %p650 = pneg %p103
        %p651 = pneg %p100
        %s652 = sand.u32 %s35, 1
        %s653 = scalar_lea.sflag [#allocation6], %s652
        %s654 = sand.u32 %s116, 1
        %s655 = smul.addr %s654, 128
        %s656 = scalar_lea.vmem [#allocation7], %s655
        %p657 = pneg %p129
        %p658 = pneg %p126
        %s659 = sand.u32 %s35, 1
        %s660 = scalar_lea.sflag [#allocation9], %s659
        %s661 = sand.u32 %s142, 1
        %s662 = smul.addr %s661, 256
        %s663 = scalar_lea.vmem [#allocation8], %s662
        %p664 = pneg %p155
        %p665 = pneg %p152
        %s666 = sand.u32 %s35, 1
        %s667 = scalar_lea.sflag [#allocation9], %s666
        %s668 = sand.u32 %s168, 1
        %s669 = smul.addr %s668, 128
        %s670 = scalar_lea.vmem [#allocation10], %s669
        %p671 = pneg %p181
        %p672 = pneg %p178
        %p673 = scmp.lt.s32.totalorder %s35, 1
        %s674 = scalar_select %p673, %s35, 1
        %s675 = scalar_lea.vmem %s6, %s674
        %p676 = pneg %p207
        %p677 = pneg %p204
        %p678 = scmp.lt.s32.totalorder %s35, 1
        %s679 = scalar_select %p678, %s35, 1
        %s680 = scalar_lea.vmem %s7, %s679
        %p681 = pneg %p233
        %p682 = pneg %p230
        %p683 = scmp.lt.s32.totalorder %s35, 1
        %s684 = scalar_select %p683, %s35, 1
        %s685 = scalar_lea.vmem %s8, %s684
        %p686 = pneg %p259
        %p687 = pneg %p256
        %s688 = sand.u32 %s35, 1
        %s689 = scalar_lea.sflag [#allocation12], %s688
        %s690 = sand.u32 %s272, 1
        %s691 = smul.addr %s690, 256
        %s692 = scalar_lea.vmem [#allocation11], %s691
        %p693 = pneg %p285
        %p694 = pneg %p282
        %p695 = scmp.lt.s32.totalorder %s35, 1
        %s696 = scalar_select %p695, %s35, 1
        %s697 = smul.addr %s696, 2
        %s698 = scalar_lea.vmem %s10, %s697
        %p699 = pneg %p311
        %p700 = pneg %p308
        %s701 = sand.u32 %s35, 1
        %s702 = scalar_lea.sflag [#allocation12], %s701
        %s703 = sand.u32 %s324, 1
        %s704 = smul.addr %s703, 256
        %s705 = scalar_lea.vmem [#allocation13], %s704
        %p706 = pneg %p337
        %p707 = pneg %p334
        %p708 = scmp.lt.s32.totalorder %s35, 1
        %s709 = scalar_select %p708, %s35, 1
        %s710 = scalar_lea.vmem %s12, %s709
        %p711 = pneg %p363
        %p712 = pneg %p360
        %p713 = pneg %p384
        %p714 = pneg %p381
        %p715 = scmp.lt.s32.totalorder %s35, 1
        %s716 = scalar_select %p715, %s35, 1
        %s717 = scalar_lea.vmem %s1, %s716
        %p718 = scmp.lt.s32.totalorder %s35, 1
        %s719 = scalar_select %p718, %s35, 1
        %s720 = scalar_lea.vmem %s6, %s719
        %p721 = scmp.lt.s32.totalorder %s35, 1
        %s722 = scalar_select %p721, %s35, 1
        %s723 = scalar_lea.vmem %s7, %s722
        %p724 = scmp.lt.s32.totalorder %s35, 1
        %s725 = scalar_select %p724, %s35, 1
        %s726 = scalar_lea.vmem %s8, %s725
        %p727 = scmp.lt.s32.totalorder %s35, 1
        %s728 = scalar_select %p727, %s35, 1
        %s729 = smul.addr %s728, 2
        %s730 = scalar_lea.vmem %s10, %s729
        %p731 = scmp.lt.s32.totalorder %s35, 1
        %s732 = scalar_select %p731, %s35, 1
        %s733 = scalar_lea.vmem %s12, %s732
        %p734 = scmp.eq.s32.totalorder %s35, 0
        // Predicated region
        $region101: #{tpu_custom_call.1} parent=71 // pred_check
          %p735 = pneg %p734
        $region102: #{tpu_custom_call.1} parent=71 // pred_check_branch
          %737 = sbr.rel (%p735) target = $region104
        $region103: #{tpu_custom_call.1} parent=71 // pred_region
          %v738 = vld [vmem:[#allocation2] sm:$0xff]
          %v739 = vld [vmem:[#allocation2 + $0x8] sm:$0xff]
          %740 = vst [vmem:[#allocation14] sm:$0xff] %v738
          %741 = vst [vmem:[#allocation14 + $0x8] sm:$0xff] %v739
        $region104: #{tpu_custom_call.1} parent=71 // pred_fallthru
          _
        %v742 = vld [vmem:[#allocation14] sm:$0xff]
        %v743 = vld [vmem:[#allocation14 + $0x8] sm:$0xff]
        %v744 = vld [vmem:[%s717] sm:$0x1]
        %v745 = vld [vmem:[%s589] sm:$0x1]
        %746 = vadd.xlane.f32.xlu0 %v742
        %v747 = vpop.xlane.xlu0 %746
        %748 = vadd.xlane.f32.xlu0 %v743
        %v749 = vpop.xlane.xlu0 %748
        %v750 = vrcp.pop 128.0
        %v751 = vmul.f32 %v747, %v750
        %v752 = vmul.f32 %v749, %v750
        %v753 = vsub.f32 %v742, %v751
        %v754 = vsub.f32 %v743, %v752
        %v755 = vmul.f32 %v753, %v753
        %v756 = vmul.f32 %v754, %v754
        %757 = vadd.xlane.f32.xlu0 %v755
        %v758 = vpop.xlane.xlu0 %757
        %759 = vadd.xlane.f32.xlu0 %v756
        %v760 = vpop.xlane.xlu0 %759
        %v761 = vmul.f32 %v758, %v750
        %v762 = vmul.f32 %v760, %v750
        %v763 = vadd.f32 %v761, 1e-05
        %v764 = vadd.f32 %v762, 1e-05
        %v765 = vrsqrt.pop %v763
        %v766 = vrsqrt.pop %v764
        %v767 = vmul.f32 %v753, %v765
        %v768 = vmul.f32 %v754, %v766
        %v770 = vlaneseq
        %v771 = vshrl.u32 %v770, 7
        %v772 = vsub.s32 0, %v771
        %v773 = vrot.slane %v744, %v772
        %v775 = vmul.f32 %v767, %v773
        %v776 = vmul.f32 %v768, %v773
        %v778 = vlaneseq
        %v779 = vshrl.u32 %v778, 7
        %v780 = vsub.s32 0, %v779
        %v781 = vrot.slane %v745, %v780
        %v783 = vadd.f32 %v775, %v781
        %v784 = vadd.f32 %v776, %v781
        %v785 = vld [vmem:[%s598] sm:$0xff]
        %v786 = vld [vmem:[%s598 + $0x8] sm:$0xff]
        %v787 = vld [vmem:[%s598 + $0x10] sm:$0xff]
        %v788 = vld [vmem:[%s598 + $0x18] sm:$0xff]
        %v789 = vld [vmem:[%s598 + $0x20] sm:$0xff]
        %v790 = vld [vmem:[%s598 + $0x28] sm:$0xff]
        %v791 = vld [vmem:[%s598 + $0x30] sm:$0xff]
        %v792 = vld [vmem:[%s598 + $0x38] sm:$0xff]
        %v793 = vld [vmem:[%s598 + $0x40] sm:$0xff]
        %v794 = vld [vmem:[%s598 + $0x48] sm:$0xff]
        %v795 = vld [vmem:[%s598 + $0x50] sm:$0xff]
        %v796 = vld [vmem:[%s598 + $0x58] sm:$0xff]
        %v797 = vld [vmem:[%s598 + $0x60] sm:$0xff]
        %v798 = vld [vmem:[%s598 + $0x68] sm:$0xff]
        %v799 = vld [vmem:[%s598 + $0x70] sm:$0xff]
        %v800 = vld [vmem:[%s598 + $0x78] sm:$0xff]
        %801 = vmatprep.subr.mxu0 0.0
        %802 = vmatpush1.msra.mxu0 %v785
        %803 = vmatprep.subr.mxu0 0.0
        %804 = vmatpush1.msra.mxu0 %v786
        %805 = vmatprep.subr.mxu0 0.0
        %806 = vmatpush1.msra.mxu0 %v787
        %807 = vmatprep.subr.mxu0 0.0
        %808 = vmatpush1.msra.mxu0 %v788
        %809 = vmatprep.subr.mxu0 0.0
        %810 = vmatpush1.msra.mxu0 %v789
        %811 = vmatprep.subr.mxu0 0.0
        %812 = vmatpush1.msra.mxu0 %v790
        %813 = vmatprep.subr.mxu0 0.0
        %814 = vmatpush1.msra.mxu0 %v791
        %815 = vmatprep.subr.mxu0 0.0
        %816 = vmatpush1.msra.mxu0 %v792
        %817 = vmatprep.subr.mxu0 0.0
        %818 = vmatpush1.msra.mxu0 %v793
        %819 = vmatprep.subr.mxu0 0.0
        %820 = vmatpush1.msra.mxu0 %v794
        %821 = vmatprep.subr.mxu0 0.0
        %822 = vmatpush1.msra.mxu0 %v795
        %823 = vmatprep.subr.mxu0 0.0
        %824 = vmatpush1.msra.mxu0 %v796
        %825 = vmatprep.subr.mxu0 0.0
        %826 = vmatpush1.msra.mxu0 %v797
        %827 = vmatprep.subr.mxu0 0.0
        %828 = vmatpush1.msra.mxu0 %v798
        %829 = vmatprep.subr.mxu0 0.0
        %830 = vmatpush1.msra.mxu0 %v799
        %831 = vmatprep.subr.mxu0 0.0
        %832 = vmatpush1.msra.mxu0 %v800
        %833 = vmatprep.subr.mxu0 0.0
        %834 = vmatpush1.msra.mxu0 0.0
        %835 = vmatprep.subr.mxu0 0.0
        %836 = vmatpush1.msra.mxu0 0.0
        %837 = vmatprep.subr.mxu0 0.0
        %838 = vmatpush1.msra.mxu0 0.0
        %839 = vmatprep.subr.mxu0 0.0
        %840 = vmatpush1.msra.mxu0 0.0
        %841 = vmatprep.subr.mxu0 0.0
        %842 = vmatpush1.msra.mxu0 0.0
        %843 = vmatprep.subr.mxu0 0.0
        %844 = vmatpush1.msra.mxu0 0.0
        %845 = vmatprep.subr.mxu0 0.0
        %846 = vmatpush1.msra.mxu0 0.0
        %847 = vmatprep.subr.mxu0 0.0
        %848 = vmatpush1.msra.mxu0 0.0
        %849 = vmatprep.subr.mxu0 0.0
        %850 = vmatpush1.msra.mxu0 0.0
        %851 = vmatprep.subr.mxu0 0.0
        %852 = vmatpush1.msra.mxu0 0.0
        %853 = vmatprep.subr.mxu0 0.0
        %854 = vmatpush1.msra.mxu0 0.0
        %855 = vmatprep.subr.mxu0 0.0
        %856 = vmatpush1.msra.mxu0 0.0
        %857 = vmatprep.subr.mxu0 0.0
        %858 = vmatpush1.msra.mxu0 0.0
        %859 = vmatprep.subr.mxu0 0.0
        %860 = vmatpush1.msra.mxu0 0.0
        %861 = vmatprep.subr.mxu0 0.0
        %862 = vmatpush1.msra.mxu0 0.0
        %863 = vmatprep.subr.mxu0 0.0
        %864 = vmatpush1.msra.mxu0 0.0
        %865 = vmatprep.mubr.f32.mxu0 0.0
        %866 = vmatmul.mubr.f32.gmra.mrb[0].mxu0 %v783
        %v867 = vpop.f32.mrb[0].mxu0
        %v868 = vadd.f32 0.0, %v867
        %v869 = vpop.f32.mrb[0].mxu0
        %870 = vmatprep.mubr.f32.mxu0 0.0
        %871 = vmatmul.mubr.f32.gmra.mrb[0].mxu0 %v784
        %v872 = vpop.f32.mrb[0].mxu0
        %v873 = vadd.f32 0.0, %v872
        %v874 = vpop.f32.mrb[0].mxu0
        %875 = vdwg.mxu0
        %v876 = vld [vmem:[%s607] sm:$0xff]
        %v877 = vld [vmem:[%s607 + $0x8] sm:$0xff]
        %v878 = vld [vmem:[%s607 + $0x10] sm:$0xff]
        %v879 = vld [vmem:[%s607 + $0x18] sm:$0xff]
        %v880 = vld [vmem:[%s607 + $0x20] sm:$0xff]
        %v881 = vld [vmem:[%s607 + $0x28] sm:$0xff]
        %v882 = vld [vmem:[%s607 + $0x30] sm:$0xff]
        %v883 = vld [vmem:[%s607 + $0x38] sm:$0xff]
        %v884 = vld [vmem:[%s607 + $0x40] sm:$0xff]
        %v885 = vld [vmem:[%s607 + $0x48] sm:$0xff]
        %v886 = vld [vmem:[%s607 + $0x50] sm:$0xff]
        %v887 = vld [vmem:[%s607 + $0x58] sm:$0xff]
        %v888 = vld [vmem:[%s607 + $0x60] sm:$0xff]
        %v889 = vld [vmem:[%s607 + $0x68] sm:$0xff]
        %v890 = vld [vmem:[%s607 + $0x70] sm:$0xff]
        %v891 = vld [vmem:[%s607 + $0x78] sm:$0xff]
        %v892 = vld [vmem:[%s607 + $0x80] sm:$0xff]
        %v893 = vld [vmem:[%s607 + $0x88] sm:$0xff]
        %v894 = vld [vmem:[%s607 + $0x90] sm:$0xff]
        %v895 = vld [vmem:[%s607 + $0x98] sm:$0xff]
        %v896 = vld [vmem:[%s607 + $0xa0] sm:$0xff]
        %v897 = vld [vmem:[%s607 + $0xa8] sm:$0xff]
        %v898 = vld [vmem:[%s607 + $0xb0] sm:$0xff]
        %v899 = vld [vmem:[%s607 + $0xb8] sm:$0xff]
        %v900 = vld [vmem:[%s607 + $0xc0] sm:$0xff]
        %v901 = vld [vmem:[%s607 + $0xc8] sm:$0xff]
        %v902 = vld [vmem:[%s607 + $0xd0] sm:$0xff]
        %v903 = vld [vmem:[%s607 + $0xd8] sm:$0xff]
        %v904 = vld [vmem:[%s607 + $0xe0] sm:$0xff]
        %v905 = vld [vmem:[%s607 + $0xe8] sm:$0xff]
        %v906 = vld [vmem:[%s607 + $0xf0] sm:$0xff]
        %v907 = vld [vmem:[%s607 + $0xf8] sm:$0xff]
        %908 = vmatprep.subr.mxu0 %v877
        %909 = vmatpush1.msra.mxu0 %v876
        %910 = vmatprep.subr.mxu0 %v879
        %911 = vmatpush1.msra.mxu0 %v878
        %912 = vmatprep.subr.mxu0 %v881
        %913 = vmatpush1.msra.mxu0 %v880
        %914 = vmatprep.subr.mxu0 %v883
        %915 = vmatpush1.msra.mxu0 %v882
        %916 = vmatprep.subr.mxu0 %v885
        %917 = vmatpush1.msra.mxu0 %v884
        %918 = vmatprep.subr.mxu0 %v887
        %919 = vmatpush1.msra.mxu0 %v886
        %920 = vmatprep.subr.mxu0 %v889
        %921 = vmatpush1.msra.mxu0 %v888
        %922 = vmatprep.subr.mxu0 %v891
        %923 = vmatpush1.msra.mxu0 %v890
        %924 = vmatprep.subr.mxu0 %v893
        %925 = vmatpush1.msra.mxu0 %v892
        %926 = vmatprep.subr.mxu0 %v895
        %927 = vmatpush1.msra.mxu0 %v894
        %928 = vmatprep.subr.mxu0 %v897
        %929 = vmatpush1.msra.mxu0 %v896
        %930 = vmatprep.subr.mxu0 %v899
        %931 = vmatpush1.msra.mxu0 %v898
        %932 = vmatprep.subr.mxu0 %v901
        %933 = vmatpush1.msra.mxu0 %v900
        %934 = vmatprep.subr.mxu0 %v903
        %935 = vmatpush1.msra.mxu0 %v902
        %936 = vmatprep.subr.mxu0 %v905
        %937 = vmatpush1.msra.mxu0 %v904
        %938 = vmatprep.subr.mxu0 %v907
        %939 = vmatpush1.msra.mxu0 %v906
        %940 = vmatprep.subr.mxu0 0.0
        %941 = vmatpush1.msra.mxu0 0.0
        %942 = vmatprep.subr.mxu0 0.0
        %943 = vmatpush1.msra.mxu0 0.0
        %944 = vmatprep.subr.mxu0 0.0
        %945 = vmatpush1.msra.mxu0 0.0
        %946 = vmatprep.subr.mxu0 0.0
        %947 = vmatpush1.msra.mxu0 0.0
        %948 = vmatprep.subr.mxu0 0.0
        %949 = vmatpush1.msra.mxu0 0.0
        %950 = vmatprep.subr.mxu0 0.0
        %951 = vmatpush1.msra.mxu0 0.0
        %952 = vmatprep.subr.mxu0 0.0
        %953 = vmatpush1.msra.mxu0 0.0
        %954 = vmatprep.subr.mxu0 0.0
        %955 = vmatpush1.msra.mxu0 0.0
        %956 = vmatprep.subr.mxu0 0.0
        %957 = vmatpush1.msra.mxu0 0.0
        %958 = vmatprep.subr.mxu0 0.0
        %959 = vmatpush1.msra.mxu0 0.0
        %960 = vmatprep.subr.mxu0 0.0
        %961 = vmatpush1.msra.mxu0 0.0
        %962 = vmatprep.subr.mxu0 0.0
        %963 = vmatpush1.msra.mxu0 0.0
        %964 = vmatprep.subr.mxu0 0.0
        %965 = vmatpush1.msra.mxu0 0.0
        %966 = vmatprep.subr.mxu0 0.0
        %967 = vmatpush1.msra.mxu0 0.0
        %968 = vmatprep.subr.mxu0 0.0
        %969 = vmatpush1.msra.mxu0 0.0
        %970 = vmatprep.subr.mxu0 0.0
        %971 = vmatpush1.msra.mxu0 0.0
        %972 = vmatprep.mubr.f32.mxu0 0.0
        %973 = vmatmul.mubr.f32.gmra.mrb[0].mxu0 %v783
        %v974 = vpop.f32.mrb[0].mxu0
        %v975 = vadd.f32 0.0, %v974
        %v976 = vpop.f32.mrb[0].mxu0
        %v977 = vadd.f32 0.0, %v976
        %978 = vmatprep.mubr.f32.mxu0 0.0
        %979 = vmatmul.mubr.f32.gmra.mrb[0].mxu0 %v784
        %v980 = vpop.f32.mrb[0].mxu0
        %v981 = vadd.f32 0.0, %v980
        %v982 = vpop.f32.mrb[0].mxu0
        %v983 = vadd.f32 0.0, %v982
        %984 = vdwg.mxu0
        %vm985 = vcmask 261120
        %v987 = vsel %vm985, %v868, 0
        %v990 = vsel %vm985, %v975, 0
        %992 = vmatprep.subr.mxu0 0.0
        %993 = vmatpush1.xpose.msra.mxu0 %v990
        %994 = vmatprep.subr.mxu0 0.0
        %995 = vmatpush1.xpose.msra.mxu0 0.0
        %996 = vmatprep.subr.mxu0 0.0
        %997 = vmatpush1.xpose.msra.mxu0 0.0
        %998 = vmatprep.subr.mxu0 0.0
        %999 = vmatpush1.xpose.msra.mxu0 0.0
        %1000 = vmatprep.subr.mxu0 0.0
        %1001 = vmatpush1.xpose.msra.mxu0 0.0
        %1002 = vmatprep.subr.mxu0 0.0
        %1003 = vmatpush1.xpose.msra.mxu0 0.0
        %1004 = vmatprep.subr.mxu0 0.0
        %1005 = vmatpush1.xpose.msra.mxu0 0.0
        %1006 = vmatprep.subr.mxu0 0.0
        %1007 = vmatpush1.xpose.msra.mxu0 0.0
        %1008 = vmatprep.subr.mxu0 0.0
        %1009 = vmatpush1.xpose.msra.mxu0 0.0
        %1010 = vmatprep.subr.mxu0 0.0
        %1011 = vmatpush1.xpose.msra.mxu0 0.0
        %1012 = vmatprep.subr.mxu0 0.0
        %1013 = vmatpush1.xpose.msra.mxu0 0.0
        %1014 = vmatprep.subr.mxu0 0.0
        %1015 = vmatpush1.xpose.msra.mxu0 0.0
        %1016 = vmatprep.subr.mxu0 0.0
        %1017 = vmatpush1.xpose.msra.mxu0 0.0
        %1018 = vmatprep.subr.mxu0 0.0
        %1019 = vmatpush1.xpose.msra.mxu0 0.0
        %1020 = vmatprep.subr.mxu0 0.0
        %1021 = vmatpush1.xpose.msra.mxu0 0.0
        %1022 = vmatprep.subr.mxu0 0.0
        %1023 = vmatpush1.xpose.msra.mxu0 0.0
        %1024 = vmatprep.subr.mxu0 0.0
        %1025 = vmatpush1.xpose.msra.mxu0 0.0
        %1026 = vmatprep.subr.mxu0 0.0
        %1027 = vmatpush1.xpose.msra.mxu0 0.0
        %1028 = vmatprep.subr.mxu0 0.0
        %1029 = vmatpush1.xpose.msra.mxu0 0.0
        %1030 = vmatprep.subr.mxu0 0.0
        %1031 = vmatpush1.xpose.msra.mxu0 0.0
        %1032 = vmatprep.subr.mxu0 0.0
        %1033 = vmatpush1.xpose.msra.mxu0 0.0
        %1034 = vmatprep.subr.mxu0 0.0
        %1035 = vmatpush1.xpose.msra.mxu0 0.0
        %1036 = vmatprep.subr.mxu0 0.0
        %1037 = vmatpush1.xpose.msra.mxu0 0.0
        %1038 = vmatprep.subr.mxu0 0.0
        %1039 = vmatpush1.xpose.msra.mxu0 0.0
        %1040 = vmatprep.subr.mxu0 0.0
        %1041 = vmatpush1.xpose.msra.mxu0 0.0
        %1042 = vmatprep.subr.mxu0 0.0
        %1043 = vmatpush1.xpose.msra.mxu0 0.0
        %1044 = vmatprep.subr.mxu0 0.0
        %1045 = vmatpush1.xpose.msra.mxu0 0.0
        %1046 = vmatprep.subr.mxu0 0.0
        %1047 = vmatpush1.xpose.msra.mxu0 0.0
        %1048 = vmatprep.subr.mxu0 0.0
        %1049 = vmatpush1.xpose.msra.mxu0 0.0
        %1050 = vmatprep.subr.mxu0 0.0
        %1051 = vmatpush1.xpose.msra.mxu0 0.0
        %1052 = vmatprep.subr.mxu0 0.0
        %1053 = vmatpush1.xpose.msra.mxu0 0.0
        %1054 = vmatprep.subr.mxu0 0.0
        %1055 = vmatpush1.xpose.msra.mxu0 0.0
        %1056 = vmatprep.mubr.f32.mxu0 0.0
        %1057 = vmatmul.mubr.f32.gmra.mrb[0].mxu0 %v987
        %v1058 = vpop.f32.mrb[0].mxu0
        %v1059 = vadd.f32 0.0, %v1058
        %v1060 = vpop.f32.mrb[0].mxu0
        %1061 = vdwg.mxu0
        %v1063 = vsel %vm985, %v873, 0
        %v1066 = vsel %vm985, %v981, 0
        %1068 = vmatprep.subr.mxu0 0.0
        %1069 = vmatpush1.xpose.msra.mxu0 %v1066
        %1070 = vmatprep.subr.mxu0 0.0
        %1071 = vmatpush1.xpose.msra.mxu0 0.0
        %1072 = vmatprep.subr.mxu0 0.0
        %1073 = vmatpush1.xpose.msra.mxu0 0.0
        %1074 = vmatprep.subr.mxu0 0.0
        %1075 = vmatpush1.xpose.msra.mxu0 0.0
        %1076 = vmatprep.subr.mxu0 0.0
        %1077 = vmatpush1.xpose.msra.mxu0 0.0
        %1078 = vmatprep.subr.mxu0 0.0
        %1079 = vmatpush1.xpose.msra.mxu0 0.0
        %1080 = vmatprep.subr.mxu0 0.0
        %1081 = vmatpush1.xpose.msra.mxu0 0.0
        %1082 = vmatprep.subr.mxu0 0.0
        %1083 = vmatpush1.xpose.msra.mxu0 0.0
        %1084 = vmatprep.subr.mxu0 0.0
        %1085 = vmatpush1.xpose.msra.mxu0 0.0
        %1086 = vmatprep.subr.mxu0 0.0
        %1087 = vmatpush1.xpose.msra.mxu0 0.0
        %1088 = vmatprep.subr.mxu0 0.0
        %1089 = vmatpush1.xpose.msra.mxu0 0.0
        %1090 = vmatprep.subr.mxu0 0.0
        %1091 = vmatpush1.xpose.msra.mxu0 0.0
        %1092 = vmatprep.subr.mxu0 0.0
        %1093 = vmatpush1.xpose.msra.mxu0 0.0
        %1094 = vmatprep.subr.mxu0 0.0
        %1095 = vmatpush1.xpose.msra.mxu0 0.0
        %1096 = vmatprep.subr.mxu0 0.0
        %1097 = vmatpush1.xpose.msra.mxu0 0.0
        %1098 = vmatprep.subr.mxu0 0.0
        %1099 = vmatpush1.xpose.msra.mxu0 0.0
        %1100 = vmatprep.subr.mxu0 0.0
        %1101 = vmatpush1.xpose.msra.mxu0 0.0
        %1102 = vmatprep.subr.mxu0 0.0
        %1103 = vmatpush1.xpose.msra.mxu0 0.0
        %1104 = vmatprep.subr.mxu0 0.0
        %1105 = vmatpush1.xpose.msra.mxu0 0.0
        %1106 = vmatprep.subr.mxu0 0.0
        %1107 = vmatpush1.xpose.msra.mxu0 0.0
        %1108 = vmatprep.subr.mxu0 0.0
        %1109 = vmatpush1.xpose.msra.mxu0 0.0
        %1110 = vmatprep.subr.mxu0 0.0
        %1111 = vmatpush1.xpose.msra.mxu0 0.0
        %1112 = vmatprep.subr.mxu0 0.0
        %1113 = vmatpush1.xpose.msra.mxu0 0.0
        %1114 = vmatprep.subr.mxu0 0.0
        %1115 = vmatpush1.xpose.msra.mxu0 0.0
        %1116 = vmatprep.subr.mxu0 0.0
        %1117 = vmatpush1.xpose.msra.mxu0 0.0
        %1118 = vmatprep.subr.mxu0 0.0
        %1119 = vmatpush1.xpose.msra.mxu0 0.0
        %1120 = vmatprep.subr.mxu0 0.0
        %1121 = vmatpush1.xpose.msra.mxu0 0.0
        %1122 = vmatprep.subr.mxu0 0.0
        %1123 = vmatpush1.xpose.msra.mxu0 0.0
        %1124 = vmatprep.subr.mxu0 0.0
        %1125 = vmatpush1.xpose.msra.mxu0 0.0
        %1126 = vmatprep.subr.mxu0 0.0
        %1127 = vmatpush1.xpose.msra.mxu0 0.0
        %1128 = vmatprep.subr.mxu0 0.0
        %1129 = vmatpush1.xpose.msra.mxu0 0.0
        %1130 = vmatprep.subr.mxu0 0.0
        %1131 = vmatpush1.xpose.msra.mxu0 0.0
        %1132 = vmatprep.mubr.f32.mxu0 0.0
        %1133 = vmatmul.mubr.f32.gmra.mrb[0].mxu0 %v1063
        %v1134 = vpop.f32.mrb[0].mxu0
        %v1135 = vadd.f32 0.0, %v1134
        %v1136 = vpop.f32.mrb[0].mxu0
        %1137 = vdwg.mxu0
        %v1138 = vmul.f32 %v1059, 0.17677669
        %v1139 = vmul.f32 %v1135, 0.17677669
        %vm1140 = vcmask 64512
        %v1141 = vsel %vm1140, %v1138, -inf
        %1142 = vmax.xlane.f32.xlu0 %v1141
        %v1143 = vpop.xlane.xlu0 %1142
        %v1144 = vsel %vm1140, %v1139, -inf
        %1145 = vmax.xlane.f32.xlu0 %v1144
        %v1146 = vpop.xlane.xlu0 %1145
        %v1147 = vsub.f32 %v1138, %v1143
        %v1148 = vsub.f32 %v1139, %v1146
        %v1149 = vmul.f32 %v1147, 1.442695
        %v1150 = vpow.pop %v1149
        %v1151 = vmul.f32 %v1148, 1.442695
        %v1152 = vpow.pop %v1151
        %v1153 = vsel %vm1140, %v1150, 0.0
        %1154 = vadd.xlane.f32.xlu0 %v1153
        %v1155 = vpop.xlane.xlu0 %1154
        %v1156 = vsel %vm1140, %v1152, 0.0
        %1157 = vadd.xlane.f32.xlu0 %v1156
        %v1158 = vpop.xlane.xlu0 %1157
        %v1159 = vrcp.pop %v1155
        %v1160 = vmul.f32 %v1150, %v1159
        %v1161 = vrcp.pop %v1158
        %v1162 = vmul.f32 %v1152, %v1161
        %v1164 = vsel %vm1140, %v1160, 0
        %1166 = vmatprep.subr.mxu0 0.0
        %1167 = vmatpush1.msra.mxu0 %v977
        %1168 = vmatprep.subr.mxu0 0.0
        %1169 = vmatpush1.msra.mxu0 0.0
        %1170 = vmatprep.subr.mxu0 0.0
        %1171 = vmatpush1.msra.mxu0 0.0
        %1172 = vmatprep.subr.mxu0 0.0
        %1173 = vmatpush1.msra.mxu0 0.0
        %1174 = vmatprep.subr.mxu0 0.0
        %1175 = vmatpush1.msra.mxu0 0.0
        %1176 = vmatprep.subr.mxu0 0.0
        %1177 = vmatpush1.msra.mxu0 0.0
        %1178 = vmatprep.subr.mxu0 0.0
        %1179 = vmatpush1.msra.mxu0 0.0
        %1180 = vmatprep.subr.mxu0 0.0
        %1181 = vmatpush1.msra.mxu0 0.0
        %1182 = vmatprep.subr.mxu0 0.0
        %1183 = vmatpush1.msra.mxu0 0.0
        %1184 = vmatprep.subr.mxu0 0.0
        %1185 = vmatpush1.msra.mxu0 0.0
        %1186 = vmatprep.subr.mxu0 0.0
        %1187 = vmatpush1.msra.mxu0 0.0
        %1188 = vmatprep.subr.mxu0 0.0
        %1189 = vmatpush1.msra.mxu0 0.0
        %1190 = vmatprep.subr.mxu0 0.0
        %1191 = vmatpush1.msra.mxu0 0.0
        %1192 = vmatprep.subr.mxu0 0.0
        %1193 = vmatpush1.msra.mxu0 0.0
        %1194 = vmatprep.subr.mxu0 0.0
        %1195 = vmatpush1.msra.mxu0 0.0
        %1196 = vmatprep.subr.mxu0 0.0
        %1197 = vmatpush1.msra.mxu0 0.0
        %1198 = vmatprep.subr.mxu0 0.0
        %1199 = vmatpush1.msra.mxu0 0.0
        %1200 = vmatprep.subr.mxu0 0.0
        %1201 = vmatpush1.msra.mxu0 0.0
        %1202 = vmatprep.subr.mxu0 0.0
        %1203 = vmatpush1.msra.mxu0 0.0
        %1204 = vmatprep.subr.mxu0 0.0
        %1205 = vmatpush1.msra.mxu0 0.0
        %1206 = vmatprep.subr.mxu0 0.0
        %1207 = vmatpush1.msra.mxu0 0.0
        %1208 = vmatprep.subr.mxu0 0.0
        %1209 = vmatpush1.msra.mxu0 0.0
        %1210 = vmatprep.subr.mxu0 0.0
        %1211 = vmatpush1.msra.mxu0 0.0
        %1212 = vmatprep.subr.mxu0 0.0
        %1213 = vmatpush1.msra.mxu0 0.0
        %1214 = vmatprep.subr.mxu0 0.0
        %1215 = vmatpush1.msra.mxu0 0.0
        %1216 = vmatprep.subr.mxu0 0.0
        %1217 = vmatpush1.msra.mxu0 0.0
        %1218 = vmatprep.subr.mxu0 0.0
        %1219 = vmatpush1.msra.mxu0 0.0
        %1220 = vmatprep.subr.mxu0 0.0
        %1221 = vmatpush1.msra.mxu0 0.0
        %1222 = vmatprep.subr.mxu0 0.0
        %1223 = vmatpush1.msra.mxu0 0.0
        %1224 = vmatprep.subr.mxu0 0.0
        %1225 = vmatpush1.msra.mxu0 0.0
        %1226 = vmatprep.subr.mxu0 0.0
        %1227 = vmatpush1.msra.mxu0 0.0
        %1228 = vmatprep.subr.mxu0 0.0
        %1229 = vmatpush1.msra.mxu0 0.0
        %1230 = vmatprep.mubr.f32.mxu0 0.0
        %1231 = vmatmul.mubr.f32.gmra.mrb[0].mxu0 %v1164
        %v1232 = vpop.f32.mrb[0].mxu0
        %v1233 = vadd.f32 0.0, %v1232
        %v1234 = vpop.f32.mrb[0].mxu0
        %1235 = vdwg.mxu0
        %v1237 = vsel %vm1140, %v1162, 0
        %1239 = vmatprep.subr.mxu0 0.0
        %1240 = vmatpush1.msra.mxu0 %v983
        %1241 = vmatprep.subr.mxu0 0.0
        %1242 = vmatpush1.msra.mxu0 0.0
        %1243 = vmatprep.subr.mxu0 0.0
        %1244 = vmatpush1.msra.mxu0 0.0
        %1245 = vmatprep.subr.mxu0 0.0
        %1246 = vmatpush1.msra.mxu0 0.0
        %1247 = vmatprep.subr.mxu0 0.0
        %1248 = vmatpush1.msra.mxu0 0.0
        %1249 = vmatprep.subr.mxu0 0.0
        %1250 = vmatpush1.msra.mxu0 0.0
        %1251 = vmatprep.subr.mxu0 0.0
        %1252 = vmatpush1.msra.mxu0 0.0
        %1253 = vmatprep.subr.mxu0 0.0
        %1254 = vmatpush1.msra.mxu0 0.0
        %1255 = vmatprep.subr.mxu0 0.0
        %1256 = vmatpush1.msra.mxu0 0.0
        %1257 = vmatprep.subr.mxu0 0.0
        %1258 = vmatpush1.msra.mxu0 0.0
        %1259 = vmatprep.subr.mxu0 0.0
        %1260 = vmatpush1.msra.mxu0 0.0
        %1261 = vmatprep.subr.mxu0 0.0
        %1262 = vmatpush1.msra.mxu0 0.0
        %1263 = vmatprep.subr.mxu0 0.0
        %1264 = vmatpush1.msra.mxu0 0.0
        %1265 = vmatprep.subr.mxu0 0.0
        %1266 = vmatpush1.msra.mxu0 0.0
        %1267 = vmatprep.subr.mxu0 0.0
        %1268 = vmatpush1.msra.mxu0 0.0
        %1269 = vmatprep.subr.mxu0 0.0
        %1270 = vmatpush1.msra.mxu0 0.0
        %1271 = vmatprep.subr.mxu0 0.0
        %1272 = vmatpush1.msra.mxu0 0.0
        %1273 = vmatprep.subr.mxu0 0.0
        %1274 = vmatpush1.msra.mxu0 0.0
        %1275 = vmatprep.subr.mxu0 0.0
        %1276 = vmatpush1.msra.mxu0 0.0
        %1277 = vmatprep.subr.mxu0 0.0
        %1278 = vmatpush1.msra.mxu0 0.0
        %1279 = vmatprep.subr.mxu0 0.0
        %1280 = vmatpush1.msra.mxu0 0.0
        %1281 = vmatprep.subr.mxu0 0.0
        %1282 = vmatpush1.msra.mxu0 0.0
        %1283 = vmatprep.subr.mxu0 0.0
        %1284 = vmatpush1.msra.mxu0 0.0
        %1285 = vmatprep.subr.mxu0 0.0
        %1286 = vmatpush1.msra.mxu0 0.0
        %1287 = vmatprep.subr.mxu0 0.0
        %1288 = vmatpush1.msra.mxu0 0.0
        %1289 = vmatprep.subr.mxu0 0.0
        %1290 = vmatpush1.msra.mxu0 0.0
        %1291 = vmatprep.subr.mxu0 0.0
        %1292 = vmatpush1.msra.mxu0 0.0
        %1293 = vmatprep.subr.mxu0 0.0
        %1294 = vmatpush1.msra.mxu0 0.0
        %1295 = vmatprep.subr.mxu0 0.0
        %1296 = vmatpush1.msra.mxu0 0.0
        %1297 = vmatprep.subr.mxu0 0.0
        %1298 = vmatpush1.msra.mxu0 0.0
        %1299 = vmatprep.subr.mxu0 0.0
        %1300 = vmatpush1.msra.mxu0 0.0
        %1301 = vmatprep.subr.mxu0 0.0
        %1302 = vmatpush1.msra.mxu0 0.0
        %1303 = vmatprep.mubr.f32.mxu0 0.0
        %1304 = vmatmul.mubr.f32.gmra.mrb[0].mxu0 %v1237
        %v1305 = vpop.f32.mrb[0].mxu0
        %v1306 = vadd.f32 0.0, %v1305
        %v1307 = vpop.f32.mrb[0].mxu0
        %1308 = vdwg.mxu0
        %1309 = vrot.lane.b32.xlu0 %v868, 96
        %v1310 = vpop.permute.xlu0 %1309
        %1311 = vrot.lane.b32.xlu0 %v975, 96
        %v1312 = vpop.permute.xlu0 %1311
        %v1313 = vsel %vm985, %v1310, 0
        %v1315 = vsel %vm985, %v1312, 0
        %1317 = vmatprep.subr.mxu0 0.0
        %1318 = vmatpush1.xpose.msra.mxu0 %v1315
        %1319 = vmatprep.subr.mxu0 0.0
        %1320 = vmatpush1.xpose.msra.mxu0 0.0
        %1321 = vmatprep.subr.mxu0 0.0
        %1322 = vmatpush1.xpose.msra.mxu0 0.0
        %1323 = vmatprep.subr.mxu0 0.0
        %1324 = vmatpush1.xpose.msra.mxu0 0.0
        %1325 = vmatprep.subr.mxu0 0.0
        %1326 = vmatpush1.xpose.msra.mxu0 0.0
        %1327 = vmatprep.subr.mxu0 0.0
        %1328 = vmatpush1.xpose.msra.mxu0 0.0
        %1329 = vmatprep.subr.mxu0 0.0
        %1330 = vmatpush1.xpose.msra.mxu0 0.0
        %1331 = vmatprep.subr.mxu0 0.0
        %1332 = vmatpush1.xpose.msra.mxu0 0.0
        %1333 = vmatprep.subr.mxu0 0.0
        %1334 = vmatpush1.xpose.msra.mxu0 0.0
        %1335 = vmatprep.subr.mxu0 0.0
        %1336 = vmatpush1.xpose.msra.mxu0 0.0
        %1337 = vmatprep.subr.mxu0 0.0
        %1338 = vmatpush1.xpose.msra.mxu0 0.0
        %1339 = vmatprep.subr.mxu0 0.0
        %1340 = vmatpush1.xpose.msra.mxu0 0.0
        %1341 = vmatprep.subr.mxu0 0.0
        %1342 = vmatpush1.xpose.msra.mxu0 0.0
        %1343 = vmatprep.subr.mxu0 0.0
        %1344 = vmatpush1.xpose.msra.mxu0 0.0
        %1345 = vmatprep.subr.mxu0 0.0
        %1346 = vmatpush1.xpose.msra.mxu0 0.0
        %1347 = vmatprep.subr.mxu0 0.0
        %1348 = vmatpush1.xpose.msra.mxu0 0.0
        %1349 = vmatprep.subr.mxu0 0.0
        %1350 = vmatpush1.xpose.msra.mxu0 0.0
        %1351 = vmatprep.subr.mxu0 0.0
        %1352 = vmatpush1.xpose.msra.mxu0 0.0
        %1353 = vmatprep.subr.mxu0 0.0
        %1354 = vmatpush1.xpose.msra.mxu0 0.0
        %1355 = vmatprep.subr.mxu0 0.0
        %1356 = vmatpush1.xpose.msra.mxu0 0.0
        %1357 = vmatprep.subr.mxu0 0.0
        %1358 = vmatpush1.xpose.msra.mxu0 0.0
        %1359 = vmatprep.subr.mxu0 0.0
        %1360 = vmatpush1.xpose.msra.mxu0 0.0
        %1361 = vmatprep.subr.mxu0 0.0
        %1362 = vmatpush1.xpose.msra.mxu0 0.0
        %1363 = vmatprep.subr.mxu0 0.0
        %1364 = vmatpush1.xpose.msra.mxu0 0.0
        %1365 = vmatprep.subr.mxu0 0.0
        %1366 = vmatpush1.xpose.msra.mxu0 0.0
        %1367 = vmatprep.subr.mxu0 0.0
        %1368 = vmatpush1.xpose.msra.mxu0 0.0
        %1369 = vmatprep.subr.mxu0 0.0
        %1370 = vmatpush1.xpose.msra.mxu0 0.0
        %1371 = vmatprep.subr.mxu0 0.0
        %1372 = vmatpush1.xpose.msra.mxu0 0.0
        %1373 = vmatprep.subr.mxu0 0.0
        %1374 = vmatpush1.xpose.msra.mxu0 0.0
        %1375 = vmatprep.subr.mxu0 0.0
        %1376 = vmatpush1.xpose.msra.mxu0 0.0
        %1377 = vmatprep.subr.mxu0 0.0
        %1378 = vmatpush1.xpose.msra.mxu0 0.0
        %1379 = vmatprep.subr.mxu0 0.0
        %1380 = vmatpush1.xpose.msra.mxu0 0.0
        %1381 = vmatprep.mubr.f32.mxu0 0.0
        %1382 = vmatmul.mubr.f32.gmra.mrb[0].mxu0 %v1313
        %v1383 = vpop.f32.mrb[0].mxu0
        %v1384 = vadd.f32 0.0, %v1383
        %v1385 = vpop.f32.mrb[0].mxu0
        %1386 = vdwg.mxu0
        %1387 = vrot.lane.b32.xlu0 %v873, 96
        %v1388 = vpop.permute.xlu0 %1387
        %1389 = vrot.lane.b32.xlu0 %v981, 96
        %v1390 = vpop.permute.xlu0 %1389
        %v1391 = vsel %vm985, %v1388, 0
        %v1393 = vsel %vm985, %v1390, 0
        %1395 = vmatprep.subr.mxu0 0.0
        %1396 = vmatpush1.xpose.msra.mxu0 %v1393
        %1397 = vmatprep.subr.mxu0 0.0
        %1398 = vmatpush1.xpose.msra.mxu0 0.0
        %1399 = vmatprep.subr.mxu0 0.0
        %1400 = vmatpush1.xpose.msra.mxu0 0.0
        %1401 = vmatprep.subr.mxu0 0.0
        %1402 = vmatpush1.xpose.msra.mxu0 0.0
        %1403 = vmatprep.subr.mxu0 0.0
        %1404 = vmatpush1.xpose.msra.mxu0 0.0
        %1405 = vmatprep.subr.mxu0 0.0
        %1406 = vmatpush1.xpose.msra.mxu0 0.0
        %1407 = vmatprep.subr.mxu0 0.0
        %1408 = vmatpush1.xpose.msra.mxu0 0.0
        %1409 = vmatprep.subr.mxu0 0.0
        %1410 = vmatpush1.xpose.msra.mxu0 0.0
        %1411 = vmatprep.subr.mxu0 0.0
        %1412 = vmatpush1.xpose.msra.mxu0 0.0
        %1413 = vmatprep.subr.mxu0 0.0
        %1414 = vmatpush1.xpose.msra.mxu0 0.0
        %1415 = vmatprep.subr.mxu0 0.0
        %1416 = vmatpush1.xpose.msra.mxu0 0.0
        %1417 = vmatprep.subr.mxu0 0.0
        %1418 = vmatpush1.xpose.msra.mxu0 0.0
        %1419 = vmatprep.subr.mxu0 0.0
        %1420 = vmatpush1.xpose.msra.mxu0 0.0
        %1421 = vmatprep.subr.mxu0 0.0
        %1422 = vmatpush1.xpose.msra.mxu0 0.0
        %1423 = vmatprep.subr.mxu0 0.0
        %1424 = vmatpush1.xpose.msra.mxu0 0.0
        %1425 = vmatprep.subr.mxu0 0.0
        %1426 = vmatpush1.xpose.msra.mxu0 0.0
        %1427 = vmatprep.subr.mxu0 0.0
        %1428 = vmatpush1.xpose.msra.mxu0 0.0
        %1429 = vmatprep.subr.mxu0 0.0
        %1430 = vmatpush1.xpose.msra.mxu0 0.0
        %1431 = vmatprep.subr.mxu0 0.0
        %1432 = vmatpush1.xpose.msra.mxu0 0.0
        %1433 = vmatprep.subr.mxu0 0.0
        %1434 = vmatpush1.xpose.msra.mxu0 0.0
        %1435 = vmatprep.subr.mxu0 0.0
        %1436 = vmatpush1.xpose.msra.mxu0 0.0
        %1437 = vmatprep.subr.mxu0 0.0
        %1438 = vmatpush1.xpose.msra.mxu0 0.0
        %1439 = vmatprep.subr.mxu0 0.0
        %1440 = vmatpush1.xpose.msra.mxu0 0.0
        %1441 = vmatprep.subr.mxu0 0.0
        %1442 = vmatpush1.xpose.msra.mxu0 0.0
        %1443 = vmatprep.subr.mxu0 0.0
        %1444 = vmatpush1.xpose.msra.mxu0 0.0
        %1445 = vmatprep.subr.mxu0 0.0
        %1446 = vmatpush1.xpose.msra.mxu0 0.0
        %1447 = vmatprep.subr.mxu0 0.0
        %1448 = vmatpush1.xpose.msra.mxu0 0.0
        %1449 = vmatprep.subr.mxu0 0.0
        %1450 = vmatpush1.xpose.msra.mxu0 0.0
        %1451 = vmatprep.subr.mxu0 0.0
        %1452 = vmatpush1.xpose.msra.mxu0 0.0
        %1453 = vmatprep.subr.mxu0 0.0
        %1454 = vmatpush1.xpose.msra.mxu0 0.0
        %1455 = vmatprep.subr.mxu0 0.0
        %1456 = vmatpush1.xpose.msra.mxu0 0.0
        %1457 = vmatprep.subr.mxu0 0.0
        %1458 = vmatpush1.xpose.msra.mxu0 0.0
        %1459 = vmatprep.mubr.f32.mxu0 0.0
        %1460 = vmatmul.mubr.f32.gmra.mrb[0].mxu0 %v1391
        %v1461 = vpop.f32.mrb[0].mxu0
        %v1462 = vadd.f32 0.0, %v1461
        %v1463 = vpop.f32.mrb[0].mxu0
        %1464 = vdwg.mxu0
        %v1465 = vmul.f32 %v1384, 0.17677669
        %v1466 = vmul.f32 %v1462, 0.17677669
        %v1467 = vsel %vm1140, %v1465, -inf
        %1468 = vmax.xlane.f32.xlu0 %v1467
        %v1469 = vpop.xlane.xlu0 %1468
        %v1470 = vsel %vm1140, %v1466, -inf
        %1471 = vmax.xlane.f32.xlu0 %v1470
        %v1472 = vpop.xlane.xlu0 %1471
        %v1473 = vsub.f32 %v1465, %v1469
        %v1474 = vsub.f32 %v1466, %v1472
        %v1475 = vmul.f32 %v1473, 1.442695
        %v1476 = vpow.pop %v1475
        %v1477 = vmul.f32 %v1474, 1.442695
        %v1478 = vpow.pop %v1477
        %v1479 = vsel %vm1140, %v1476, 0.0
        %1480 = vadd.xlane.f32.xlu0 %v1479
        %v1481 = vpop.xlane.xlu0 %1480
        %v1482 = vsel %vm1140, %v1478, 0.0
        %1483 = vadd.xlane.f32.xlu0 %v1482
        %v1484 = vpop.xlane.xlu0 %1483
        %v1485 = vrcp.pop %v1481
        %v1486 = vmul.f32 %v1476, %v1485
        %v1487 = vrcp.pop %v1484
        %v1488 = vmul.f32 %v1478, %v1487
        %1490 = vrot.lane.b32.xlu0 %v977, 96
        %v1491 = vpop.permute.xlu0 %1490
        %v1494 = vsel %vm1140, %v1486, 0
        %1496 = vmatprep.subr.mxu0 0.0
        %1497 = vmatpush1.msra.mxu0 %v1491
        %1498 = vmatprep.subr.mxu0 0.0
        %1499 = vmatpush1.msra.mxu0 0.0
        %1500 = vmatprep.subr.mxu0 0.0
        %1501 = vmatpush1.msra.mxu0 0.0
        %1502 = vmatprep.subr.mxu0 0.0
        %1503 = vmatpush1.msra.mxu0 0.0
        %1504 = vmatprep.subr.mxu0 0.0
        %1505 = vmatpush1.msra.mxu0 0.0
        %1506 = vmatprep.subr.mxu0 0.0
        %1507 = vmatpush1.msra.mxu0 0.0
        %1508 = vmatprep.subr.mxu0 0.0
        %1509 = vmatpush1.msra.mxu0 0.0
        %1510 = vmatprep.subr.mxu0 0.0
        %1511 = vmatpush1.msra.mxu0 0.0
        %1512 = vmatprep.subr.mxu0 0.0
        %1513 = vmatpush1.msra.mxu0 0.0
        %1514 = vmatprep.subr.mxu0 0.0
        %1515 = vmatpush1.msra.mxu0 0.0
        %1516 = vmatprep.subr.mxu0 0.0
        %1517 = vmatpush1.msra.mxu0 0.0
        %1518 = vmatprep.subr.mxu0 0.0
        %1519 = vmatpush1.msra.mxu0 0.0
        %1520 = vmatprep.subr.mxu0 0.0
        %1521 = vmatpush1.msra.mxu0 0.0
        %1522 = vmatprep.subr.mxu0 0.0
        %1523 = vmatpush1.msra.mxu0 0.0
        %1524 = vmatprep.subr.mxu0 0.0
        %1525 = vmatpush1.msra.mxu0 0.0
        %1526 = vmatprep.subr.mxu0 0.0
        %1527 = vmatpush1.msra.mxu0 0.0
        %1528 = vmatprep.subr.mxu0 0.0
        %1529 = vmatpush1.msra.mxu0 0.0
        %1530 = vmatprep.subr.mxu0 0.0
        %1531 = vmatpush1.msra.mxu0 0.0
        %1532 = vmatprep.subr.mxu0 0.0
        %1533 = vmatpush1.msra.mxu0 0.0
        %1534 = vmatprep.subr.mxu0 0.0
        %1535 = vmatpush1.msra.mxu0 0.0
        %1536 = vmatprep.subr.mxu0 0.0
        %1537 = vmatpush1.msra.mxu0 0.0
        %1538 = vmatprep.subr.mxu0 0.0
        %1539 = vmatpush1.msra.mxu0 0.0
        %1540 = vmatprep.subr.mxu0 0.0
        %1541 = vmatpush1.msra.mxu0 0.0
        %1542 = vmatprep.subr.mxu0 0.0
        %1543 = vmatpush1.msra.mxu0 0.0
        %1544 = vmatprep.subr.mxu0 0.0
        %1545 = vmatpush1.msra.mxu0 0.0
        %1546 = vmatprep.subr.mxu0 0.0
        %1547 = vmatpush1.msra.mxu0 0.0
        %1548 = vmatprep.subr.mxu0 0.0
        %1549 = vmatpush1.msra.mxu0 0.0
        %1550 = vmatprep.subr.mxu0 0.0
        %1551 = vmatpush1.msra.mxu0 0.0
        %1552 = vmatprep.subr.mxu0 0.0
        %1553 = vmatpush1.msra.mxu0 0.0
        %1554 = vmatprep.subr.mxu0 0.0
        %1555 = vmatpush1.msra.mxu0 0.0
        %1556 = vmatprep.subr.mxu0 0.0
        %1557 = vmatpush1.msra.mxu0 0.0
        %1558 = vmatprep.subr.mxu0 0.0
        %1559 = vmatpush1.msra.mxu0 0.0
        %1560 = vmatprep.mubr.f32.mxu0 0.0
        %1561 = vmatmul.mubr.f32.gmra.mrb[0].mxu0 %v1494
        %v1562 = vpop.f32.mrb[0].mxu0
        %v1563 = vadd.f32 0.0, %v1562
        %v1564 = vpop.f32.mrb[0].mxu0
        %1565 = vdwg.mxu0
        %1567 = vrot.lane.b32.xlu0 %v983, 96
        %v1568 = vpop.permute.xlu0 %1567
        %v1571 = vsel %vm1140, %v1488, 0
        %1573 = vmatprep.subr.mxu0 0.0
        %1574 = vmatpush1.msra.mxu0 %v1568
        %1575 = vmatprep.subr.mxu0 0.0
        %1576 = vmatpush1.msra.mxu0 0.0
        %1577 = vmatprep.subr.mxu0 0.0
        %1578 = vmatpush1.msra.mxu0 0.0
        %1579 = vmatprep.subr.mxu0 0.0
        %1580 = vmatpush1.msra.mxu0 0.0
        %1581 = vmatprep.subr.mxu0 0.0
        %1582 = vmatpush1.msra.mxu0 0.0
        %1583 = vmatprep.subr.mxu0 0.0
        %1584 = vmatpush1.msra.mxu0 0.0
        %1585 = vmatprep.subr.mxu0 0.0
        %1586 = vmatpush1.msra.mxu0 0.0
        %1587 = vmatprep.subr.mxu0 0.0
        %1588 = vmatpush1.msra.mxu0 0.0
        %1589 = vmatprep.subr.mxu0 0.0
        %1590 = vmatpush1.msra.mxu0 0.0
        %1591 = vmatprep.subr.mxu0 0.0
        %1592 = vmatpush1.msra.mxu0 0.0
        %1593 = vmatprep.subr.mxu0 0.0
        %1594 = vmatpush1.msra.mxu0 0.0
        %1595 = vmatprep.subr.mxu0 0.0
        %1596 = vmatpush1.msra.mxu0 0.0
        %1597 = vmatprep.subr.mxu0 0.0
        %1598 = vmatpush1.msra.mxu0 0.0
        %1599 = vmatprep.subr.mxu0 0.0
        %1600 = vmatpush1.msra.mxu0 0.0
        %1601 = vmatprep.subr.mxu0 0.0
        %1602 = vmatpush1.msra.mxu0 0.0
        %1603 = vmatprep.subr.mxu0 0.0
        %1604 = vmatpush1.msra.mxu0 0.0
        %1605 = vmatprep.subr.mxu0 0.0
        %1606 = vmatpush1.msra.mxu0 0.0
        %1607 = vmatprep.subr.mxu0 0.0
        %1608 = vmatpush1.msra.mxu0 0.0
        %1609 = vmatprep.subr.mxu0 0.0
        %1610 = vmatpush1.msra.mxu0 0.0
        %1611 = vmatprep.subr.mxu0 0.0
        %1612 = vmatpush1.msra.mxu0 0.0
        %1613 = vmatprep.subr.mxu0 0.0
        %1614 = vmatpush1.msra.mxu0 0.0
        %1615 = vmatprep.subr.mxu0 0.0
        %1616 = vmatpush1.msra.mxu0 0.0
        %1617 = vmatprep.subr.mxu0 0.0
        %1618 = vmatpush1.msra.mxu0 0.0
        %1619 = vmatprep.subr.mxu0 0.0
        %1620 = vmatpush1.msra.mxu0 0.0
        %1621 = vmatprep.subr.mxu0 0.0
        %1622 = vmatpush1.msra.mxu0 0.0
        %1623 = vmatprep.subr.mxu0 0.0
        %1624 = vmatpush1.msra.mxu0 0.0
        %1625 = vmatprep.subr.mxu0 0.0
        %1626 = vmatpush1.msra.mxu0 0.0
        %1627 = vmatprep.subr.mxu0 0.0
        %1628 = vmatpush1.msra.mxu0 0.0
        %1629 = vmatprep.subr.mxu0 0.0
        %1630 = vmatpush1.msra.mxu0 0.0
        %1631 = vmatprep.subr.mxu0 0.0
        %1632 = vmatpush1.msra.mxu0 0.0
        %1633 = vmatprep.subr.mxu0 0.0
        %1634 = vmatpush1.msra.mxu0 0.0
        %1635 = vmatprep.subr.mxu0 0.0
        %1636 = vmatpush1.msra.mxu0 0.0
        %1637 = vmatprep.mubr.f32.mxu0 0.0
        %1638 = vmatmul.mubr.f32.gmra.mrb[0].mxu0 %v1571
        %v1639 = vpop.f32.mrb[0].mxu0
        %v1640 = vadd.f32 0.0, %v1639
        %v1641 = vpop.f32.mrb[0].mxu0
        %1642 = vdwg.mxu0
        %1643 = vrot.lane.b32.xlu0 %v868, 64
        %v1644 = vpop.permute.xlu0 %1643
        %1645 = vrot.lane.b32.xlu0 %v975, 64
        %v1646 = vpop.permute.xlu0 %1645
        %v1647 = vsel %vm985, %v1644, 0
        %v1649 = vsel %vm985, %v1646, 0
        %1651 = vmatprep.subr.mxu0 0.0
        %1652 = vmatpush1.xpose.msra.mxu0 %v1649
        %1653 = vmatprep.subr.mxu0 0.0
        %1654 = vmatpush1.xpose.msra.mxu0 0.0
        %1655 = vmatprep.subr.mxu0 0.0
        %1656 = vmatpush1.xpose.msra.mxu0 0.0
        %1657 = vmatprep.subr.mxu0 0.0
        %1658 = vmatpush1.xpose.msra.mxu0 0.0
        %1659 = vmatprep.subr.mxu0 0.0
        %1660 = vmatpush1.xpose.msra.mxu0 0.0
        %1661 = vmatprep.subr.mxu0 0.0
        %1662 = vmatpush1.xpose.msra.mxu0 0.0
        %1663 = vmatprep.subr.mxu0 0.0
        %1664 = vmatpush1.xpose.msra.mxu0 0.0
        %1665 = vmatprep.subr.mxu0 0.0
        %1666 = vmatpush1.xpose.msra.mxu0 0.0
        %1667 = vmatprep.subr.mxu0 0.0
        %1668 = vmatpush1.xpose.msra.mxu0 0.0
        %1669 = vmatprep.subr.mxu0 0.0
        %1670 = vmatpush1.xpose.msra.mxu0 0.0
        %1671 = vmatprep.subr.mxu0 0.0
        %1672 = vmatpush1.xpose.msra.mxu0 0.0
        %1673 = vmatprep.subr.mxu0 0.0
        %1674 = vmatpush1.xpose.msra.mxu0 0.0
        %1675 = vmatprep.subr.mxu0 0.0
        %1676 = vmatpush1.xpose.msra.mxu0 0.0
        %1677 = vmatprep.subr.mxu0 0.0
        %1678 = vmatpush1.xpose.msra.mxu0 0.0
        %1679 = vmatprep.subr.mxu0 0.0
        %1680 = vmatpush1.xpose.msra.mxu0 0.0
        %1681 = vmatprep.subr.mxu0 0.0
        %1682 = vmatpush1.xpose.msra.mxu0 0.0
        %1683 = vmatprep.subr.mxu0 0.0
        %1684 = vmatpush1.xpose.msra.mxu0 0.0
        %1685 = vmatprep.subr.mxu0 0.0
        %1686 = vmatpush1.xpose.msra.mxu0 0.0
        %1687 = vmatprep.subr.mxu0 0.0
        %1688 = vmatpush1.xpose.msra.mxu0 0.0
        %1689 = vmatprep.subr.mxu0 0.0
        %1690 = vmatpush1.xpose.msra.mxu0 0.0
        %1691 = vmatprep.subr.mxu0 0.0
        %1692 = vmatpush1.xpose.msra.mxu0 0.0
        %1693 = vmatprep.subr.mxu0 0.0
        %1694 = vmatpush1.xpose.msra.mxu0 0.0
        %1695 = vmatprep.subr.mxu0 0.0
        %1696 = vmatpush1.xpose.msra.mxu0 0.0
        %1697 = vmatprep.subr.mxu0 0.0
        %1698 = vmatpush1.xpose.msra.mxu0 0.0
        %1699 = vmatprep.subr.mxu0 0.0
        %1700 = vmatpush1.xpose.msra.mxu0 0.0
        %1701 = vmatprep.subr.mxu0 0.0
        %1702 = vmatpush1.xpose.msra.mxu0 0.0
        %1703 = vmatprep.subr.mxu0 0.0
        %1704 = vmatpush1.xpose.msra.mxu0 0.0
        %1705 = vmatprep.subr.mxu0 0.0
        %1706 = vmatpush1.xpose.msra.mxu0 0.0
        %1707 = vmatprep.subr.mxu0 0.0
        %1708 = vmatpush1.xpose.msra.mxu0 0.0
        %1709 = vmatprep.subr.mxu0 0.0
        %1710 = vmatpush1.xpose.msra.mxu0 0.0
        %1711 = vmatprep.subr.mxu0 0.0
        %1712 = vmatpush1.xpose.msra.mxu0 0.0
        %1713 = vmatprep.subr.mxu0 0.0
        %1714 = vmatpush1.xpose.msra.mxu0 0.0
        %1715 = vmatprep.mubr.f32.mxu0 0.0
        %1716 = vmatmul.mubr.f32.gmra.mrb[0].mxu0 %v1647
        %v1717 = vpop.f32.mrb[0].mxu0
        %v1718 = vadd.f32 0.0, %v1717
        %v1719 = vpop.f32.mrb[0].mxu0
        %1720 = vdwg.mxu0
        %1721 = vrot.lane.b32.xlu0 %v873, 64
        %v1722 = vpop.permute.xlu0 %1721
        %1723 = vrot.lane.b32.xlu0 %v981, 64
        %v1724 = vpop.permute.xlu0 %1723
        %v1725 = vsel %vm985, %v1722, 0
        %v1727 = vsel %vm985, %v1724, 0
        %1729 = vmatprep.subr.mxu0 0.0
        %1730 = vmatpush1.xpose.msra.mxu0 %v1727
        %1731 = vmatprep.subr.mxu0 0.0
        %1732 = vmatpush1.xpose.msra.mxu0 0.0
        %1733 = vmatprep.subr.mxu0 0.0
        %1734 = vmatpush1.xpose.msra.mxu0 0.0
        %1735 = vmatprep.subr.mxu0 0.0
        %1736 = vmatpush1.xpose.msra.mxu0 0.0
        %1737 = vmatprep.subr.mxu0 0.0
        %1738 = vmatpush1.xpose.msra.mxu0 0.0
        %1739 = vmatprep.subr.mxu0 0.0
        %1740 = vmatpush1.xpose.msra.mxu0 0.0
        %1741 = vmatprep.subr.mxu0 0.0
        %1742 = vmatpush1.xpose.msra.mxu0 0.0
        %1743 = vmatprep.subr.mxu0 0.0
        %1744 = vmatpush1.xpose.msra.mxu0 0.0
        %1745 = vmatprep.subr.mxu0 0.0
        %1746 = vmatpush1.xpose.msra.mxu0 0.0
        %1747 = vmatprep.subr.mxu0 0.0
        %1748 = vmatpush1.xpose.msra.mxu0 0.0
        %1749 = vmatprep.subr.mxu0 0.0
        %1750 = vmatpush1.xpose.msra.mxu0 0.0
        %1751 = vmatprep.subr.mxu0 0.0
        %1752 = vmatpush1.xpose.msra.mxu0 0.0
        %1753 = vmatprep.subr.mxu0 0.0
        %1754 = vmatpush1.xpose.msra.mxu0 0.0
        %1755 = vmatprep.subr.mxu0 0.0
        %1756 = vmatpush1.xpose.msra.mxu0 0.0
        %1757 = vmatprep.subr.mxu0 0.0
        %1758 = vmatpush1.xpose.msra.mxu0 0.0
        %1759 = vmatprep.subr.mxu0 0.0
        %1760 = vmatpush1.xpose.msra.mxu0 0.0
        %1761 = vmatprep.subr.mxu0 0.0
        %1762 = vmatpush1.xpose.msra.mxu0 0.0
        %1763 = vmatprep.subr.mxu0 0.0
        %1764 = vmatpush1.xpose.msra.mxu0 0.0
        %1765 = vmatprep.subr.mxu0 0.0
        %1766 = vmatpush1.xpose.msra.mxu0 0.0
        %1767 = vmatprep.subr.mxu0 0.0
        %1768 = vmatpush1.xpose.msra.mxu0 0.0
        %1769 = vmatprep.subr.mxu0 0.0
        %1770 = vmatpush1.xpose.msra.mxu0 0.0
        %1771 = vmatprep.subr.mxu0 0.0
        %1772 = vmatpush1.xpose.msra.mxu0 0.0
        %1773 = vmatprep.subr.mxu0 0.0
        %1774 = vmatpush1.xpose.msra.mxu0 0.0
        %1775 = vmatprep.subr.mxu0 0.0
        %1776 = vmatpush1.xpose.msra.mxu0 0.0
        %1777 = vmatprep.subr.mxu0 0.0
        %1778 = vmatpush1.xpose.msra.mxu0 0.0
        %1779 = vmatprep.subr.mxu0 0.0
        %1780 = vmatpush1.xpose.msra.mxu0 0.0
        %1781 = vmatprep.subr.mxu0 0.0
        %1782 = vmatpush1.xpose.msra.mxu0 0.0
        %1783 = vmatprep.subr.mxu0 0.0
        %1784 = vmatpush1.xpose.msra.mxu0 0.0
        %1785 = vmatprep.subr.mxu0 0.0
        %1786 = vmatpush1.xpose.msra.mxu0 0.0
        %1787 = vmatprep.subr.mxu0 0.0
        %1788 = vmatpush1.xpose.msra.mxu0 0.0
        %1789 = vmatprep.subr.mxu0 0.0
        %1790 = vmatpush1.xpose.msra.mxu0 0.0
        %1791 = vmatprep.subr.mxu0 0.0
        %1792 = vmatpush1.xpose.msra.mxu0 0.0
        %1793 = vmatprep.mubr.f32.mxu0 0.0
        %1794 = vmatmul.mubr.f32.gmra.mrb[0].mxu0 %v1725
        %v1795 = vpop.f32.mrb[0].mxu0
        %v1796 = vadd.f32 0.0, %v1795
        %v1797 = vpop.f32.mrb[0].mxu0
        %1798 = vdwg.mxu0
        %v1799 = vmul.f32 %v1718, 0.17677669
        %v1800 = vmul.f32 %v1796, 0.17677669
        %v1801 = vsel %vm1140, %v1799, -inf
        %1802 = vmax.xlane.f32.xlu0 %v1801
        %v1803 = vpop.xlane.xlu0 %1802
        %v1804 = vsel %vm1140, %v1800, -inf
        %1805 = vmax.xlane.f32.xlu0 %v1804
        %v1806 = vpop.xlane.xlu0 %1805
        %v1807 = vsub.f32 %v1799, %v1803
        %v1808 = vsub.f32 %v1800, %v1806
        %v1809 = vmul.f32 %v1807, 1.442695
        %v1810 = vpow.pop %v1809
        %v1811 = vmul.f32 %v1808, 1.442695
        %v1812 = vpow.pop %v1811
        %v1813 = vsel %vm1140, %v1810, 0.0
        %1814 = vadd.xlane.f32.xlu0 %v1813
        %v1815 = vpop.xlane.xlu0 %1814
        %v1816 = vsel %vm1140, %v1812, 0.0
        %1817 = vadd.xlane.f32.xlu0 %v1816
        %v1818 = vpop.xlane.xlu0 %1817
        %v1819 = vrcp.pop %v1815
        %v1820 = vmul.f32 %v1810, %v1819
        %v1821 = vrcp.pop %v1818
        %v1822 = vmul.f32 %v1812, %v1821
        %1823 = vrot.lane.b32.xlu0 %v977, 64
        %v1824 = vpop.permute.xlu0 %1823
        %v1827 = vsel %vm1140, %v1820, 0
        %1829 = vmatprep.subr.mxu0 0.0
        %1830 = vmatpush1.msra.mxu0 %v1824
        %1831 = vmatprep.subr.mxu0 0.0
        %1832 = vmatpush1.msra.mxu0 0.0
        %1833 = vmatprep.subr.mxu0 0.0
        %1834 = vmatpush1.msra.mxu0 0.0
        %1835 = vmatprep.subr.mxu0 0.0
        %1836 = vmatpush1.msra.mxu0 0.0
        %1837 = vmatprep.subr.mxu0 0.0
        %1838 = vmatpush1.msra.mxu0 0.0
        %1839 = vmatprep.subr.mxu0 0.0
        %1840 = vmatpush1.msra.mxu0 0.0
        %1841 = vmatprep.subr.mxu0 0.0
        %1842 = vmatpush1.msra.mxu0 0.0
        %1843 = vmatprep.subr.mxu0 0.0
        %1844 = vmatpush1.msra.mxu0 0.0
        %1845 = vmatprep.subr.mxu0 0.0
        %1846 = vmatpush1.msra.mxu0 0.0
        %1847 = vmatprep.subr.mxu0 0.0
        %1848 = vmatpush1.msra.mxu0 0.0
        %1849 = vmatprep.subr.mxu0 0.0
        %1850 = vmatpush1.msra.mxu0 0.0
        %1851 = vmatprep.subr.mxu0 0.0
        %1852 = vmatpush1.msra.mxu0 0.0
        %1853 = vmatprep.subr.mxu0 0.0
        %1854 = vmatpush1.msra.mxu0 0.0
        %1855 = vmatprep.subr.mxu0 0.0
        %1856 = vmatpush1.msra.mxu0 0.0
        %1857 = vmatprep.subr.mxu0 0.0
        %1858 = vmatpush1.msra.mxu0 0.0
        %1859 = vmatprep.subr.mxu0 0.0
        %1860 = vmatpush1.msra.mxu0 0.0
        %1861 = vmatprep.subr.mxu0 0.0
        %1862 = vmatpush1.msra.mxu0 0.0
        %1863 = vmatprep.subr.mxu0 0.0
        %1864 = vmatpush1.msra.mxu0 0.0
        %1865 = vmatprep.subr.mxu0 0.0
        %1866 = vmatpush1.msra.mxu0 0.0
        %1867 = vmatprep.subr.mxu0 0.0
        %1868 = vmatpush1.msra.mxu0 0.0
        %1869 = vmatprep.subr.mxu0 0.0
        %1870 = vmatpush1.msra.mxu0 0.0
        %1871 = vmatprep.subr.mxu0 0.0
        %1872 = vmatpush1.msra.mxu0 0.0
        %1873 = vmatprep.subr.mxu0 0.0
        %1874 = vmatpush1.msra.mxu0 0.0
        %1875 = vmatprep.subr.mxu0 0.0
        %1876 = vmatpush1.msra.mxu0 0.0
        %1877 = vmatprep.subr.mxu0 0.0
        %1878 = vmatpush1.msra.mxu0 0.0
        %1879 = vmatprep.subr.mxu0 0.0
        %1880 = vmatpush1.msra.mxu0 0.0
        %1881 = vmatprep.subr.mxu0 0.0
        %1882 = vmatpush1.msra.mxu0 0.0
        %1883 = vmatprep.subr.mxu0 0.0
        %1884 = vmatpush1.msra.mxu0 0.0
        %1885 = vmatprep.subr.mxu0 0.0
        %1886 = vmatpush1.msra.mxu0 0.0
        %1887 = vmatprep.subr.mxu0 0.0
        %1888 = vmatpush1.msra.mxu0 0.0
        %1889 = vmatprep.subr.mxu0 0.0
        %1890 = vmatpush1.msra.mxu0 0.0
        %1891 = vmatprep.subr.mxu0 0.0
        %1892 = vmatpush1.msra.mxu0 0.0
        %1893 = vmatprep.mubr.f32.mxu0 0.0
        %1894 = vmatmul.mubr.f32.gmra.mrb[0].mxu0 %v1827
        %v1895 = vpop.f32.mrb[0].mxu0
        %v1896 = vadd.f32 0.0, %v1895
        %v1897 = vpop.f32.mrb[0].mxu0
        %1898 = vdwg.mxu0
        %1899 = vrot.lane.b32.xlu0 %v983, 64
        %v1900 = vpop.permute.xlu0 %1899
        %v1903 = vsel %vm1140, %v1822, 0
        %1905 = vmatprep.subr.mxu0 0.0
        %1906 = vmatpush1.msra.mxu0 %v1900
        %1907 = vmatprep.subr.mxu0 0.0
        %1908 = vmatpush1.msra.mxu0 0.0
        %1909 = vmatprep.subr.mxu0 0.0
        %1910 = vmatpush1.msra.mxu0 0.0
        %1911 = vmatprep.subr.mxu0 0.0
        %1912 = vmatpush1.msra.mxu0 0.0
        %1913 = vmatprep.subr.mxu0 0.0
        %1914 = vmatpush1.msra.mxu0 0.0
        %1915 = vmatprep.subr.mxu0 0.0
        %1916 = vmatpush1.msra.mxu0 0.0
        %1917 = vmatprep.subr.mxu0 0.0
        %1918 = vmatpush1.msra.mxu0 0.0
        %1919 = vmatprep.subr.mxu0 0.0
        %1920 = vmatpush1.msra.mxu0 0.0
        %1921 = vmatprep.subr.mxu0 0.0
        %1922 = vmatpush1.msra.mxu0 0.0
        %1923 = vmatprep.subr.mxu0 0.0
        %1924 = vmatpush1.msra.mxu0 0.0
        %1925 = vmatprep.subr.mxu0 0.0
        %1926 = vmatpush1.msra.mxu0 0.0
        %1927 = vmatprep.subr.mxu0 0.0
        %1928 = vmatpush1.msra.mxu0 0.0
        %1929 = vmatprep.subr.mxu0 0.0
        %1930 = vmatpush1.msra.mxu0 0.0
        %1931 = vmatprep.subr.mxu0 0.0
        %1932 = vmatpush1.msra.mxu0 0.0
        %1933 = vmatprep.subr.mxu0 0.0
        %1934 = vmatpush1.msra.mxu0 0.0
        %1935 = vmatprep.subr.mxu0 0.0
        %1936 = vmatpush1.msra.mxu0 0.0
        %1937 = vmatprep.subr.mxu0 0.0
        %1938 = vmatpush1.msra.mxu0 0.0
        %1939 = vmatprep.subr.mxu0 0.0
        %1940 = vmatpush1.msra.mxu0 0.0
        %1941 = vmatprep.subr.mxu0 0.0
        %1942 = vmatpush1.msra.mxu0 0.0
        %1943 = vmatprep.subr.mxu0 0.0
        %1944 = vmatpush1.msra.mxu0 0.0
        %1945 = vmatprep.subr.mxu0 0.0
        %1946 = vmatpush1.msra.mxu0 0.0
        %1947 = vmatprep.subr.mxu0 0.0
        %1948 = vmatpush1.msra.mxu0 0.0
        %1949 = vmatprep.subr.mxu0 0.0
        %1950 = vmatpush1.msra.mxu0 0.0
        %1951 = vmatprep.subr.mxu0 0.0
        %1952 = vmatpush1.msra.mxu0 0.0
        %1953 = vmatprep.subr.mxu0 0.0
        %1954 = vmatpush1.msra.mxu0 0.0
        %1955 = vmatprep.subr.mxu0 0.0
        %1956 = vmatpush1.msra.mxu0 0.0
        %1957 = vmatprep.subr.mxu0 0.0
        %1958 = vmatpush1.msra.mxu0 0.0
        %1959 = vmatprep.subr.mxu0 0.0
        %1960 = vmatpush1.msra.mxu0 0.0
        %1961 = vmatprep.subr.mxu0 0.0
        %1962 = vmatpush1.msra.mxu0 0.0
        %1963 = vmatprep.subr.mxu0 0.0
        %1964 = vmatpush1.msra.mxu0 0.0
        %1965 = vmatprep.subr.mxu0 0.0
        %1966 = vmatpush1.msra.mxu0 0.0
        %1967 = vmatprep.subr.mxu0 0.0
        %1968 = vmatpush1.msra.mxu0 0.0
        %1969 = vmatprep.mubr.f32.mxu0 0.0
        %1970 = vmatmul.mubr.f32.gmra.mrb[0].mxu0 %v1903
        %v1971 = vpop.f32.mrb[0].mxu0
        %v1972 = vadd.f32 0.0, %v1971
        %v1973 = vpop.f32.mrb[0].mxu0
        %1974 = vdwg.mxu0
        %1975 = vrot.lane.b32.xlu0 %v868, 32
        %v1976 = vpop.permute.xlu0 %1975
        %1977 = vrot.lane.b32.xlu0 %v975, 32
        %v1978 = vpop.permute.xlu0 %1977
        %v1979 = vsel %vm985, %v1976, 0
        %v1981 = vsel %vm985, %v1978, 0
        %1983 = vmatprep.subr.mxu0 0.0
        %1984 = vmatpush1.xpose.msra.mxu0 %v1981
        %1985 = vmatprep.subr.mxu0 0.0
        %1986 = vmatpush1.xpose.msra.mxu0 0.0
        %1987 = vmatprep.subr.mxu0 0.0
        %1988 = vmatpush1.xpose.msra.mxu0 0.0
        %1989 = vmatprep.subr.mxu0 0.0
        %1990 = vmatpush1.xpose.msra.mxu0 0.0
        %1991 = vmatprep.subr.mxu0 0.0
        %1992 = vmatpush1.xpose.msra.mxu0 0.0
        %1993 = vmatprep.subr.mxu0 0.0
        %1994 = vmatpush1.xpose.msra.mxu0 0.0
        %1995 = vmatprep.subr.mxu0 0.0
        %1996 = vmatpush1.xpose.msra.mxu0 0.0
        %1997 = vmatprep.subr.mxu0 0.0
        %1998 = vmatpush1.xpose.msra.mxu0 0.0
        %1999 = vmatprep.subr.mxu0 0.0
        %2000 = vmatpush1.xpose.msra.mxu0 0.0
        %2001 = vmatprep.subr.mxu0 0.0
        %2002 = vmatpush1.xpose.msra.mxu0 0.0
        %2003 = vmatprep.subr.mxu0 0.0
        %2004 = vmatpush1.xpose.msra.mxu0 0.0
        %2005 = vmatprep.subr.mxu0 0.0
        %2006 = vmatpush1.xpose.msra.mxu0 0.0
        %2007 = vmatprep.subr.mxu0 0.0
        %2008 = vmatpush1.xpose.msra.mxu0 0.0
        %2009 = vmatprep.subr.mxu0 0.0
        %2010 = vmatpush1.xpose.msra.mxu0 0.0
        %2011 = vmatprep.subr.mxu0 0.0
        %2012 = vmatpush1.xpose.msra.mxu0 0.0
        %2013 = vmatprep.subr.mxu0 0.0
        %2014 = vmatpush1.xpose.msra.mxu0 0.0
        %2015 = vmatprep.subr.mxu0 0.0
        %2016 = vmatpush1.xpose.msra.mxu0 0.0
        %2017 = vmatprep.subr.mxu0 0.0
        %2018 = vmatpush1.xpose.msra.mxu0 0.0
        %2019 = vmatprep.subr.mxu0 0.0
        %2020 = vmatpush1.xpose.msra.mxu0 0.0
        %2021 = vmatprep.subr.mxu0 0.0
        %2022 = vmatpush1.xpose.msra.mxu0 0.0
        %2023 = vmatprep.subr.mxu0 0.0
        %2024 = vmatpush1.xpose.msra.mxu0 0.0
        %2025 = vmatprep.subr.mxu0 0.0
        %2026 = vmatpush1.xpose.msra.mxu0 0.0
        %2027 = vmatprep.subr.mxu0 0.0
        %2028 = vmatpush1.xpose.msra.mxu0 0.0
        %2029 = vmatprep.subr.mxu0 0.0
        %2030 = vmatpush1.xpose.msra.mxu0 0.0
        %2031 = vmatprep.subr.mxu0 0.0
        %2032 = vmatpush1.xpose.msra.mxu0 0.0
        %2033 = vmatprep.subr.mxu0 0.0
        %2034 = vmatpush1.xpose.msra.mxu0 0.0
        %2035 = vmatprep.subr.mxu0 0.0
        %2036 = vmatpush1.xpose.msra.mxu0 0.0
        %2037 = vmatprep.subr.mxu0 0.0
        %2038 = vmatpush1.xpose.msra.mxu0 0.0
        %2039 = vmatprep.subr.mxu0 0.0
        %2040 = vmatpush1.xpose.msra.mxu0 0.0
        %2041 = vmatprep.subr.mxu0 0.0
        %2042 = vmatpush1.xpose.msra.mxu0 0.0
        %2043 = vmatprep.subr.mxu0 0.0
        %2044 = vmatpush1.xpose.msra.mxu0 0.0
        %2045 = vmatprep.subr.mxu0 0.0
        %2046 = vmatpush1.xpose.msra.mxu0 0.0
        %2047 = vmatprep.mubr.f32.mxu0 0.0
        %2048 = vmatmul.mubr.f32.gmra.mrb[0].mxu0 %v1979
        %v2049 = vpop.f32.mrb[0].mxu0
        %v2050 = vadd.f32 0.0, %v2049
        %v2051 = vpop.f32.mrb[0].mxu0
        %2052 = vdwg.mxu0
        %2053 = vrot.lane.b32.xlu0 %v873, 32
        %v2054 = vpop.permute.xlu0 %2053
        %2055 = vrot.lane.b32.xlu0 %v981, 32
        %v2056 = vpop.permute.xlu0 %2055
        %v2057 = vsel %vm985, %v2054, 0
        %v2059 = vsel %vm985, %v2056, 0
        %2061 = vmatprep.subr.mxu0 0.0
        %2062 = vmatpush1.xpose.msra.mxu0 %v2059
        %2063 = vmatprep.subr.mxu0 0.0
        %2064 = vmatpush1.xpose.msra.mxu0 0.0
        %2065 = vmatprep.subr.mxu0 0.0
        %2066 = vmatpush1.xpose.msra.mxu0 0.0
        %2067 = vmatprep.subr.mxu0 0.0
        %2068 = vmatpush1.xpose.msra.mxu0 0.0
        %2069 = vmatprep.subr.mxu0 0.0
        %2070 = vmatpush1.xpose.msra.mxu0 0.0
        %2071 = vmatprep.subr.mxu0 0.0
        %2072 = vmatpush1.xpose.msra.mxu0 0.0
        %2073 = vmatprep.subr.mxu0 0.0
        %2074 = vmatpush1.xpose.msra.mxu0 0.0
        %2075 = vmatprep.subr.mxu0 0.0
        %2076 = vmatpush1.xpose.msra.mxu0 0.0
        %2077 = vmatprep.subr.mxu0 0.0
        %2078 = vmatpush1.xpose.msra.mxu0 0.0
        %2079 = vmatprep.subr.mxu0 0.0
        %2080 = vmatpush1.xpose.msra.mxu0 0.0
        %2081 = vmatprep.subr.mxu0 0.0
        %2082 = vmatpush1.xpose.msra.mxu0 0.0
        %2083 = vmatprep.subr.mxu0 0.0
        %2084 = vmatpush1.xpose.msra.mxu0 0.0
        %2085 = vmatprep.subr.mxu0 0.0
        %2086 = vmatpush1.xpose.msra.mxu0 0.0
        %2087 = vmatprep.subr.mxu0 0.0
        %2088 = vmatpush1.xpose.msra.mxu0 0.0
        %2089 = vmatprep.subr.mxu0 0.0
        %2090 = vmatpush1.xpose.msra.mxu0 0.0
        %2091 = vmatprep.subr.mxu0 0.0
        %2092 = vmatpush1.xpose.msra.mxu0 0.0
        %2093 = vmatprep.subr.mxu0 0.0
        %2094 = vmatpush1.xpose.msra.mxu0 0.0
        %2095 = vmatprep.subr.mxu0 0.0
        %2096 = vmatpush1.xpose.msra.mxu0 0.0
        %2097 = vmatprep.subr.mxu0 0.0
        %2098 = vmatpush1.xpose.msra.mxu0 0.0
        %2099 = vmatprep.subr.mxu0 0.0
        %2100 = vmatpush1.xpose.msra.mxu0 0.0
        %2101 = vmatprep.subr.mxu0 0.0
        %2102 = vmatpush1.xpose.msra.mxu0 0.0
        %2103 = vmatprep.subr.mxu0 0.0
        %2104 = vmatpush1.xpose.msra.mxu0 0.0
        %2105 = vmatprep.subr.mxu0 0.0
        %2106 = vmatpush1.xpose.msra.mxu0 0.0
        %2107 = vmatprep.subr.mxu0 0.0
        %2108 = vmatpush1.xpose.msra.mxu0 0.0
        %2109 = vmatprep.subr.mxu0 0.0
        %2110 = vmatpush1.xpose.msra.mxu0 0.0
        %2111 = vmatprep.subr.mxu0 0.0
        %2112 = vmatpush1.xpose.msra.mxu0 0.0
        %2113 = vmatprep.subr.mxu0 0.0
        %2114 = vmatpush1.xpose.msra.mxu0 0.0
        %2115 = vmatprep.subr.mxu0 0.0
        %2116 = vmatpush1.xpose.msra.mxu0 0.0
        %2117 = vmatprep.subr.mxu0 0.0
        %2118 = vmatpush1.xpose.msra.mxu0 0.0
        %2119 = vmatprep.subr.mxu0 0.0
        %2120 = vmatpush1.xpose.msra.mxu0 0.0
        %2121 = vmatprep.subr.mxu0 0.0
        %2122 = vmatpush1.xpose.msra.mxu0 0.0
        %2123 = vmatprep.subr.mxu0 0.0
        %2124 = vmatpush1.xpose.msra.mxu0 0.0
        %2125 = vmatprep.mubr.f32.mxu0 0.0
        %2126 = vmatmul.mubr.f32.gmra.mrb[0].mxu0 %v2057
        %v2127 = vpop.f32.mrb[0].mxu0
        %v2128 = vadd.f32 0.0, %v2127
        %v2129 = vpop.f32.mrb[0].mxu0
        %2130 = vdwg.mxu0
        %v2131 = vmul.f32 %v2050, 0.17677669
        %v2132 = vmul.f32 %v2128, 0.17677669
        %v2133 = vsel %vm1140, %v2131, -inf
        %2134 = vmax.xlane.f32.xlu0 %v2133
        %v2135 = vpop.xlane.xlu0 %2134
        %v2136 = vsel %vm1140, %v2132, -inf
        %2137 = vmax.xlane.f32.xlu0 %v2136
        %v2138 = vpop.xlane.xlu0 %2137
        %v2139 = vsub.f32 %v2131, %v2135
        %v2140 = vsub.f32 %v2132, %v2138
        %v2141 = vmul.f32 %v2139, 1.442695
        %v2142 = vpow.pop %v2141
        %v2143 = vmul.f32 %v2140, 1.442695
        %v2144 = vpow.pop %v2143
        %v2145 = vsel %vm1140, %v2142, 0.0
        %2146 = vadd.xlane.f32.xlu0 %v2145
        %v2147 = vpop.xlane.xlu0 %2146
        %v2148 = vsel %vm1140, %v2144, 0.0
        %2149 = vadd.xlane.f32.xlu0 %v2148
        %v2150 = vpop.xlane.xlu0 %2149
        %v2151 = vrcp.pop %v2147
        %v2152 = vmul.f32 %v2142, %v2151
        %v2153 = vrcp.pop %v2150
        %v2154 = vmul.f32 %v2144, %v2153
        %2155 = vrot.lane.b32.xlu0 %v977, 32
        %v2156 = vpop.permute.xlu0 %2155
        %v2159 = vsel %vm1140, %v2152, 0
        %2161 = vmatprep.subr.mxu0 0.0
        %2162 = vmatpush1.msra.mxu0 %v2156
        %2163 = vmatprep.subr.mxu0 0.0
        %2164 = vmatpush1.msra.mxu0 0.0
        %2165 = vmatprep.subr.mxu0 0.0
        %2166 = vmatpush1.msra.mxu0 0.0
        %2167 = vmatprep.subr.mxu0 0.0
        %2168 = vmatpush1.msra.mxu0 0.0
        %2169 = vmatprep.subr.mxu0 0.0
        %2170 = vmatpush1.msra.mxu0 0.0
        %2171 = vmatprep.subr.mxu0 0.0
        %2172 = vmatpush1.msra.mxu0 0.0
        %2173 = vmatprep.subr.mxu0 0.0
        %2174 = vmatpush1.msra.mxu0 0.0
        %2175 = vmatprep.subr.mxu0 0.0
        %2176 = vmatpush1.msra.mxu0 0.0
        %2177 = vmatprep.subr.mxu0 0.0
        %2178 = vmatpush1.msra.mxu0 0.0
        %2179 = vmatprep.subr.mxu0 0.0
        %2180 = vmatpush1.msra.mxu0 0.0
        %2181 = vmatprep.subr.mxu0 0.0
        %2182 = vmatpush1.msra.mxu0 0.0
        %2183 = vmatprep.subr.mxu0 0.0
        %2184 = vmatpush1.msra.mxu0 0.0
        %2185 = vmatprep.subr.mxu0 0.0
        %2186 = vmatpush1.msra.mxu0 0.0
        %2187 = vmatprep.subr.mxu0 0.0
        %2188 = vmatpush1.msra.mxu0 0.0
        %2189 = vmatprep.subr.mxu0 0.0
        %2190 = vmatpush1.msra.mxu0 0.0
        %2191 = vmatprep.subr.mxu0 0.0
        %2192 = vmatpush1.msra.mxu0 0.0
        %2193 = vmatprep.subr.mxu0 0.0
        %2194 = vmatpush1.msra.mxu0 0.0
        %2195 = vmatprep.subr.mxu0 0.0
        %2196 = vmatpush1.msra.mxu0 0.0
        %2197 = vmatprep.subr.mxu0 0.0
        %2198 = vmatpush1.msra.mxu0 0.0
        %2199 = vmatprep.subr.mxu0 0.0
        %2200 = vmatpush1.msra.mxu0 0.0
        %2201 = vmatprep.subr.mxu0 0.0
        %2202 = vmatpush1.msra.mxu0 0.0
        %2203 = vmatprep.subr.mxu0 0.0
        %2204 = vmatpush1.msra.mxu0 0.0
        %2205 = vmatprep.subr.mxu0 0.0
        %2206 = vmatpush1.msra.mxu0 0.0
        %2207 = vmatprep.subr.mxu0 0.0
        %2208 = vmatpush1.msra.mxu0 0.0
        %2209 = vmatprep.subr.mxu0 0.0
        %2210 = vmatpush1.msra.mxu0 0.0
        %2211 = vmatprep.subr.mxu0 0.0
        %2212 = vmatpush1.msra.mxu0 0.0
        %2213 = vmatprep.subr.mxu0 0.0
        %2214 = vmatpush1.msra.mxu0 0.0
        %2215 = vmatprep.subr.mxu0 0.0
        %2216 = vmatpush1.msra.mxu0 0.0
        %2217 = vmatprep.subr.mxu0 0.0
        %2218 = vmatpush1.msra.mxu0 0.0
        %2219 = vmatprep.subr.mxu0 0.0
        %2220 = vmatpush1.msra.mxu0 0.0
        %2221 = vmatprep.subr.mxu0 0.0
        %2222 = vmatpush1.msra.mxu0 0.0
        %2223 = vmatprep.subr.mxu0 0.0
        %2224 = vmatpush1.msra.mxu0 0.0
        %2225 = vmatprep.mubr.f32.mxu0 0.0
        %2226 = vmatmul.mubr.f32.gmra.mrb[0].mxu0 %v2159
        %v2227 = vpop.f32.mrb[0].mxu0
        %v2228 = vadd.f32 0.0, %v2227
        %v2229 = vpop.f32.mrb[0].mxu0
        %2230 = vdwg.mxu0
        %2231 = vrot.lane.b32.xlu0 %v983, 32
        %v2232 = vpop.permute.xlu0 %2231
        %v2235 = vsel %vm1140, %v2154, 0
        %2237 = vmatprep.subr.mxu0 0.0
        %2238 = vmatpush1.msra.mxu0 %v2232
        %2239 = vmatprep.subr.mxu0 0.0
        %2240 = vmatpush1.msra.mxu0 0.0
        %2241 = vmatprep.subr.mxu0 0.0
        %2242 = vmatpush1.msra.mxu0 0.0
        %2243 = vmatprep.subr.mxu0 0.0
        %2244 = vmatpush1.msra.mxu0 0.0
        %2245 = vmatprep.subr.mxu0 0.0
        %2246 = vmatpush1.msra.mxu0 0.0
        %2247 = vmatprep.subr.mxu0 0.0
        %2248 = vmatpush1.msra.mxu0 0.0
        %2249 = vmatprep.subr.mxu0 0.0
        %2250 = vmatpush1.msra.mxu0 0.0
        %2251 = vmatprep.subr.mxu0 0.0
        %2252 = vmatpush1.msra.mxu0 0.0
        %2253 = vmatprep.subr.mxu0 0.0
        %2254 = vmatpush1.msra.mxu0 0.0
        %2255 = vmatprep.subr.mxu0 0.0
        %2256 = vmatpush1.msra.mxu0 0.0
        %2257 = vmatprep.subr.mxu0 0.0
        %2258 = vmatpush1.msra.mxu0 0.0
        %2259 = vmatprep.subr.mxu0 0.0
        %2260 = vmatpush1.msra.mxu0 0.0
        %2261 = vmatprep.subr.mxu0 0.0
        %2262 = vmatpush1.msra.mxu0 0.0
        %2263 = vmatprep.subr.mxu0 0.0
        %2264 = vmatpush1.msra.mxu0 0.0
        %2265 = vmatprep.subr.mxu0 0.0
        %2266 = vmatpush1.msra.mxu0 0.0
        %2267 = vmatprep.subr.mxu0 0.0
        %2268 = vmatpush1.msra.mxu0 0.0
        %2269 = vmatprep.subr.mxu0 0.0
        %2270 = vmatpush1.msra.mxu0 0.0
        %2271 = vmatprep.subr.mxu0 0.0
        %2272 = vmatpush1.msra.mxu0 0.0
        %2273 = vmatprep.subr.mxu0 0.0
        %2274 = vmatpush1.msra.mxu0 0.0
        %2275 = vmatprep.subr.mxu0 0.0
        %2276 = vmatpush1.msra.mxu0 0.0
        %2277 = vmatprep.subr.mxu0 0.0
        %2278 = vmatpush1.msra.mxu0 0.0
        %2279 = vmatprep.subr.mxu0 0.0
        %2280 = vmatpush1.msra.mxu0 0.0
        %2281 = vmatprep.subr.mxu0 0.0
        %2282 = vmatpush1.msra.mxu0 0.0
        %2283 = vmatprep.subr.mxu0 0.0
        %2284 = vmatpush1.msra.mxu0 0.0
        %2285 = vmatprep.subr.mxu0 0.0
        %2286 = vmatpush1.msra.mxu0 0.0
        %2287 = vmatprep.subr.mxu0 0.0
        %2288 = vmatpush1.msra.mxu0 0.0
        %2289 = vmatprep.subr.mxu0 0.0
        %2290 = vmatpush1.msra.mxu0 0.0
        %2291 = vmatprep.subr.mxu0 0.0
        %2292 = vmatpush1.msra.mxu0 0.0
        %2293 = vmatprep.subr.mxu0 0.0
        %2294 = vmatpush1.msra.mxu0 0.0
        %2295 = vmatprep.subr.mxu0 0.0
        %2296 = vmatpush1.msra.mxu0 0.0
        %2297 = vmatprep.subr.mxu0 0.0
        %2298 = vmatpush1.msra.mxu0 0.0
        %2299 = vmatprep.subr.mxu0 0.0
        %2300 = vmatpush1.msra.mxu0 0.0
        %2301 = vmatprep.mubr.f32.mxu0 0.0
        %2302 = vmatmul.mubr.f32.gmra.mrb[0].mxu0 %v2235
        %v2303 = vpop.f32.mrb[0].mxu0
        %v2304 = vadd.f32 0.0, %v2303
        %v2305 = vpop.f32.mrb[0].mxu0
        %2306 = vdwg.mxu0
        %2309 = vrot.lane.b32.xlu0 %v1563, 32
        %v2310 = vpop.permute.xlu0 %2309
        %2311 = vrot.lane.b32.xlu0 %v1640, 32
        %v2312 = vpop.permute.xlu0 %2311
        %2317 = vrot.lane.b32.xlu0 %v1896, 64
        %v2318 = vpop.permute.xlu0 %2317
        %2319 = vrot.lane.b32.xlu0 %v1972, 64
        %v2320 = vpop.permute.xlu0 %2319
        %2325 = vrot.lane.b32.xlu0 %v2228, 96
        %v2326 = vpop.permute.xlu0 %2325
        %2327 = vrot.lane.b32.xlu0 %v2304, 96
        %v2328 = vpop.permute.xlu0 %2327
        %v2331 = vsel %vm985, %v1233, %v2310
        %v2332 = vsel %vm985, %v1306, %v2312
        %vm2333 = vcmask 523264
        %v2334 = vsel %vm2333, %v2331, %v2318
        %v2335 = vsel %vm2333, %v2332, %v2320
        %vm2336 = vcmask 785408
        %v2337 = vsel %vm2336, %v2334, %v2326
        %v2338 = vsel %vm2336, %v2335, %v2328
        %v2339 = vld [vmem:[%s616] sm:$0xff]
        %v2340 = vld [vmem:[%s616 + $0x8] sm:$0xff]
        %v2341 = vld [vmem:[%s616 + $0x10] sm:$0xff]
        %v2342 = vld [vmem:[%s616 + $0x18] sm:$0xff]
        %v2343 = vld [vmem:[%s616 + $0x20] sm:$0xff]
        %v2344 = vld [vmem:[%s616 + $0x28] sm:$0xff]
        %v2345 = vld [vmem:[%s616 + $0x30] sm:$0xff]
        %v2346 = vld [vmem:[%s616 + $0x38] sm:$0xff]
        %v2347 = vld [vmem:[%s616 + $0x40] sm:$0xff]
        %v2348 = vld [vmem:[%s616 + $0x48] sm:$0xff]
        %v2349 = vld [vmem:[%s616 + $0x50] sm:$0xff]
        %v2350 = vld [vmem:[%s616 + $0x58] sm:$0xff]
        %v2351 = vld [vmem:[%s616 + $0x60] sm:$0xff]
        %v2352 = vld [vmem:[%s616 + $0x68] sm:$0xff]
        %v2353 = vld [vmem:[%s616 + $0x70] sm:$0xff]
        %v2354 = vld [vmem:[%s616 + $0x78] sm:$0xff]
        %v2355 = vld [vmem:[%s720] sm:$0x1]
        %v2357 = vlaneseq
        %v2358 = vshrl.u32 %v2357, 7
        %v2359 = vsub.s32 0, %v2358
        %v2360 = vrot.slane %v2355, %v2359
        %2362 = vmatprep.subr.mxu0 0.0
        %2363 = vmatpush1.msra.mxu0 %v2339
        %2364 = vmatprep.subr.mxu0 0.0
        %2365 = vmatpush1.msra.mxu0 %v2340
        %2366 = vmatprep.subr.mxu0 0.0
        %2367 = vmatpush1.msra.mxu0 %v2341
        %2368 = vmatprep.subr.mxu0 0.0
        %2369 = vmatpush1.msra.mxu0 %v2342
        %2370 = vmatprep.subr.mxu0 0.0
        %2371 = vmatpush1.msra.mxu0 %v2343
        %2372 = vmatprep.subr.mxu0 0.0
        %2373 = vmatpush1.msra.mxu0 %v2344
        %2374 = vmatprep.subr.mxu0 0.0
        %2375 = vmatpush1.msra.mxu0 %v2345
        %2376 = vmatprep.subr.mxu0 0.0
        %2377 = vmatpush1.msra.mxu0 %v2346
        %2378 = vmatprep.subr.mxu0 0.0
        %2379 = vmatpush1.msra.mxu0 %v2347
        %2380 = vmatprep.subr.mxu0 0.0
        %2381 = vmatpush1.msra.mxu0 %v2348
        %2382 = vmatprep.subr.mxu0 0.0
        %2383 = vmatpush1.msra.mxu0 %v2349
        %2384 = vmatprep.subr.mxu0 0.0
        %2385 = vmatpush1.msra.mxu0 %v2350
        %2386 = vmatprep.subr.mxu0 0.0
        %2387 = vmatpush1.msra.mxu0 %v2351
        %2388 = vmatprep.subr.mxu0 0.0
        %2389 = vmatpush1.msra.mxu0 %v2352
        %2390 = vmatprep.subr.mxu0 0.0
        %2391 = vmatpush1.msra.mxu0 %v2353
        %2392 = vmatprep.subr.mxu0 0.0
        %2393 = vmatpush1.msra.mxu0 %v2354
        %2394 = vmatprep.subr.mxu0 0.0
        %2395 = vmatpush1.msra.mxu0 0.0
        %2396 = vmatprep.subr.mxu0 0.0
        %2397 = vmatpush1.msra.mxu0 0.0
        %2398 = vmatprep.subr.mxu0 0.0
        %2399 = vmatpush1.msra.mxu0 0.0
        %2400 = vmatprep.subr.mxu0 0.0
        %2401 = vmatpush1.msra.mxu0 0.0
        %2402 = vmatprep.subr.mxu0 0.0
        %2403 = vmatpush1.msra.mxu0 0.0
        %2404 = vmatprep.subr.mxu0 0.0
        %2405 = vmatpush1.msra.mxu0 0.0
        %2406 = vmatprep.subr.mxu0 0.0
        %2407 = vmatpush1.msra.mxu0 0.0
        %2408 = vmatprep.subr.mxu0 0.0
        %2409 = vmatpush1.msra.mxu0 0.0
        %2410 = vmatprep.subr.mxu0 0.0
        %2411 = vmatpush1.msra.mxu0 0.0
        %2412 = vmatprep.subr.mxu0 0.0
        %2413 = vmatpush1.msra.mxu0 0.0
        %2414 = vmatprep.subr.mxu0 0.0
        %2415 = vmatpush1.msra.mxu0 0.0
        %2416 = vmatprep.subr.mxu0 0.0
        %2417 = vmatpush1.msra.mxu0 0.0
        %2418 = vmatprep.subr.mxu0 0.0
        %2419 = vmatpush1.msra.mxu0 0.0
        %2420 = vmatprep.subr.mxu0 0.0
        %2421 = vmatpush1.msra.mxu0 0.0
        %2422 = vmatprep.subr.mxu0 0.0
        %2423 = vmatpush1.msra.mxu0 0.0
        %2424 = vmatprep.subr.mxu0 0.0
        %2425 = vmatpush1.msra.mxu0 0.0
        %2426 = vmatprep.mubr.f32.mxu0 0.0
        %2427 = vmatmul.mubr.f32.gmra.mrb[0].mxu0 %v2337
        %v2428 = vpop.f32.mrb[0].mxu0
        %v2429 = vadd.f32 %v2360, %v2428
        %v2430 = vpop.f32.mrb[0].mxu0
        %2431 = vmatprep.mubr.f32.mxu0 0.0
        %2432 = vmatmul.mubr.f32.gmra.mrb[0].mxu0 %v2338
        %v2433 = vpop.f32.mrb[0].mxu0
        %v2434 = vadd.f32 %v2360, %v2433
        %v2435 = vpop.f32.mrb[0].mxu0
        %2436 = vdwg.mxu0
        %v2437 = vadd.f32 %v742, %v2429
        %v2438 = vadd.f32 %v743, %v2434
        %v2439 = vld [vmem:[%s723] sm:$0x1]
        %v2440 = vld [vmem:[%s726] sm:$0x1]
        %2441 = vadd.xlane.f32.xlu0 %v2437
        %v2442 = vpop.xlane.xlu0 %2441
        %2443 = vadd.xlane.f32.xlu0 %v2438
        %v2444 = vpop.xlane.xlu0 %2443
        %v2445 = vmul.f32 %v2442, %v750
        %v2446 = vmul.f32 %v2444, %v750
        %v2447 = vsub.f32 %v2437, %v2445
        %v2448 = vsub.f32 %v2438, %v2446
        %v2449 = vmul.f32 %v2447, %v2447
        %v2450 = vmul.f32 %v2448, %v2448
        %2451 = vadd.xlane.f32.xlu0 %v2449
        %v2452 = vpop.xlane.xlu0 %2451
        %2453 = vadd.xlane.f32.xlu0 %v2450
        %v2454 = vpop.xlane.xlu0 %2453
        %v2455 = vmul.f32 %v2452, %v750
        %v2456 = vmul.f32 %v2454, %v750
        %v2457 = vadd.f32 %v2455, 1e-05
        %v2458 = vadd.f32 %v2456, 1e-05
        %v2459 = vrsqrt.pop %v2457
        %v2460 = vrsqrt.pop %v2458
        %v2461 = vmul.f32 %v2447, %v2459
        %v2462 = vmul.f32 %v2448, %v2460
        %v2464 = vlaneseq
        %v2465 = vshrl.u32 %v2464, 7
        %v2466 = vsub.s32 0, %v2465
        %v2467 = vrot.slane %v2439, %v2466
        %v2469 = vmul.f32 %v2461, %v2467
        %v2470 = vmul.f32 %v2462, %v2467
        %v2472 = vlaneseq
        %v2473 = vshrl.u32 %v2472, 7
        %v2474 = vsub.s32 0, %v2473
        %v2475 = vrot.slane %v2440, %v2474
        %v2477 = vadd.f32 %v2469, %v2475
        %v2478 = vadd.f32 %v2470, %v2475
        %v2479 = vld [vmem:[%s625] sm:$0xff]
        %v2480 = vld [vmem:[%s625 + $0x8] sm:$0xff]
        %v2481 = vld [vmem:[%s625 + $0x10] sm:$0xff]
        %v2482 = vld [vmem:[%s625 + $0x18] sm:$0xff]
        %v2483 = vld [vmem:[%s625 + $0x20] sm:$0xff]
        %v2484 = vld [vmem:[%s625 + $0x28] sm:$0xff]
        %v2485 = vld [vmem:[%s625 + $0x30] sm:$0xff]
        %v2486 = vld [vmem:[%s625 + $0x38] sm:$0xff]
        %v2487 = vld [vmem:[%s625 + $0x40] sm:$0xff]
        %v2488 = vld [vmem:[%s625 + $0x48] sm:$0xff]
        %v2489 = vld [vmem:[%s625 + $0x50] sm:$0xff]
        %v2490 = vld [vmem:[%s625 + $0x58] sm:$0xff]
        %v2491 = vld [vmem:[%s625 + $0x60] sm:$0xff]
        %v2492 = vld [vmem:[%s625 + $0x68] sm:$0xff]
        %v2493 = vld [vmem:[%s625 + $0x70] sm:$0xff]
        %v2494 = vld [vmem:[%s625 + $0x78] sm:$0xff]
        %v2495 = vld [vmem:[%s625 + $0x80] sm:$0xff]
        %v2496 = vld [vmem:[%s625 + $0x88] sm:$0xff]
        %v2497 = vld [vmem:[%s625 + $0x90] sm:$0xff]
        %v2498 = vld [vmem:[%s625 + $0x98] sm:$0xff]
        %v2499 = vld [vmem:[%s625 + $0xa0] sm:$0xff]
        %v2500 = vld [vmem:[%s625 + $0xa8] sm:$0xff]
        %v2501 = vld [vmem:[%s625 + $0xb0] sm:$0xff]
        %v2502 = vld [vmem:[%s625 + $0xb8] sm:$0xff]
        %v2503 = vld [vmem:[%s625 + $0xc0] sm:$0xff]
        %v2504 = vld [vmem:[%s625 + $0xc8] sm:$0xff]
        %v2505 = vld [vmem:[%s625 + $0xd0] sm:$0xff]
        %v2506 = vld [vmem:[%s625 + $0xd8] sm:$0xff]
        %v2507 = vld [vmem:[%s625 + $0xe0] sm:$0xff]
        %v2508 = vld [vmem:[%s625 + $0xe8] sm:$0xff]
        %v2509 = vld [vmem:[%s625 + $0xf0] sm:$0xff]
        %v2510 = vld [vmem:[%s625 + $0xf8] sm:$0xff]
        %v2511 = vld [vmem:[%s730] sm:$0x3]
        %v2513 = vlaneseq
        %v2514 = vshrl.u32 %v2513, 7
        %v2515 = vsub.s32 0, %v2514
        %v2516 = vrot.slane %v2511, %v2515
        %v2517 = vlaneseq
        %v2518 = vshrl.u32 %v2517, 7
        %v2519 = vsub.s32 1, %v2518
        %v2520 = vrot.slane %v2511, %v2519
        %2523 = vmatprep.subr.mxu0 %v2480
        %2524 = vmatpush1.msra.mxu0 %v2479
        %2525 = vmatprep.subr.mxu0 %v2482
        %2526 = vmatpush1.msra.mxu0 %v2481
        %2527 = vmatprep.subr.mxu0 %v2484
        %2528 = vmatpush1.msra.mxu0 %v2483
        %2529 = vmatprep.subr.mxu0 %v2486
        %2530 = vmatpush1.msra.mxu0 %v2485
        %2531 = vmatprep.subr.mxu0 %v2488
        %2532 = vmatpush1.msra.mxu0 %v2487
        %2533 = vmatprep.subr.mxu0 %v2490
        %2534 = vmatpush1.msra.mxu0 %v2489
        %2535 = vmatprep.subr.mxu0 %v2492
        %2536 = vmatpush1.msra.mxu0 %v2491
        %2537 = vmatprep.subr.mxu0 %v2494
        %2538 = vmatpush1.msra.mxu0 %v2493
        %2539 = vmatprep.subr.mxu0 %v2496
        %2540 = vmatpush1.msra.mxu0 %v2495
        %2541 = vmatprep.subr.mxu0 %v2498
        %2542 = vmatpush1.msra.mxu0 %v2497
        %2543 = vmatprep.subr.mxu0 %v2500
        %2544 = vmatpush1.msra.mxu0 %v2499
        %2545 = vmatprep.subr.mxu0 %v2502
        %2546 = vmatpush1.msra.mxu0 %v2501
        %2547 = vmatprep.subr.mxu0 %v2504
        %2548 = vmatpush1.msra.mxu0 %v2503
        %2549 = vmatprep.subr.mxu0 %v2506
        %2550 = vmatpush1.msra.mxu0 %v2505
        %2551 = vmatprep.subr.mxu0 %v2508
        %2552 = vmatpush1.msra.mxu0 %v2507
        %2553 = vmatprep.subr.mxu0 %v2510
        %2554 = vmatpush1.msra.mxu0 %v2509
        %2555 = vmatprep.subr.mxu0 0.0
        %2556 = vmatpush1.msra.mxu0 0.0
        %2557 = vmatprep.subr.mxu0 0.0
        %2558 = vmatpush1.msra.mxu0 0.0
        %2559 = vmatprep.subr.mxu0 0.0
        %2560 = vmatpush1.msra.mxu0 0.0
        %2561 = vmatprep.subr.mxu0 0.0
        %2562 = vmatpush1.msra.mxu0 0.0
        %2563 = vmatprep.subr.mxu0 0.0
        %2564 = vmatpush1.msra.mxu0 0.0
        %2565 = vmatprep.subr.mxu0 0.0
        %2566 = vmatpush1.msra.mxu0 0.0
        %2567 = vmatprep.subr.mxu0 0.0
        %2568 = vmatpush1.msra.mxu0 0.0
        %2569 = vmatprep.subr.mxu0 0.0
        %2570 = vmatpush1.msra.mxu0 0.0
        %2571 = vmatprep.subr.mxu0 0.0
        %2572 = vmatpush1.msra.mxu0 0.0
        %2573 = vmatprep.subr.mxu0 0.0
        %2574 = vmatpush1.msra.mxu0 0.0
        %2575 = vmatprep.subr.mxu0 0.0
        %2576 = vmatpush1.msra.mxu0 0.0
        %2577 = vmatprep.subr.mxu0 0.0
        %2578 = vmatpush1.msra.mxu0 0.0
        %2579 = vmatprep.subr.mxu0 0.0
        %2580 = vmatpush1.msra.mxu0 0.0
        %2581 = vmatprep.subr.mxu0 0.0
        %2582 = vmatpush1.msra.mxu0 0.0
        %2583 = vmatprep.subr.mxu0 0.0
        %2584 = vmatpush1.msra.mxu0 0.0
        %2585 = vmatprep.subr.mxu0 0.0
        %2586 = vmatpush1.msra.mxu0 0.0
        %2587 = vmatprep.mubr.f32.mxu0 0.0
        %2588 = vmatmul.mubr.f32.gmra.mrb[0].mxu0 %v2477
        %v2589 = vpop.f32.mrb[0].mxu0
        %v2590 = vadd.f32 %v2516, %v2589
        %v2591 = vpop.f32.mrb[0].mxu0
        %v2592 = vadd.f32 %v2520, %v2591
        %2593 = vmatprep.mubr.f32.mxu0 0.0
        %2594 = vmatmul.mubr.f32.gmra.mrb[0].mxu0 %v2478
        %v2595 = vpop.f32.mrb[0].mxu0
        %v2596 = vadd.f32 %v2516, %v2595
        %v2597 = vpop.f32.mrb[0].mxu0
        %v2598 = vadd.f32 %v2520, %v2597
        %2599 = vdwg.mxu0
        %v2600 = vmax.f32 %v2590, 0.0
        %v2601 = vmax.f32 %v2592, 0.0
        %v2602 = vmax.f32 %v2596, 0.0
        %v2603 = vmax.f32 %v2598, 0.0
        %v2604 = vld [vmem:[%s634] sm:$0xff]
        %v2605 = vld [vmem:[%s634 + $0x8] sm:$0xff]
        %v2606 = vld [vmem:[%s634 + $0x10] sm:$0xff]
        %v2607 = vld [vmem:[%s634 + $0x18] sm:$0xff]
        %v2608 = vld [vmem:[%s634 + $0x20] sm:$0xff]
        %v2609 = vld [vmem:[%s634 + $0x28] sm:$0xff]
        %v2610 = vld [vmem:[%s634 + $0x30] sm:$0xff]
        %v2611 = vld [vmem:[%s634 + $0x38] sm:$0xff]
        %v2612 = vld [vmem:[%s634 + $0x40] sm:$0xff]
        %v2613 = vld [vmem:[%s634 + $0x48] sm:$0xff]
        %v2614 = vld [vmem:[%s634 + $0x50] sm:$0xff]
        %v2615 = vld [vmem:[%s634 + $0x58] sm:$0xff]
        %v2616 = vld [vmem:[%s634 + $0x60] sm:$0xff]
        %v2617 = vld [vmem:[%s634 + $0x68] sm:$0xff]
        %v2618 = vld [vmem:[%s634 + $0x70] sm:$0xff]
        %v2619 = vld [vmem:[%s634 + $0x78] sm:$0xff]
        %v2620 = vld [vmem:[%s634 + $0x80] sm:$0xff]
        %v2621 = vld [vmem:[%s634 + $0x88] sm:$0xff]
        %v2622 = vld [vmem:[%s634 + $0x90] sm:$0xff]
        %v2623 = vld [vmem:[%s634 + $0x98] sm:$0xff]
        %v2624 = vld [vmem:[%s634 + $0xa0] sm:$0xff]
        %v2625 = vld [vmem:[%s634 + $0xa8] sm:$0xff]
        %v2626 = vld [vmem:[%s634 + $0xb0] sm:$0xff]
        %v2627 = vld [vmem:[%s634 + $0xb8] sm:$0xff]
        %v2628 = vld [vmem:[%s634 + $0xc0] sm:$0xff]
        %v2629 = vld [vmem:[%s634 + $0xc8] sm:$0xff]
        %v2630 = vld [vmem:[%s634 + $0xd0] sm:$0xff]
        %v2631 = vld [vmem:[%s634 + $0xd8] sm:$0xff]
        %v2632 = vld [vmem:[%s634 + $0xe0] sm:$0xff]
        %v2633 = vld [vmem:[%s634 + $0xe8] sm:$0xff]
        %v2634 = vld [vmem:[%s634 + $0xf0] sm:$0xff]
        %v2635 = vld [vmem:[%s634 + $0xf8] sm:$0xff]
        %v2636 = vld [vmem:[%s733] sm:$0x1]
        %v2638 = vlaneseq
        %v2639 = vshrl.u32 %v2638, 7
        %v2640 = vsub.s32 0, %v2639
        %v2641 = vrot.slane %v2636, %v2640
        %2643 = vmatprep.subr.mxu0 0.0
        %2644 = vmatpush1.msra.mxu0 %v2604
        %2645 = vmatprep.subr.mxu0 0.0
        %2646 = vmatpush1.msra.mxu0 %v2605
        %2647 = vmatprep.subr.mxu0 0.0
        %2648 = vmatpush1.msra.mxu0 %v2606
        %2649 = vmatprep.subr.mxu0 0.0
        %2650 = vmatpush1.msra.mxu0 %v2607
        %2651 = vmatprep.subr.mxu0 0.0
        %2652 = vmatpush1.msra.mxu0 %v2608
        %2653 = vmatprep.subr.mxu0 0.0
        %2654 = vmatpush1.msra.mxu0 %v2609
        %2655 = vmatprep.subr.mxu0 0.0
        %2656 = vmatpush1.msra.mxu0 %v2610
        %2657 = vmatprep.subr.mxu0 0.0
        %2658 = vmatpush1.msra.mxu0 %v2611
        %2659 = vmatprep.subr.mxu0 0.0
        %2660 = vmatpush1.msra.mxu0 %v2612
        %2661 = vmatprep.subr.mxu0 0.0
        %2662 = vmatpush1.msra.mxu0 %v2613
        %2663 = vmatprep.subr.mxu0 0.0
        %2664 = vmatpush1.msra.mxu0 %v2614
        %2665 = vmatprep.subr.mxu0 0.0
        %2666 = vmatpush1.msra.mxu0 %v2615
        %2667 = vmatprep.subr.mxu0 0.0
        %2668 = vmatpush1.msra.mxu0 %v2616
        %2669 = vmatprep.subr.mxu0 0.0
        %2670 = vmatpush1.msra.mxu0 %v2617
        %2671 = vmatprep.subr.mxu0 0.0
        %2672 = vmatpush1.msra.mxu0 %v2618
        %2673 = vmatprep.subr.mxu0 0.0
        %2674 = vmatpush1.msra.mxu0 %v2619
        %2675 = vmatprep.subr.mxu0 0.0
        %2676 = vmatpush1.msra.mxu0 %v2620
        %2677 = vmatprep.subr.mxu0 0.0
        %2678 = vmatpush1.msra.mxu0 %v2621
        %2679 = vmatprep.subr.mxu0 0.0
        %2680 = vmatpush1.msra.mxu0 %v2622
        %2681 = vmatprep.subr.mxu0 0.0
        %2682 = vmatpush1.msra.mxu0 %v2623
        %2683 = vmatprep.subr.mxu0 0.0
        %2684 = vmatpush1.msra.mxu0 %v2624
        %2685 = vmatprep.subr.mxu0 0.0
        %2686 = vmatpush1.msra.mxu0 %v2625
        %2687 = vmatprep.subr.mxu0 0.0
        %2688 = vmatpush1.msra.mxu0 %v2626
        %2689 = vmatprep.subr.mxu0 0.0
        %2690 = vmatpush1.msra.mxu0 %v2627
        %2691 = vmatprep.subr.mxu0 0.0
        %2692 = vmatpush1.msra.mxu0 %v2628
        %2693 = vmatprep.subr.mxu0 0.0
        %2694 = vmatpush1.msra.mxu0 %v2629
        %2695 = vmatprep.subr.mxu0 0.0
        %2696 = vmatpush1.msra.mxu0 %v2630
        %2697 = vmatprep.subr.mxu0 0.0
        %2698 = vmatpush1.msra.mxu0 %v2631
        %2699 = vmatprep.subr.mxu0 0.0
        %2700 = vmatpush1.msra.mxu0 %v2632
        %2701 = vmatprep.subr.mxu0 0.0
        %2702 = vmatpush1.msra.mxu0 %v2633
        %2703 = vmatprep.subr.mxu0 0.0
        %2704 = vmatpush1.msra.mxu0 %v2634
        %2705 = vmatprep.subr.mxu0 0.0
        %2706 = vmatpush1.msra.mxu0 %v2635
        %2707 = vmatprep.mubr.f32.mxu0 %v2601
        %2708 = vmatmul.mubr.f32.gmra.mrb[0].mxu0 %v2600
        %v2709 = vpop.f32.mrb[0].mxu0
        %v2710 = vadd.f32 %v2641, %v2709
        %v2711 = vpop.f32.mrb[0].mxu0
        %2712 = vmatprep.mubr.f32.mxu0 %v2603
        %2713 = vmatmul.mubr.f32.gmra.mrb[0].mxu0 %v2602
        %v2714 = vpop.f32.mrb[0].mxu0
        %v2715 = vadd.f32 %v2641, %v2714
        %v2716 = vpop.f32.mrb[0].mxu0
        %2717 = vdwg.mxu0
        %v2718 = vadd.f32 %v2437, %v2710
        %v2719 = vadd.f32 %v2438, %v2715
        %2720 = vst [vmem:[#allocation14] sm:$0xff] %v2718
        %2721 = vst [vmem:[#allocation14 + $0x8] sm:$0xff] %v2719
        // Predicated region
        $region105: #{tpu_custom_call.1} parent=71 // pred_check
          %p2722 = pneg %p381
        $region106: #{tpu_custom_call.1} parent=71 // pred_check_branch
          %2724 = sbr.rel (%p2722) target = $region108
        $region107: #{tpu_custom_call.1} parent=71 // pred_region
          %s2726 = ssub.s32 256, 256
          %2727 = vsyncadd [#allocation4], %s2726
          %s2728 = sshll.u32 [#allocation14], 4
          %s2729 = int_to_ptr.vmem [resolvable:$true] %s2728
          %2734 = dma.vmem_to_hbm [thread:$0]  %s2729, 256, %s13, [#allocation4], 128, 128, 8
        $region108: #{tpu_custom_call.1} parent=71 // pred_fallthru
          _
        // Predicated region
        $region109: #{tpu_custom_call.1} parent=71 // pred_check
          %p2735 = pneg %p381
        $region110: #{tpu_custom_call.1} parent=71 // pred_check_branch
          %2737 = sbr.rel (%p2735) target = $region112
        $region111: #{tpu_custom_call.1} parent=71 // pred_region
          %2738 = dma.done [#allocation4], 256
        $region112: #{tpu_custom_call.1} parent=71 // pred_fallthru
          _
      $region72: #{tpu_custom_call.1} parent=5 // pred_fallthru
        _
      %p2739 = scmp.le.s32.totalorder 2, %s30
      // Predicated region
      $region113: #{tpu_custom_call.1} parent=5 // pred_check
        %p2740 = pneg %p2739
      $region114: #{tpu_custom_call.1} parent=5 // pred_check_branch
        %2742 = sbr.rel (%p2740) target = $region116
      $region115: #{tpu_custom_call.1} parent=5 // pred_region
        %s2743 = ssub.s32 %s30, 2
      $region116: #{tpu_custom_call.1} parent=5 // pred_fallthru
        _
    $region6: #{tpu_custom_call.1} parent=1 // loop_footer
      %s34 = sadd.s32 1, %s30
    $region7: #{tpu_custom_call.1} parent=1 // loop_footer_branch
      %29 = sbr.rel target = $region3
    $region8: #{tpu_custom_call.1} parent=1 // loop_exit
      _
    %2744 = vsyncpa [#allocation3], 1
    %s2745 = scalar_lea.sflag [#allocation3], 1
    %2746 = vsyncpa %s2745, 1
    %2747 = vsyncpa [#allocation6], 1
    %s2748 = scalar_lea.sflag [#allocation6], 1
    %2749 = vsyncpa %s2748, 1
    %2750 = vsyncpa [#allocation9], 1
    %s2751 = scalar_lea.sflag [#allocation9], 1
    %2752 = vsyncpa %s2751, 1
    %2753 = vsyncpa [#allocation12], 1
    %s2754 = scalar_lea.sflag [#allocation12], 1
    %2755 = vsyncpa %s2754, 1
    %2756 = vsyncpa [#allocation4], 1
    %s2757 = scalar_lea.sflag [#allocation4], 1
    %2758 = vsyncpa %s2757, 1

</llo_original>
